<compile_context>
chip_gen: v6e
topology: v6e:2x2x1
jax: 0.10.0
libtpu: 0.0.40
codegen_flags: <defaults>
</compile_context>

<pallas_src>
import functools

import jax
import jax.numpy as jnp
import numpy as np
from jax.experimental import pallas as pl
from jax.experimental.pallas import tpu as pltpu


def _round_up(x, m):
    return ((x + m - 1) // m) * m


def _pad_gate_dim(a, h, h_pad):
    """Zero-pad the gate-fused last axis (3h) to 3*h_pad, per gate."""
    if h_pad == h:
        return a
    lead = a.shape[:-1]
    a = a.reshape(lead + (3, h))
    a = jnp.pad(a, [(0, 0)] * (len(lead) + 1) + [(0, h_pad - h)])
    return a.reshape(lead + (3 * h_pad,))


def _const_block_spec(block_shape, index_map):
    """BlockSpec for operands whose block index never changes: request single
    buffering (halves VMEM residency); fall back if pipeline_mode is absent."""
    try:
        return pl.BlockSpec(block_shape, index_map, pipeline_mode=pl.Buffered(1))
    except Exception:  # older jax without pipeline_mode / Buffered
        return pl.BlockSpec(block_shape, index_map)


# ----------------------------------------------------------------------------
# Pallas kernel: fused (both-direction) GRU recurrence.
#   grid = (T_pad // Tc,)   -- time chunks, strictly sequential ("arbitrary")
#   gi_ref   : (Tc, 2, B, 3H)  precomputed x@W_ih + b_ih (+ b_hh[r,z]) for this
#                              chunk; backward direction is already time-reversed
#   whh_ref  : (2, H, 3H)      hidden->gate weights, gates (r, z, n)
#   bhhn_ref : (2, 1, H) f32   n-gate hidden bias (multiplied by r in-step)
#   out_ref  : (Tc, 2, B, H)   per-step hidden outputs (backward still reversed)
#   h_ref    : (2, B, H) f32   recurrent state, persists across grid steps
# ----------------------------------------------------------------------------
def _bigru_kernel(gi_ref, whh_ref, bhhn_ref, out_ref, h_ref, *, tc, hidden, unroll):
    c = pl.program_id(0)

    @pl.when(c == 0)
    def _():
        h_ref[...] = jnp.zeros_like(h_ref)

    # Hoisted out of the unrolled loop (constant over the chunk).
    w_hh = whh_ref[...]                 # (2, H, 3H) compute dtype
    b_hh_n = bhhn_ref[...]              # (2, 1, H)  f32

    def step(s, carry):
        gi = gi_ref[s].astype(jnp.float32)            # (2, B, 3H)
        h_prev = h_ref[...]                           # (2, B, H) f32
        # One batched MXU push per step advances both directions at once.
        gh = jnp.einsum("dbh,dhg->dbg",
                        h_prev.astype(w_hh.dtype), w_hh,
                        preferred_element_type=jnp.float32)   # (2, B, 3H) f32
        gr = gi[..., :hidden] + gh[..., :hidden]
        gz = gi[..., hidden:2 * hidden] + gh[..., hidden:2 * hidden]
        # sigmoid(x) == 0.5*(tanh(0.5*x)+1): single EUP push per gate.
        r = 0.5 * (jnp.tanh(0.5 * gr) + 1.0)
        z = 0.5 * (jnp.tanh(0.5 * gz) + 1.0)
        n = jnp.tanh(gi[..., 2 * hidden:] + r * (gh[..., 2 * hidden:] + b_hh_n))
        h_new = n + z * (h_prev - n)                  # == (1-z)*n + z*h_prev
        out_ref[s] = h_new.astype(out_ref.dtype)
        h_ref[...] = h_new
        return carry

    # Partial/full unroll: full static indices for small chunks, bounded vreg
    # pressure for larger ones.
    jax.lax.fori_loop(0, tc, step, 0, unroll=unroll)


def _bigru_recurrence(gi, w_hh, b_hh_n, out_dtype, tc):
    """gi: (T_pad, 2, B_pad, 3*H_pad) (backward dir pre-reversed in time).
       w_hh: (2, H_pad, 3*H_pad), b_hh_n: (2, 1, H_pad) f32.
       Returns ys: (T_pad, 2, B_pad, H_pad)."""
    t_pad, ndir, b_pad, g = gi.shape
    assert ndir == 2 and g % 3 == 0
    h_pad = g // 3
    nc = t_pad // tc

    kernel = functools.partial(_bigru_kernel, tc=tc, hidden=h_pad,
                               unroll=min(tc, 8))

    t_map = lambda c: (c, 0, 0, 0)
    w_map = lambda c: (0, 0, 0)

    # Explicit VMEM budget from the actual block sizes (double-buffered gi/out,
    # conservatively double-counted weights), clamped to v7x's 64 MiB physical.
    gi_blk = tc * 2 * b_pad * g * gi.dtype.itemsize
    out_blk = tc * 2 * b_pad * h_pad * jnp.dtype(out_dtype).itemsize
    whh_blk = 2 * h_pad * g * w_hh.dtype.itemsize
    scratch = 2 * b_pad * h_pad * 4
    need = 2 * (gi_blk + out_blk) + 2 * whh_blk + scratch + (2 << 20)
    vmem_limit = int(min(max(need, 32 << 20), 64 << 20))

    grid_spec = pltpu.PrefetchScalarGridSpec(
        num_scalar_prefetch=0,
        grid=(nc,),
        in_specs=[
            pl.BlockSpec((tc, 2, b_pad, g), t_map),      # gi chunk
            _const_block_spec((2, h_pad, g), w_map),     # W_hh (single-buffered)
            _const_block_spec((2, 1, h_pad), w_map),     # b_hh_n
        ],
        out_specs=pl.BlockSpec((tc, 2, b_pad, h_pad), t_map),
        scratch_shapes=[pltpu.VMEM((2, b_pad, h_pad), jnp.float32)],
    )

    return pl.pallas_call(
        kernel,
        out_shape=jax.ShapeDtypeStruct((t_pad, 2, b_pad, h_pad), out_dtype),
        grid_spec=grid_spec,
        compiler_params=pltpu.CompilerParams(
            dimension_semantics=("arbitrary",),     # strict recurrence over time
            vmem_limit_bytes=vmem_limit),
    )(gi, w_hh, b_hh_n)


# ----------------------------------------------------------------------------
# BiGRU forward (matches BiGRU.forward with batch_first=True)
# ----------------------------------------------------------------------------
@functools.partial(jax.jit,
                   static_argnames=("return_hn", "compute_dtype", "max_time_chunk"))
def bigru_forward(x, params, return_hn=False, compute_dtype=jnp.bfloat16,
                  max_time_chunk=16):
    """x: (B, T, I) batch_first input.  Returns (B, T, 2H) [and h_n: (2, B, H)]."""
    w_ih, w_hh = params["w_ih"], params["w_hh"]      # (2, I, 3H), (2, H, 3H)
    b_ih, b_hh = params["b_ih"], params["b_hh"]      # (2, 3H),    (2, 3H)
    B, T, _ = x.shape
    H = w_hh.shape[1]
    if compute_dtype is None:
        compute_dtype = w_hh.dtype

    # Hoisted input projection: one big matmul over all timesteps, gates and
    # directions (no sequential dependence).  b_ih and the r/z hidden biases
    # are folded in here, off the recurrent critical path.
    gi = jnp.einsum("bti,dig->dtbg", x, w_ih,
                    preferred_element_type=jnp.float32,
                    precision="highest")                              # (2,T,B,3H)
    gi = gi + b_ih.astype(jnp.float32)[:, None, None, :]
    bhh = b_hh.astype(jnp.float32)
    gi = gi.at[..., :2 * H].add(bhh[:, None, None, :2 * H])
    # Pre-reverse the backward direction so the kernel always walks forward.
    gi = jnp.stack([gi[0], jnp.flip(gi[1], axis=0)], axis=0)

    # Lane/sublane-friendly zero padding (self-consistent for the recurrence).
    H_pad = _round_up(H, 128)
    B_pad = _round_up(B, 8)
    tc = min(max_time_chunk, T)
    T_pad = _round_up(T, tc)

    gi = _pad_gate_dim(gi, H, H_pad)                                  # (2,T,B,3Hp)
    gi = jnp.transpose(gi, (1, 0, 2, 3))                              # (T,2,B,3Hp)
    gi = jnp.pad(gi, ((0, T_pad - T), (0, 0), (0, B_pad - B), (0, 0)))
    gi = gi.astype(compute_dtype)

    w = _pad_gate_dim(w_hh, H, H_pad)                                 # (2,H,3Hp)
    w = jnp.pad(w, ((0, 0), (0, H_pad - H), (0, 0))).astype(compute_dtype)

    b_hh_n = jnp.pad(bhh[:, 2 * H:], ((0, 0), (0, H_pad - H)))[:, None, :]  # f32

    ys = _bigru_recurrence(gi, w, b_hh_n, x.dtype, tc)   # (T_pad, 2, B_pad, H_pad)

    ys = ys[:T, :, :B, :H]                                            # (T,2,B,H)
    out = jnp.concatenate([ys[:, 0], jnp.flip(ys[:, 1], axis=0)], axis=-1)
    out = jnp.transpose(out, (1, 0, 2))                               # (B,T,2H)
    if return_hn:
        # Both directions' final states sit at (reversed-)time index T-1.
        return out, ys[T - 1]                                         # (2,B,H)
    return out


# ----------------------------------------------------------------------------
# Parameter setup (PyTorch nn.GRU-style uniform(-1/sqrt(H), 1/sqrt(H)))
# ----------------------------------------------------------------------------
def init_bigru_params(key, n_input, n_hidden, dtype=jnp.float32):
    """Pre-transposed, gate-fused weights (gate order r,z,n):
        w_ih: (2, I, 3H), w_hh: (2, H, 3H), b_ih: (2, 3H), b_hh: (2, 3H)."""
    k = 1.0 / np.sqrt(n_hidden)
    keys = jax.random.split(key, 8)

    def u(kk, shape):
        return jax.random.uniform(kk, shape, jnp.float32, minval=-k, maxval=k)

    w_ih, w_hh, b_ih, b_hh = [], [], [], []
    for d in range(2):
        w_ih.append(u(keys[4 * d + 0], (3 * n_hidden, n_input)).T)    # (I, 3H)
        w_hh.append(u(keys[4 * d + 1], (3 * n_hidden, n_hidden)).T)   # (H, 3H)
        b_ih.append(u(keys[4 * d + 2], (3 * n_hidden,)))
        b_hh.append(u(keys[4 * d + 3], (3 * n_hidden,)))
    return dict(
        w_ih=jnp.stack(w_ih).astype(dtype),
        w_hh=jnp.stack(w_hh).astype(dtype),
        b_ih=jnp.stack(b_ih).astype(dtype),
        b_hh=jnp.stack(b_hh).astype(dtype),
    )


# ----------------------------------------------------------------------------
# Pure-JAX reference (lax.scan, f32) for correctness checking
# ----------------------------------------------------------------------------
def bigru_forward_ref(x, params):
    w_ih = params["w_ih"].astype(jnp.float32)
    w_hh = params["w_hh"].astype(jnp.float32)
    b_ih = params["b_ih"].astype(jnp.float32)
    b_hh = params["b_hh"].astype(jnp.float32)
    B, T, _ = x.shape
    H = w_hh.shape[1]
    x_tb = jnp.transpose(x, (1, 0, 2)).astype(jnp.float32)   # (T, B, I)

    def run(d, reverse):
        xs = x_tb[::-1] if reverse else x_tb
        wi, wh, bi, bh = w_ih[d], w_hh[d], b_ih[d], b_hh[d]

        def step(h, xt):
            gi = jnp.dot(xt, wi, precision="highest") + bi
            gh = jnp.dot(h, wh, precision="highest") + bh
            r = jax.nn.sigmoid(gi[:, :H] + gh[:, :H])
            z = jax.nn.sigmoid(gi[:, H:2 * H] + gh[:, H:2 * H])
            n = jnp.tanh(gi[:, 2 * H:] + r * gh[:, 2 * H:])
            h_new = (1.0 - z) * n + z * h
            return h_new, h_new

        h_last, ys = jax.lax.scan(step, jnp.zeros((B, H), jnp.float32), xs)
        if reverse:
            ys = ys[::-1]
        return ys, h_last

    ys_f, hn_f = run(0, False)
    ys_b, hn_b = run(1, True)
    out = jnp.transpose(jnp.concatenate([ys_f, ys_b], axis=-1), (1, 0, 2))
    h_n = jnp.stack([hn_f, hn_b], axis=0)
    return out, h_n


if __name__ == "__main__":
    B, T, I, H = 2, 8, 16, 32

    key = jax.random.PRNGKey(0)
    k_x, k_p = jax.random.split(key)
    x = jax.random.normal(k_x, (B, T, I), jnp.float32)
    params = init_bigru_params(k_p, I, H, dtype=jnp.float32)

    out_ref, hn_ref = bigru_forward_ref(x, params)

    # Exact-path check: f32 recurrent matmul.
    out32, hn32 = bigru_forward(x, params, return_hn=True,
                                compute_dtype=jnp.float32)
    out32 = jax.block_until_ready(out32)
    hn32 = jax.block_until_ready(hn32)
    assert out32.shape == (B, T, 2 * H), out32.shape
    assert hn32.shape == (2, B, H), hn32.shape
    np.testing.assert_allclose(np.asarray(out32), np.asarray(out_ref),
                               rtol=5e-3, atol=5e-3)
    np.testing.assert_allclose(np.asarray(hn32), np.asarray(hn_ref),
                               rtol=5e-3, atol=5e-3)

    # Default fast path: bf16 recurrent matmul, f32 accumulation / f32 state.
    out_bf = bigru_forward(x, params, return_hn=False)
    out_bf = jax.block_until_ready(out_bf)
    np.testing.assert_allclose(np.asarray(out_bf), np.asarray(out_ref),
                               rtol=6e-2, atol=6e-2)

    print("KERNEL_OK")
</pallas_src>

<mosaic_0001>
module attributes {stable_mosaic.version = 11 : i64} {
  func.func @_bigru_kernel(%arg0: i32, %arg1: memref<8x2x8x384xf32, #tpu.memory_space<vmem>>, %arg2: memref<2x128x384xf32, #tpu.memory_space<vmem>>, %arg3: memref<2x1x128xf32, #tpu.memory_space<vmem>>, %arg4: memref<8x2x8x128xf32, #tpu.memory_space<vmem>>, %arg5: memref<2x8x128xf32, #tpu.memory_space<vmem>>) attributes {dimension_semantics = [#tpu.dimension_semantics<arbitrary>], iteration_bounds = array<i64: 1>, scalar_prefetch = 0 : i64, scratch_operands = 1 : i64, tpu.core_type = #tpu.core_type<tc>, window_params = [{transform_indices = @transform_0, window_bounds = array<i64: 8, 2, 8, 384>}, {pipeline_mode = #tpu.pipeline_mode<synchronous>, transform_indices = @transform_1, window_bounds = array<i64: 2, 128, 384>}, {pipeline_mode = #tpu.pipeline_mode<synchronous>, transform_indices = @transform_2, window_bounds = array<i64: 2, 1, 128>}, {transform_indices = @transform_3, window_bounds = array<i64: 8, 2, 8, 128>}]} {
    %c0_i32 = arith.constant 0 : i32
    %0 = arith.cmpi eq, %arg0, %c0_i32 : i32
    %1 = arith.extui %0 : i1 to i32
    %c0_i32_0 = arith.constant 0 : i32
    %2 = arith.cmpi ne, %1, %c0_i32_0 : i32
    scf.if %2 {
      %cst_158 = arith.constant 0.000000e+00 : f32
      %325 = vector.broadcast %cst_158 : f32 to vector<2x8x128xf32>
      %c0_159 = arith.constant 0 : index
      %c0_160 = arith.constant 0 : index
      %c0_161 = arith.constant 0 : index
      %326 = vector.load %arg5[%c0_159, %c0_160, %c0_161] : memref<2x8x128xf32, #tpu.memory_space<vmem>>, vector<2x8x128xf32>
      tpu.vector_store %arg5[%c0_159, %c0_160, %c0_161], %325 {strides = array<i32>} : memref<2x8x128xf32, #tpu.memory_space<vmem>>, vector<2x8x128xf32>,
    } else {
    }
    %c0 = arith.constant 0 : index
    %c0_1 = arith.constant 0 : index
    %c0_2 = arith.constant 0 : index
    %3 = vector.load %arg2[%c0, %c0_1, %c0_2] : memref<2x128x384xf32, #tpu.memory_space<vmem>>, vector<2x128x384xf32>
    %c0_3 = arith.constant 0 : index
    %c0_4 = arith.constant 0 : index
    %c0_5 = arith.constant 0 : index
    %4 = vector.load %arg3[%c0_3, %c0_4, %c0_5] : memref<2x1x128xf32, #tpu.memory_space<vmem>>, vector<2x1x128xf32>
    %c0_i32_6 = arith.constant 0 : i32
    %5 = arith.index_cast %c0_i32_6 : i32 to index
    %c0_7 = arith.constant 0 : index
    %c0_8 = arith.constant 0 : index
    %c0_9 = arith.constant 0 : index
    %6 = vector.load %arg1[%5, %c0_7, %c0_8, %c0_9] : memref<8x2x8x384xf32, #tpu.memory_space<vmem>>, vector<1x2x8x384xf32>
    %7 = vector.shape_cast %6 : vector<1x2x8x384xf32> to vector<2x8x384xf32>
    %c0_10 = arith.constant 0 : index
    %c0_11 = arith.constant 0 : index
    %c0_12 = arith.constant 0 : index
    %8 = vector.load %arg5[%c0_10, %c0_11, %c0_12] : memref<2x8x128xf32, #tpu.memory_space<vmem>>, vector<2x8x128xf32>
    "tpu.trace_start"() <{level = 10 : i32, message = "dbh,dhg->dbg"}> : () -> ()
    %cst = arith.constant dense<0.000000e+00> : vector<2x8x384xf32>
    %9 = tpu.matmul %8, %3, %cst {dimension_numbers = #tpu.dot_dimension_numbers<[2], [1], [1], [2], [0, 0, 0, 1, 1, 2], [0], [0]>} : vector<2x8x128xf32>, vector<2x128x384xf32>, vector<2x8x384xf32> -> vector<2x8x384xf32>
    "tpu.trace_stop"() : () -> ()
    %10 = vector.extract_strided_slice %7 {offsets = [0, 0, 0], sizes = [2, 8, 128], strides = [1, 1, 1]} : vector<2x8x384xf32> to vector<2x8x128xf32>
    %11 = vector.extract_strided_slice %9 {offsets = [0, 0, 0], sizes = [2, 8, 128], strides = [1, 1, 1]} : vector<2x8x384xf32> to vector<2x8x128xf32>
    %12 = arith.addf %10, %11 : vector<2x8x128xf32>
    %13 = vector.extract_strided_slice %7 {offsets = [0, 0, 128], sizes = [2, 8, 128], strides = [1, 1, 1]} : vector<2x8x384xf32> to vector<2x8x128xf32>
    %14 = vector.extract_strided_slice %9 {offsets = [0, 0, 128], sizes = [2, 8, 128], strides = [1, 1, 1]} : vector<2x8x384xf32> to vector<2x8x128xf32>
    %15 = arith.addf %13, %14 : vector<2x8x128xf32>
    %cst_13 = arith.constant 5.000000e-01 : f32
    %16 = vector.broadcast %cst_13 : f32 to vector<2x8x128xf32>
    %17 = arith.mulf %16, %12 : vector<2x8x128xf32>
    %18 = math.tanh %17 : vector<2x8x128xf32>
    %cst_14 = arith.constant 1.000000e+00 : f32
    %19 = vector.broadcast %cst_14 : f32 to vector<2x8x128xf32>
    %20 = arith.addf %18, %19 : vector<2x8x128xf32>
    %cst_15 = arith.constant 5.000000e-01 : f32
    %21 = vector.broadcast %cst_15 : f32 to vector<2x8x128xf32>
    %22 = arith.mulf %21, %20 : vector<2x8x128xf32>
    %cst_16 = arith.constant 5.000000e-01 : f32
    %23 = vector.broadcast %cst_16 : f32 to vector<2x8x128xf32>
    %24 = arith.mulf %23, %15 : vector<2x8x128xf32>
    %25 = math.tanh %24 : vector<2x8x128xf32>
    %cst_17 = arith.constant 1.000000e+00 : f32
    %26 = vector.broadcast %cst_17 : f32 to vector<2x8x128xf32>
    %27 = arith.addf %25, %26 : vector<2x8x128xf32>
    %cst_18 = arith.constant 5.000000e-01 : f32
    %28 = vector.broadcast %cst_18 : f32 to vector<2x8x128xf32>
    %29 = arith.mulf %28, %27 : vector<2x8x128xf32>
    %30 = vector.extract_strided_slice %7 {offsets = [0, 0, 256], sizes = [2, 8, 128], strides = [1, 1, 1]} : vector<2x8x384xf32> to vector<2x8x128xf32>
    %31 = vector.extract_strided_slice %9 {offsets = [0, 0, 256], sizes = [2, 8, 128], strides = [1, 1, 1]} : vector<2x8x384xf32> to vector<2x8x128xf32>
    %32 = vector.broadcast %4 : vector<2x1x128xf32> to vector<2x8x128xf32>
    %33 = arith.addf %31, %32 : vector<2x8x128xf32>
    %34 = arith.mulf %22, %33 : vector<2x8x128xf32>
    %35 = arith.addf %30, %34 : vector<2x8x128xf32>
    %36 = math.tanh %35 : vector<2x8x128xf32>
    %37 = arith.subf %8, %36 : vector<2x8x128xf32>
    %38 = arith.mulf %29, %37 : vector<2x8x128xf32>
    %39 = arith.addf %36, %38 : vector<2x8x128xf32>
    %40 = arith.index_cast %c0_i32_6 : i32 to index
    %c0_19 = arith.constant 0 : index
    %c0_20 = arith.constant 0 : index
    %c0_21 = arith.constant 0 : index
    %41 = vector.load %arg4[%40, %c0_19, %c0_20, %c0_21] : memref<8x2x8x128xf32, #tpu.memory_space<vmem>>, vector<1x2x8x128xf32>
    %42 = vector.shape_cast %41 : vector<1x2x8x128xf32> to vector<2x8x128xf32>
    %43 = vector.shape_cast %39 : vector<2x8x128xf32> to vector<1x2x8x128xf32>
    tpu.vector_store %arg4[%40, %c0_19, %c0_20, %c0_21], %43 {strides = array<i32>} : memref<8x2x8x128xf32, #tpu.memory_space<vmem>>, vector<1x2x8x128xf32>,
    %c0_22 = arith.constant 0 : index
    %c0_23 = arith.constant 0 : index
    %c0_24 = arith.constant 0 : index
    %44 = vector.load %arg5[%c0_22, %c0_23, %c0_24] : memref<2x8x128xf32, #tpu.memory_space<vmem>>, vector<2x8x128xf32>
    tpu.vector_store %arg5[%c0_22, %c0_23, %c0_24], %39 {strides = array<i32>} : memref<2x8x128xf32, #tpu.memory_space<vmem>>, vector<2x8x128xf32>,
    %c1_i32 = arith.constant 1 : i32
    %45 = arith.index_cast %c1_i32 : i32 to index
    %c0_25 = arith.constant 0 : index
    %c0_26 = arith.constant 0 : index
    %c0_27 = arith.constant 0 : index
    %46 = vector.load %arg1[%45, %c0_25, %c0_26, %c0_27] : memref<8x2x8x384xf32, #tpu.memory_space<vmem>>, vector<1x2x8x384xf32>
    %47 = vector.shape_cast %46 : vector<1x2x8x384xf32> to vector<2x8x384xf32>
    %c0_28 = arith.constant 0 : index
    %c0_29 = arith.constant 0 : index
    %c0_30 = arith.constant 0 : index
    %48 = vector.load %arg5[%c0_28, %c0_29, %c0_30] : memref<2x8x128xf32, #tpu.memory_space<vmem>>, vector<2x8x128xf32>
    "tpu.trace_start"() <{level = 10 : i32, message = "dbh,dhg->dbg"}> : () -> ()
    %cst_31 = arith.constant dense<0.000000e+00> : vector<2x8x384xf32>
    %49 = tpu.matmul %48, %3, %cst_31 {dimension_numbers = #tpu.dot_dimension_numbers<[2], [1], [1], [2], [0, 0, 0, 1, 1, 2], [0], [0]>} : vector<2x8x128xf32>, vector<2x128x384xf32>, vector<2x8x384xf32> -> vector<2x8x384xf32>
    "tpu.trace_stop"() : () -> ()
    %50 = vector.extract_strided_slice %47 {offsets = [0, 0, 0], sizes = [2, 8, 128], strides = [1, 1, 1]} : vector<2x8x384xf32> to vector<2x8x128xf32>
    %51 = vector.extract_strided_slice %49 {offsets = [0, 0, 0], sizes = [2, 8, 128], strides = [1, 1, 1]} : vector<2x8x384xf32> to vector<2x8x128xf32>
    %52 = arith.addf %50, %51 : vector<2x8x128xf32>
    %53 = vector.extract_strided_slice %47 {offsets = [0, 0, 128], sizes = [2, 8, 128], strides = [1, 1, 1]} : vector<2x8x384xf32> to vector<2x8x128xf32>
    %54 = vector.extract_strided_slice %49 {offsets = [0, 0, 128], sizes = [2, 8, 128], strides = [1, 1, 1]} : vector<2x8x384xf32> to vector<2x8x128xf32>
    %55 = arith.addf %53, %54 : vector<2x8x128xf32>
    %cst_32 = arith.constant 5.000000e-01 : f32
    %56 = vector.broadcast %cst_32 : f32 to vector<2x8x128xf32>
    %57 = arith.mulf %56, %52 : vector<2x8x128xf32>
    %58 = math.tanh %57 : vector<2x8x128xf32>
    %cst_33 = arith.constant 1.000000e+00 : f32
    %59 = vector.broadcast %cst_33 : f32 to vector<2x8x128xf32>
    %60 = arith.addf %58, %59 : vector<2x8x128xf32>
    %cst_34 = arith.constant 5.000000e-01 : f32
    %61 = vector.broadcast %cst_34 : f32 to vector<2x8x128xf32>
    %62 = arith.mulf %61, %60 : vector<2x8x128xf32>
    %cst_35 = arith.constant 5.000000e-01 : f32
    %63 = vector.broadcast %cst_35 : f32 to vector<2x8x128xf32>
    %64 = arith.mulf %63, %55 : vector<2x8x128xf32>
    %65 = math.tanh %64 : vector<2x8x128xf32>
    %cst_36 = arith.constant 1.000000e+00 : f32
    %66 = vector.broadcast %cst_36 : f32 to vector<2x8x128xf32>
    %67 = arith.addf %65, %66 : vector<2x8x128xf32>
    %cst_37 = arith.constant 5.000000e-01 : f32
    %68 = vector.broadcast %cst_37 : f32 to vector<2x8x128xf32>
    %69 = arith.mulf %68, %67 : vector<2x8x128xf32>
    %70 = vector.extract_strided_slice %47 {offsets = [0, 0, 256], sizes = [2, 8, 128], strides = [1, 1, 1]} : vector<2x8x384xf32> to vector<2x8x128xf32>
    %71 = vector.extract_strided_slice %49 {offsets = [0, 0, 256], sizes = [2, 8, 128], strides = [1, 1, 1]} : vector<2x8x384xf32> to vector<2x8x128xf32>
    %72 = vector.broadcast %4 : vector<2x1x128xf32> to vector<2x8x128xf32>
    %73 = arith.addf %71, %72 : vector<2x8x128xf32>
    %74 = arith.mulf %62, %73 : vector<2x8x128xf32>
    %75 = arith.addf %70, %74 : vector<2x8x128xf32>
    %76 = math.tanh %75 : vector<2x8x128xf32>
    %77 = arith.subf %48, %76 : vector<2x8x128xf32>
    %78 = arith.mulf %69, %77 : vector<2x8x128xf32>
    %79 = arith.addf %76, %78 : vector<2x8x128xf32>
    %80 = arith.index_cast %c1_i32 : i32 to index
    %c0_38 = arith.constant 0 : index
    %c0_39 = arith.constant 0 : index
    %c0_40 = arith.constant 0 : index
    %81 = vector.load %arg4[%80, %c0_38, %c0_39, %c0_40] : memref<8x2x8x128xf32, #tpu.memory_space<vmem>>, vector<1x2x8x128xf32>
    %82 = vector.shape_cast %81 : vector<1x2x8x128xf32> to vector<2x8x128xf32>
    %83 = vector.shape_cast %79 : vector<2x8x128xf32> to vector<1x2x8x128xf32>
    tpu.vector_store %arg4[%80, %c0_38, %c0_39, %c0_40], %83 {strides = array<i32>} : memref<8x2x8x128xf32, #tpu.memory_space<vmem>>, vector<1x2x8x128xf32>,
    %c0_41 = arith.constant 0 : index
    %c0_42 = arith.constant 0 : index
    %c0_43 = arith.constant 0 : index
    %84 = vector.load %arg5[%c0_41, %c0_42, %c0_43] : memref<2x8x128xf32, #tpu.memory_space<vmem>>, vector<2x8x128xf32>
    tpu.vector_store %arg5[%c0_41, %c0_42, %c0_43], %79 {strides = array<i32>} : memref<2x8x128xf32, #tpu.memory_space<vmem>>, vector<2x8x128xf32>,
    %c2_i32 = arith.constant 2 : i32
    %85 = arith.index_cast %c2_i32 : i32 to index
    %c0_44 = arith.constant 0 : index
    %c0_45 = arith.constant 0 : index
    %c0_46 = arith.constant 0 : index
    %86 = vector.load %arg1[%85, %c0_44, %c0_45, %c0_46] : memref<8x2x8x384xf32, #tpu.memory_space<vmem>>, vector<1x2x8x384xf32>
    %87 = vector.shape_cast %86 : vector<1x2x8x384xf32> to vector<2x8x384xf32>
    %c0_47 = arith.constant 0 : index
    %c0_48 = arith.constant 0 : index
    %c0_49 = arith.constant 0 : index
    %88 = vector.load %arg5[%c0_47, %c0_48, %c0_49] : memref<2x8x128xf32, #tpu.memory_space<vmem>>, vector<2x8x128xf32>
    "tpu.trace_start"() <{level = 10 : i32, message = "dbh,dhg->dbg"}> : () -> ()
    %cst_50 = arith.constant dense<0.000000e+00> : vector<2x8x384xf32>
    %89 = tpu.matmul %88, %3, %cst_50 {dimension_numbers = #tpu.dot_dimension_numbers<[2], [1], [1], [2], [0, 0, 0, 1, 1, 2], [0], [0]>} : vector<2x8x128xf32>, vector<2x128x384xf32>, vector<2x8x384xf32> -> vector<2x8x384xf32>
    "tpu.trace_stop"() : () -> ()
    %90 = vector.extract_strided_slice %87 {offsets = [0, 0, 0], sizes = [2, 8, 128], strides = [1, 1, 1]} : vector<2x8x384xf32> to vector<2x8x128xf32>
    %91 = vector.extract_strided_slice %89 {offsets = [0, 0, 0], sizes = [2, 8, 128], strides = [1, 1, 1]} : vector<2x8x384xf32> to vector<2x8x128xf32>
    %92 = arith.addf %90, %91 : vector<2x8x128xf32>
    %93 = vector.extract_strided_slice %87 {offsets = [0, 0, 128], sizes = [2, 8, 128], strides = [1, 1, 1]} : vector<2x8x384xf32> to vector<2x8x128xf32>
    %94 = vector.extract_strided_slice %89 {offsets = [0, 0, 128], sizes = [2, 8, 128], strides = [1, 1, 1]} : vector<2x8x384xf32> to vector<2x8x128xf32>
    %95 = arith.addf %93, %94 : vector<2x8x128xf32>
    %cst_51 = arith.constant 5.000000e-01 : f32
    %96 = vector.broadcast %cst_51 : f32 to vector<2x8x128xf32>
    %97 = arith.mulf %96, %92 : vector<2x8x128xf32>
    %98 = math.tanh %97 : vector<2x8x128xf32>
    %cst_52 = arith.constant 1.000000e+00 : f32
    %99 = vector.broadcast %cst_52 : f32 to vector<2x8x128xf32>
    %100 = arith.addf %98, %99 : vector<2x8x128xf32>
    %cst_53 = arith.constant 5.000000e-01 : f32
    %101 = vector.broadcast %cst_53 : f32 to vector<2x8x128xf32>
    %102 = arith.mulf %101, %100 : vector<2x8x128xf32>
    %cst_54 = arith.constant 5.000000e-01 : f32
    %103 = vector.broadcast %cst_54 : f32 to vector<2x8x128xf32>
    %104 = arith.mulf %103, %95 : vector<2x8x128xf32>
    %105 = math.tanh %104 : vector<2x8x128xf32>
    %cst_55 = arith.constant 1.000000e+00 : f32
    %106 = vector.broadcast %cst_55 : f32 to vector<2x8x128xf32>
    %107 = arith.addf %105, %106 : vector<2x8x128xf32>
    %cst_56 = arith.constant 5.000000e-01 : f32
    %108 = vector.broadcast %cst_56 : f32 to vector<2x8x128xf32>
    %109 = arith.mulf %108, %107 : vector<2x8x128xf32>
    %110 = vector.extract_strided_slice %87 {offsets = [0, 0, 256], sizes = [2, 8, 128], strides = [1, 1, 1]} : vector<2x8x384xf32> to vector<2x8x128xf32>
    %111 = vector.extract_strided_slice %89 {offsets = [0, 0, 256], sizes = [2, 8, 128], strides = [1, 1, 1]} : vector<2x8x384xf32> to vector<2x8x128xf32>
    %112 = vector.broadcast %4 : vector<2x1x128xf32> to vector<2x8x128xf32>
    %113 = arith.addf %111, %112 : vector<2x8x128xf32>
    %114 = arith.mulf %102, %113 : vector<2x8x128xf32>
    %115 = arith.addf %110, %114 : vector<2x8x128xf32>
    %116 = math.tanh %115 : vector<2x8x128xf32>
    %117 = arith.subf %88, %116 : vector<2x8x128xf32>
    %118 = arith.mulf %109, %117 : vector<2x8x128xf32>
    %119 = arith.addf %116, %118 : vector<2x8x128xf32>
    %120 = arith.index_cast %c2_i32 : i32 to index
    %c0_57 = arith.constant 0 : index
    %c0_58 = arith.constant 0 : index
    %c0_59 = arith.constant 0 : index
    %121 = vector.load %arg4[%120, %c0_57, %c0_58, %c0_59] : memref<8x2x8x128xf32, #tpu.memory_space<vmem>>, vector<1x2x8x128xf32>
    %122 = vector.shape_cast %121 : vector<1x2x8x128xf32> to vector<2x8x128xf32>
    %123 = vector.shape_cast %119 : vector<2x8x128xf32> to vector<1x2x8x128xf32>
    tpu.vector_store %arg4[%120, %c0_57, %c0_58, %c0_59], %123 {strides = array<i32>} : memref<8x2x8x128xf32, #tpu.memory_space<vmem>>, vector<1x2x8x128xf32>,
    %c0_60 = arith.constant 0 : index
    %c0_61 = arith.constant 0 : index
    %c0_62 = arith.constant 0 : index
    %124 = vector.load %arg5[%c0_60, %c0_61, %c0_62] : memref<2x8x128xf32, #tpu.memory_space<vmem>>, vector<2x8x128xf32>
    tpu.vector_store %arg5[%c0_60, %c0_61, %c0_62], %119 {strides = array<i32>} : memref<2x8x128xf32, #tpu.memory_space<vmem>>, vector<2x8x128xf32>,
    %c3_i32 = arith.constant 3 : i32
    %125 = arith.index_cast %c3_i32 : i32 to index
    %c0_63 = arith.constant 0 : index
    %c0_64 = arith.constant 0 : index
    %c0_65 = arith.constant 0 : index
    %126 = vector.load %arg1[%125, %c0_63, %c0_64, %c0_65] : memref<8x2x8x384xf32, #tpu.memory_space<vmem>>, vector<1x2x8x384xf32>
    %127 = vector.shape_cast %126 : vector<1x2x8x384xf32> to vector<2x8x384xf32>
    %c0_66 = arith.constant 0 : index
    %c0_67 = arith.constant 0 : index
    %c0_68 = arith.constant 0 : index
    %128 = vector.load %arg5[%c0_66, %c0_67, %c0_68] : memref<2x8x128xf32, #tpu.memory_space<vmem>>, vector<2x8x128xf32>
    "tpu.trace_start"() <{level = 10 : i32, message = "dbh,dhg->dbg"}> : () -> ()
    %cst_69 = arith.constant dense<0.000000e+00> : vector<2x8x384xf32>
    %129 = tpu.matmul %128, %3, %cst_69 {dimension_numbers = #tpu.dot_dimension_numbers<[2], [1], [1], [2], [0, 0, 0, 1, 1, 2], [0], [0]>} : vector<2x8x128xf32>, vector<2x128x384xf32>, vector<2x8x384xf32> -> vector<2x8x384xf32>
    "tpu.trace_stop"() : () -> ()
    %130 = vector.extract_strided_slice %127 {offsets = [0, 0, 0], sizes = [2, 8, 128], strides = [1, 1, 1]} : vector<2x8x384xf32> to vector<2x8x128xf32>
    %131 = vector.extract_strided_slice %129 {offsets = [0, 0, 0], sizes = [2, 8, 128], strides = [1, 1, 1]} : vector<2x8x384xf32> to vector<2x8x128xf32>
    %132 = arith.addf %130, %131 : vector<2x8x128xf32>
    %133 = vector.extract_strided_slice %127 {offsets = [0, 0, 128], sizes = [2, 8, 128], strides = [1, 1, 1]} : vector<2x8x384xf32> to vector<2x8x128xf32>
    %134 = vector.extract_strided_slice %129 {offsets = [0, 0, 128], sizes = [2, 8, 128], strides = [1, 1, 1]} : vector<2x8x384xf32> to vector<2x8x128xf32>
    %135 = arith.addf %133, %134 : vector<2x8x128xf32>
    %cst_70 = arith.constant 5.000000e-01 : f32
    %136 = vector.broadcast %cst_70 : f32 to vector<2x8x128xf32>
    %137 = arith.mulf %136, %132 : vector<2x8x128xf32>
    %138 = math.tanh %137 : vector<2x8x128xf32>
    %cst_71 = arith.constant 1.000000e+00 : f32
    %139 = vector.broadcast %cst_71 : f32 to vector<2x8x128xf32>
    %140 = arith.addf %138, %139 : vector<2x8x128xf32>
    %cst_72 = arith.constant 5.000000e-01 : f32
    %141 = vector.broadcast %cst_72 : f32 to vector<2x8x128xf32>
    %142 = arith.mulf %141, %140 : vector<2x8x128xf32>
    %cst_73 = arith.constant 5.000000e-01 : f32
    %143 = vector.broadcast %cst_73 : f32 to vector<2x8x128xf32>
    %144 = arith.mulf %143, %135 : vector<2x8x128xf32>
    %145 = math.tanh %144 : vector<2x8x128xf32>
    %cst_74 = arith.constant 1.000000e+00 : f32
    %146 = vector.broadcast %cst_74 : f32 to vector<2x8x128xf32>
    %147 = arith.addf %145, %146 : vector<2x8x128xf32>
    %cst_75 = arith.constant 5.000000e-01 : f32
    %148 = vector.broadcast %cst_75 : f32 to vector<2x8x128xf32>
    %149 = arith.mulf %148, %147 : vector<2x8x128xf32>
    %150 = vector.extract_strided_slice %127 {offsets = [0, 0, 256], sizes = [2, 8, 128], strides = [1, 1, 1]} : vector<2x8x384xf32> to vector<2x8x128xf32>
    %151 = vector.extract_strided_slice %129 {offsets = [0, 0, 256], sizes = [2, 8, 128], strides = [1, 1, 1]} : vector<2x8x384xf32> to vector<2x8x128xf32>
    %152 = vector.broadcast %4 : vector<2x1x128xf32> to vector<2x8x128xf32>
    %153 = arith.addf %151, %152 : vector<2x8x128xf32>
    %154 = arith.mulf %142, %153 : vector<2x8x128xf32>
    %155 = arith.addf %150, %154 : vector<2x8x128xf32>
    %156 = math.tanh %155 : vector<2x8x128xf32>
    %157 = arith.subf %128, %156 : vector<2x8x128xf32>
    %158 = arith.mulf %149, %157 : vector<2x8x128xf32>
    %159 = arith.addf %156, %158 : vector<2x8x128xf32>
    %160 = arith.index_cast %c3_i32 : i32 to index
    %c0_76 = arith.constant 0 : index
    %c0_77 = arith.constant 0 : index
    %c0_78 = arith.constant 0 : index
    %161 = vector.load %arg4[%160, %c0_76, %c0_77, %c0_78] : memref<8x2x8x128xf32, #tpu.memory_space<vmem>>, vector<1x2x8x128xf32>
    %162 = vector.shape_cast %161 : vector<1x2x8x128xf32> to vector<2x8x128xf32>
    %163 = vector.shape_cast %159 : vector<2x8x128xf32> to vector<1x2x8x128xf32>
    tpu.vector_store %arg4[%160, %c0_76, %c0_77, %c0_78], %163 {strides = array<i32>} : memref<8x2x8x128xf32, #tpu.memory_space<vmem>>, vector<1x2x8x128xf32>,
    %c0_79 = arith.constant 0 : index
    %c0_80 = arith.constant 0 : index
    %c0_81 = arith.constant 0 : index
    %164 = vector.load %arg5[%c0_79, %c0_80, %c0_81] : memref<2x8x128xf32, #tpu.memory_space<vmem>>, vector<2x8x128xf32>
    tpu.vector_store %arg5[%c0_79, %c0_80, %c0_81], %159 {strides = array<i32>} : memref<2x8x128xf32, #tpu.memory_space<vmem>>, vector<2x8x128xf32>,
    %c4_i32 = arith.constant 4 : i32
    %165 = arith.index_cast %c4_i32 : i32 to index
    %c0_82 = arith.constant 0 : index
    %c0_83 = arith.constant 0 : index
    %c0_84 = arith.constant 0 : index
    %166 = vector.load %arg1[%165, %c0_82, %c0_83, %c0_84] : memref<8x2x8x384xf32, #tpu.memory_space<vmem>>, vector<1x2x8x384xf32>
    %167 = vector.shape_cast %166 : vector<1x2x8x384xf32> to vector<2x8x384xf32>
    %c0_85 = arith.constant 0 : index
    %c0_86 = arith.constant 0 : index
    %c0_87 = arith.constant 0 : index
    %168 = vector.load %arg5[%c0_85, %c0_86, %c0_87] : memref<2x8x128xf32, #tpu.memory_space<vmem>>, vector<2x8x128xf32>
    "tpu.trace_start"() <{level = 10 : i32, message = "dbh,dhg->dbg"}> : () -> ()
    %cst_88 = arith.constant dense<0.000000e+00> : vector<2x8x384xf32>
    %169 = tpu.matmul %168, %3, %cst_88 {dimension_numbers = #tpu.dot_dimension_numbers<[2], [1], [1], [2], [0, 0, 0, 1, 1, 2], [0], [0]>} : vector<2x8x128xf32>, vector<2x128x384xf32>, vector<2x8x384xf32> -> vector<2x8x384xf32>
    "tpu.trace_stop"() : () -> ()
    %170 = vector.extract_strided_slice %167 {offsets = [0, 0, 0], sizes = [2, 8, 128], strides = [1, 1, 1]} : vector<2x8x384xf32> to vector<2x8x128xf32>
    %171 = vector.extract_strided_slice %169 {offsets = [0, 0, 0], sizes = [2, 8, 128], strides = [1, 1, 1]} : vector<2x8x384xf32> to vector<2x8x128xf32>
    %172 = arith.addf %170, %171 : vector<2x8x128xf32>
    %173 = vector.extract_strided_slice %167 {offsets = [0, 0, 128], sizes = [2, 8, 128], strides = [1, 1, 1]} : vector<2x8x384xf32> to vector<2x8x128xf32>
    %174 = vector.extract_strided_slice %169 {offsets = [0, 0, 128], sizes = [2, 8, 128], strides = [1, 1, 1]} : vector<2x8x384xf32> to vector<2x8x128xf32>
    %175 = arith.addf %173, %174 : vector<2x8x128xf32>
    %cst_89 = arith.constant 5.000000e-01 : f32
    %176 = vector.broadcast %cst_89 : f32 to vector<2x8x128xf32>
    %177 = arith.mulf %176, %172 : vector<2x8x128xf32>
    %178 = math.tanh %177 : vector<2x8x128xf32>
    %cst_90 = arith.constant 1.000000e+00 : f32
    %179 = vector.broadcast %cst_90 : f32 to vector<2x8x128xf32>
    %180 = arith.addf %178, %179 : vector<2x8x128xf32>
    %cst_91 = arith.constant 5.000000e-01 : f32
    %181 = vector.broadcast %cst_91 : f32 to vector<2x8x128xf32>
    %182 = arith.mulf %181, %180 : vector<2x8x128xf32>
    %cst_92 = arith.constant 5.000000e-01 : f32
    %183 = vector.broadcast %cst_92 : f32 to vector<2x8x128xf32>
    %184 = arith.mulf %183, %175 : vector<2x8x128xf32>
    %185 = math.tanh %184 : vector<2x8x128xf32>
    %cst_93 = arith.constant 1.000000e+00 : f32
    %186 = vector.broadcast %cst_93 : f32 to vector<2x8x128xf32>
    %187 = arith.addf %185, %186 : vector<2x8x128xf32>
    %cst_94 = arith.constant 5.000000e-01 : f32
    %188 = vector.broadcast %cst_94 : f32 to vector<2x8x128xf32>
    %189 = arith.mulf %188, %187 : vector<2x8x128xf32>
    %190 = vector.extract_strided_slice %167 {offsets = [0, 0, 256], sizes = [2, 8, 128], strides = [1, 1, 1]} : vector<2x8x384xf32> to vector<2x8x128xf32>
    %191 = vector.extract_strided_slice %169 {offsets = [0, 0, 256], sizes = [2, 8, 128], strides = [1, 1, 1]} : vector<2x8x384xf32> to vector<2x8x128xf32>
    %192 = vector.broadcast %4 : vector<2x1x128xf32> to vector<2x8x128xf32>
    %193 = arith.addf %191, %192 : vector<2x8x128xf32>
    %194 = arith.mulf %182, %193 : vector<2x8x128xf32>
    %195 = arith.addf %190, %194 : vector<2x8x128xf32>
    %196 = math.tanh %195 : vector<2x8x128xf32>
    %197 = arith.subf %168, %196 : vector<2x8x128xf32>
    %198 = arith.mulf %189, %197 : vector<2x8x128xf32>
    %199 = arith.addf %196, %198 : vector<2x8x128xf32>
    %200 = arith.index_cast %c4_i32 : i32 to index
    %c0_95 = arith.constant 0 : index
    %c0_96 = arith.constant 0 : index
    %c0_97 = arith.constant 0 : index
    %201 = vector.load %arg4[%200, %c0_95, %c0_96, %c0_97] : memref<8x2x8x128xf32, #tpu.memory_space<vmem>>, vector<1x2x8x128xf32>
    %202 = vector.shape_cast %201 : vector<1x2x8x128xf32> to vector<2x8x128xf32>
    %203 = vector.shape_cast %199 : vector<2x8x128xf32> to vector<1x2x8x128xf32>
    tpu.vector_store %arg4[%200, %c0_95, %c0_96, %c0_97], %203 {strides = array<i32>} : memref<8x2x8x128xf32, #tpu.memory_space<vmem>>, vector<1x2x8x128xf32>,
    %c0_98 = arith.constant 0 : index
    %c0_99 = arith.constant 0 : index
    %c0_100 = arith.constant 0 : index
    %204 = vector.load %arg5[%c0_98, %c0_99, %c0_100] : memref<2x8x128xf32, #tpu.memory_space<vmem>>, vector<2x8x128xf32>
    tpu.vector_store %arg5[%c0_98, %c0_99, %c0_100], %199 {strides = array<i32>} : memref<2x8x128xf32, #tpu.memory_space<vmem>>, vector<2x8x128xf32>,
    %c5_i32 = arith.constant 5 : i32
    %205 = arith.index_cast %c5_i32 : i32 to index
    %c0_101 = arith.constant 0 : index
    %c0_102 = arith.constant 0 : index
    %c0_103 = arith.constant 0 : index
    %206 = vector.load %arg1[%205, %c0_101, %c0_102, %c0_103] : memref<8x2x8x384xf32, #tpu.memory_space<vmem>>, vector<1x2x8x384xf32>
    %207 = vector.shape_cast %206 : vector<1x2x8x384xf32> to vector<2x8x384xf32>
    %c0_104 = arith.constant 0 : index
    %c0_105 = arith.constant 0 : index
    %c0_106 = arith.constant 0 : index
    %208 = vector.load %arg5[%c0_104, %c0_105, %c0_106] : memref<2x8x128xf32, #tpu.memory_space<vmem>>, vector<2x8x128xf32>
    "tpu.trace_start"() <{level = 10 : i32, message = "dbh,dhg->dbg"}> : () -> ()
    %cst_107 = arith.constant dense<0.000000e+00> : vector<2x8x384xf32>
    %209 = tpu.matmul %208, %3, %cst_107 {dimension_numbers = #tpu.dot_dimension_numbers<[2], [1], [1], [2], [0, 0, 0, 1, 1, 2], [0], [0]>} : vector<2x8x128xf32>, vector<2x128x384xf32>, vector<2x8x384xf32> -> vector<2x8x384xf32>
    "tpu.trace_stop"() : () -> ()
    %210 = vector.extract_strided_slice %207 {offsets = [0, 0, 0], sizes = [2, 8, 128], strides = [1, 1, 1]} : vector<2x8x384xf32> to vector<2x8x128xf32>
    %211 = vector.extract_strided_slice %209 {offsets = [0, 0, 0], sizes = [2, 8, 128], strides = [1, 1, 1]} : vector<2x8x384xf32> to vector<2x8x128xf32>
    %212 = arith.addf %210, %211 : vector<2x8x128xf32>
    %213 = vector.extract_strided_slice %207 {offsets = [0, 0, 128], sizes = [2, 8, 128], strides = [1, 1, 1]} : vector<2x8x384xf32> to vector<2x8x128xf32>
    %214 = vector.extract_strided_slice %209 {offsets = [0, 0, 128], sizes = [2, 8, 128], strides = [1, 1, 1]} : vector<2x8x384xf32> to vector<2x8x128xf32>
    %215 = arith.addf %213, %214 : vector<2x8x128xf32>
    %cst_108 = arith.constant 5.000000e-01 : f32
    %216 = vector.broadcast %cst_108 : f32 to vector<2x8x128xf32>
    %217 = arith.mulf %216, %212 : vector<2x8x128xf32>
    %218 = math.tanh %217 : vector<2x8x128xf32>
    %cst_109 = arith.constant 1.000000e+00 : f32
    %219 = vector.broadcast %cst_109 : f32 to vector<2x8x128xf32>
    %220 = arith.addf %218, %219 : vector<2x8x128xf32>
    %cst_110 = arith.constant 5.000000e-01 : f32
    %221 = vector.broadcast %cst_110 : f32 to vector<2x8x128xf32>
    %222 = arith.mulf %221, %220 : vector<2x8x128xf32>
    %cst_111 = arith.constant 5.000000e-01 : f32
    %223 = vector.broadcast %cst_111 : f32 to vector<2x8x128xf32>
    %224 = arith.mulf %223, %215 : vector<2x8x128xf32>
    %225 = math.tanh %224 : vector<2x8x128xf32>
    %cst_112 = arith.constant 1.000000e+00 : f32
    %226 = vector.broadcast %cst_112 : f32 to vector<2x8x128xf32>
    %227 = arith.addf %225, %226 : vector<2x8x128xf32>
    %cst_113 = arith.constant 5.000000e-01 : f32
    %228 = vector.broadcast %cst_113 : f32 to vector<2x8x128xf32>
    %229 = arith.mulf %228, %227 : vector<2x8x128xf32>
    %230 = vector.extract_strided_slice %207 {offsets = [0, 0, 256], sizes = [2, 8, 128], strides = [1, 1, 1]} : vector<2x8x384xf32> to vector<2x8x128xf32>
    %231 = vector.extract_strided_slice %209 {offsets = [0, 0, 256], sizes = [2, 8, 128], strides = [1, 1, 1]} : vector<2x8x384xf32> to vector<2x8x128xf32>
    %232 = vector.broadcast %4 : vector<2x1x128xf32> to vector<2x8x128xf32>
    %233 = arith.addf %231, %232 : vector<2x8x128xf32>
    %234 = arith.mulf %222, %233 : vector<2x8x128xf32>
    %235 = arith.addf %230, %234 : vector<2x8x128xf32>
    %236 = math.tanh %235 : vector<2x8x128xf32>
    %237 = arith.subf %208, %236 : vector<2x8x128xf32>
    %238 = arith.mulf %229, %237 : vector<2x8x128xf32>
    %239 = arith.addf %236, %238 : vector<2x8x128xf32>
    %240 = arith.index_cast %c5_i32 : i32 to index
    %c0_114 = arith.constant 0 : index
    %c0_115 = arith.constant 0 : index
    %c0_116 = arith.constant 0 : index
    %241 = vector.load %arg4[%240, %c0_114, %c0_115, %c0_116] : memref<8x2x8x128xf32, #tpu.memory_space<vmem>>, vector<1x2x8x128xf32>
    %242 = vector.shape_cast %241 : vector<1x2x8x128xf32> to vector<2x8x128xf32>
    %243 = vector.shape_cast %239 : vector<2x8x128xf32> to vector<1x2x8x128xf32>
    tpu.vector_store %arg4[%240, %c0_114, %c0_115, %c0_116], %243 {strides = array<i32>} : memref<8x2x8x128xf32, #tpu.memory_space<vmem>>, vector<1x2x8x128xf32>,
    %c0_117 = arith.constant 0 : index
    %c0_118 = arith.constant 0 : index
    %c0_119 = arith.constant 0 : index
    %244 = vector.load %arg5[%c0_117, %c0_118, %c0_119] : memref<2x8x128xf32, #tpu.memory_space<vmem>>, vector<2x8x128xf32>
    tpu.vector_store %arg5[%c0_117, %c0_118, %c0_119], %239 {strides = array<i32>} : memref<2x8x128xf32, #tpu.memory_space<vmem>>, vector<2x8x128xf32>,
    %c6_i32 = arith.constant 6 : i32
    %245 = arith.index_cast %c6_i32 : i32 to index
    %c0_120 = arith.constant 0 : index
    %c0_121 = arith.constant 0 : index
    %c0_122 = arith.constant 0 : index
    %246 = vector.load %arg1[%245, %c0_120, %c0_121, %c0_122] : memref<8x2x8x384xf32, #tpu.memory_space<vmem>>, vector<1x2x8x384xf32>
    %247 = vector.shape_cast %246 : vector<1x2x8x384xf32> to vector<2x8x384xf32>
    %c0_123 = arith.constant 0 : index
    %c0_124 = arith.constant 0 : index
    %c0_125 = arith.constant 0 : index
    %248 = vector.load %arg5[%c0_123, %c0_124, %c0_125] : memref<2x8x128xf32, #tpu.memory_space<vmem>>, vector<2x8x128xf32>
    "tpu.trace_start"() <{level = 10 : i32, message = "dbh,dhg->dbg"}> : () -> ()
    %cst_126 = arith.constant dense<0.000000e+00> : vector<2x8x384xf32>
    %249 = tpu.matmul %248, %3, %cst_126 {dimension_numbers = #tpu.dot_dimension_numbers<[2], [1], [1], [2], [0, 0, 0, 1, 1, 2], [0], [0]>} : vector<2x8x128xf32>, vector<2x128x384xf32>, vector<2x8x384xf32> -> vector<2x8x384xf32>
    "tpu.trace_stop"() : () -> ()
    %250 = vector.extract_strided_slice %247 {offsets = [0, 0, 0], sizes = [2, 8, 128], strides = [1, 1, 1]} : vector<2x8x384xf32> to vector<2x8x128xf32>
    %251 = vector.extract_strided_slice %249 {offsets = [0, 0, 0], sizes = [2, 8, 128], strides = [1, 1, 1]} : vector<2x8x384xf32> to vector<2x8x128xf32>
    %252 = arith.addf %250, %251 : vector<2x8x128xf32>
    %253 = vector.extract_strided_slice %247 {offsets = [0, 0, 128], sizes = [2, 8, 128], strides = [1, 1, 1]} : vector<2x8x384xf32> to vector<2x8x128xf32>
    %254 = vector.extract_strided_slice %249 {offsets = [0, 0, 128], sizes = [2, 8, 128], strides = [1, 1, 1]} : vector<2x8x384xf32> to vector<2x8x128xf32>
    %255 = arith.addf %253, %254 : vector<2x8x128xf32>
    %cst_127 = arith.constant 5.000000e-01 : f32
    %256 = vector.broadcast %cst_127 : f32 to vector<2x8x128xf32>
    %257 = arith.mulf %256, %252 : vector<2x8x128xf32>
    %258 = math.tanh %257 : vector<2x8x128xf32>
    %cst_128 = arith.constant 1.000000e+00 : f32
    %259 = vector.broadcast %cst_128 : f32 to vector<2x8x128xf32>
    %260 = arith.addf %258, %259 : vector<2x8x128xf32>
    %cst_129 = arith.constant 5.000000e-01 : f32
    %261 = vector.broadcast %cst_129 : f32 to vector<2x8x128xf32>
    %262 = arith.mulf %261, %260 : vector<2x8x128xf32>
    %cst_130 = arith.constant 5.000000e-01 : f32
    %263 = vector.broadcast %cst_130 : f32 to vector<2x8x128xf32>
    %264 = arith.mulf %263, %255 : vector<2x8x128xf32>
    %265 = math.tanh %264 : vector<2x8x128xf32>
    %cst_131 = arith.constant 1.000000e+00 : f32
    %266 = vector.broadcast %cst_131 : f32 to vector<2x8x128xf32>
    %267 = arith.addf %265, %266 : vector<2x8x128xf32>
    %cst_132 = arith.constant 5.000000e-01 : f32
    %268 = vector.broadcast %cst_132 : f32 to vector<2x8x128xf32>
    %269 = arith.mulf %268, %267 : vector<2x8x128xf32>
    %270 = vector.extract_strided_slice %247 {offsets = [0, 0, 256], sizes = [2, 8, 128], strides = [1, 1, 1]} : vector<2x8x384xf32> to vector<2x8x128xf32>
    %271 = vector.extract_strided_slice %249 {offsets = [0, 0, 256], sizes = [2, 8, 128], strides = [1, 1, 1]} : vector<2x8x384xf32> to vector<2x8x128xf32>
    %272 = vector.broadcast %4 : vector<2x1x128xf32> to vector<2x8x128xf32>
    %273 = arith.addf %271, %272 : vector<2x8x128xf32>
    %274 = arith.mulf %262, %273 : vector<2x8x128xf32>
    %275 = arith.addf %270, %274 : vector<2x8x128xf32>
    %276 = math.tanh %275 : vector<2x8x128xf32>
    %277 = arith.subf %248, %276 : vector<2x8x128xf32>
    %278 = arith.mulf %269, %277 : vector<2x8x128xf32>
    %279 = arith.addf %276, %278 : vector<2x8x128xf32>
    %280 = arith.index_cast %c6_i32 : i32 to index
    %c0_133 = arith.constant 0 : index
    %c0_134 = arith.constant 0 : index
    %c0_135 = arith.constant 0 : index
    %281 = vector.load %arg4[%280, %c0_133, %c0_134, %c0_135] : memref<8x2x8x128xf32, #tpu.memory_space<vmem>>, vector<1x2x8x128xf32>
    %282 = vector.shape_cast %281 : vector<1x2x8x128xf32> to vector<2x8x128xf32>
    %283 = vector.shape_cast %279 : vector<2x8x128xf32> to vector<1x2x8x128xf32>
    tpu.vector_store %arg4[%280, %c0_133, %c0_134, %c0_135], %283 {strides = array<i32>} : memref<8x2x8x128xf32, #tpu.memory_space<vmem>>, vector<1x2x8x128xf32>,
    %c0_136 = arith.constant 0 : index
    %c0_137 = arith.constant 0 : index
    %c0_138 = arith.constant 0 : index
    %284 = vector.load %arg5[%c0_136, %c0_137, %c0_138] : memref<2x8x128xf32, #tpu.memory_space<vmem>>, vector<2x8x128xf32>
    tpu.vector_store %arg5[%c0_136, %c0_137, %c0_138], %279 {strides = array<i32>} : memref<2x8x128xf32, #tpu.memory_space<vmem>>, vector<2x8x128xf32>,
    %c7_i32 = arith.constant 7 : i32
    %285 = arith.index_cast %c7_i32 : i32 to index
    %c0_139 = arith.constant 0 : index
    %c0_140 = arith.constant 0 : index
    %c0_141 = arith.constant 0 : index
    %286 = vector.load %arg1[%285, %c0_139, %c0_140, %c0_141] : memref<8x2x8x384xf32, #tpu.memory_space<vmem>>, vector<1x2x8x384xf32>
    %287 = vector.shape_cast %286 : vector<1x2x8x384xf32> to vector<2x8x384xf32>
    %c0_142 = arith.constant 0 : index
    %c0_143 = arith.constant 0 : index
    %c0_144 = arith.constant 0 : index
    %288 = vector.load %arg5[%c0_142, %c0_143, %c0_144] : memref<2x8x128xf32, #tpu.memory_space<vmem>>, vector<2x8x128xf32>
    "tpu.trace_start"() <{level = 10 : i32, message = "dbh,dhg->dbg"}> : () -> ()
    %cst_145 = arith.constant dense<0.000000e+00> : vector<2x8x384xf32>
    %289 = tpu.matmul %288, %3, %cst_145 {dimension_numbers = #tpu.dot_dimension_numbers<[2], [1], [1], [2], [0, 0, 0, 1, 1, 2], [0], [0]>} : vector<2x8x128xf32>, vector<2x128x384xf32>, vector<2x8x384xf32> -> vector<2x8x384xf32>
    "tpu.trace_stop"() : () -> ()
    %290 = vector.extract_strided_slice %287 {offsets = [0, 0, 0], sizes = [2, 8, 128], strides = [1, 1, 1]} : vector<2x8x384xf32> to vector<2x8x128xf32>
    %291 = vector.extract_strided_slice %289 {offsets = [0, 0, 0], sizes = [2, 8, 128], strides = [1, 1, 1]} : vector<2x8x384xf32> to vector<2x8x128xf32>
    %292 = arith.addf %290, %291 : vector<2x8x128xf32>
    %293 = vector.extract_strided_slice %287 {offsets = [0, 0, 128], sizes = [2, 8, 128], strides = [1, 1, 1]} : vector<2x8x384xf32> to vector<2x8x128xf32>
    %294 = vector.extract_strided_slice %289 {offsets = [0, 0, 128], sizes = [2, 8, 128], strides = [1, 1, 1]} : vector<2x8x384xf32> to vector<2x8x128xf32>
    %295 = arith.addf %293, %294 : vector<2x8x128xf32>
    %cst_146 = arith.constant 5.000000e-01 : f32
    %296 = vector.broadcast %cst_146 : f32 to vector<2x8x128xf32>
    %297 = arith.mulf %296, %292 : vector<2x8x128xf32>
    %298 = math.tanh %297 : vector<2x8x128xf32>
    %cst_147 = arith.constant 1.000000e+00 : f32
    %299 = vector.broadcast %cst_147 : f32 to vector<2x8x128xf32>
    %300 = arith.addf %298, %299 : vector<2x8x128xf32>
    %cst_148 = arith.constant 5.000000e-01 : f32
    %301 = vector.broadcast %cst_148 : f32 to vector<2x8x128xf32>
    %302 = arith.mulf %301, %300 : vector<2x8x128xf32>
    %cst_149 = arith.constant 5.000000e-01 : f32
    %303 = vector.broadcast %cst_149 : f32 to vector<2x8x128xf32>
    %304 = arith.mulf %303, %295 : vector<2x8x128xf32>
    %305 = math.tanh %304 : vector<2x8x128xf32>
    %cst_150 = arith.constant 1.000000e+00 : f32
    %306 = vector.broadcast %cst_150 : f32 to vector<2x8x128xf32>
    %307 = arith.addf %305, %306 : vector<2x8x128xf32>
    %cst_151 = arith.constant 5.000000e-01 : f32
    %308 = vector.broadcast %cst_151 : f32 to vector<2x8x128xf32>
    %309 = arith.mulf %308, %307 : vector<2x8x128xf32>
    %310 = vector.extract_strided_slice %287 {offsets = [0, 0, 256], sizes = [2, 8, 128], strides = [1, 1, 1]} : vector<2x8x384xf32> to vector<2x8x128xf32>
    %311 = vector.extract_strided_slice %289 {offsets = [0, 0, 256], sizes = [2, 8, 128], strides = [1, 1, 1]} : vector<2x8x384xf32> to vector<2x8x128xf32>
    %312 = vector.broadcast %4 : vector<2x1x128xf32> to vector<2x8x128xf32>
    %313 = arith.addf %311, %312 : vector<2x8x128xf32>
    %314 = arith.mulf %302, %313 : vector<2x8x128xf32>
    %315 = arith.addf %310, %314 : vector<2x8x128xf32>
    %316 = math.tanh %315 : vector<2x8x128xf32>
    %317 = arith.subf %288, %316 : vector<2x8x128xf32>
    %318 = arith.mulf %309, %317 : vector<2x8x128xf32>
    %319 = arith.addf %316, %318 : vector<2x8x128xf32>
    %320 = arith.index_cast %c7_i32 : i32 to index
    %c0_152 = arith.constant 0 : index
    %c0_153 = arith.constant 0 : index
    %c0_154 = arith.constant 0 : index
    %321 = vector.load %arg4[%320, %c0_152, %c0_153, %c0_154] : memref<8x2x8x128xf32, #tpu.memory_space<vmem>>, vector<1x2x8x128xf32>
    %322 = vector.shape_cast %321 : vector<1x2x8x128xf32> to vector<2x8x128xf32>
    %323 = vector.shape_cast %319 : vector<2x8x128xf32> to vector<1x2x8x128xf32>
    tpu.vector_store %arg4[%320, %c0_152, %c0_153, %c0_154], %323 {strides = array<i32>} : memref<8x2x8x128xf32, #tpu.memory_space<vmem>>, vector<1x2x8x128xf32>,
    %c0_155 = arith.constant 0 : index
    %c0_156 = arith.constant 0 : index
    %c0_157 = arith.constant 0 : index
    %324 = vector.load %arg5[%c0_155, %c0_156, %c0_157] : memref<2x8x128xf32, #tpu.memory_space<vmem>>, vector<2x8x128xf32>
    tpu.vector_store %arg5[%c0_155, %c0_156, %c0_157], %319 {strides = array<i32>} : memref<2x8x128xf32, #tpu.memory_space<vmem>>, vector<2x8x128xf32>,
    %c8_i32 = arith.constant 8 : i32
    return
  }
  func.func @transform_0(%arg0: i32) -> (i32, i32, i32, i32) {
    %c0_i32 = arith.constant 0 : i32
    %c0_i32_0 = arith.constant 0 : i32
    %c0_i32_1 = arith.constant 0 : i32
    %c0_i32_2 = arith.constant 0 : i32
    return %arg0, %c0_i32, %c0_i32_0, %c0_i32_1 : i32, i32, i32, i32
  }
  func.func @transform_1(%arg0: i32) -> (i32, i32, i32) {
    %c0_i32 = arith.constant 0 : i32
    %c0_i32_0 = arith.constant 0 : i32
    %c0_i32_1 = arith.constant 0 : i32
    %c0_i32_2 = arith.constant 0 : i32
    return %c0_i32, %c0_i32_0, %c0_i32_1 : i32, i32, i32
  }
  func.func @transform_2(%arg0: i32) -> (i32, i32, i32) {
    %c0_i32 = arith.constant 0 : i32
    %c0_i32_0 = arith.constant 0 : i32
    %c0_i32_1 = arith.constant 0 : i32
    %c0_i32_2 = arith.constant 0 : i32
    return %c0_i32, %c0_i32_0, %c0_i32_1 : i32, i32, i32
  }
  func.func @transform_3(%arg0: i32) -> (i32, i32, i32, i32) {
    %c0_i32 = arith.constant 0 : i32
    %c0_i32_0 = arith.constant 0 : i32
    %c0_i32_1 = arith.constant 0 : i32
    %c0_i32_2 = arith.constant 0 : i32
    return %arg0, %c0_i32, %c0_i32_0, %c0_i32_1 : i32, i32, i32, i32
  }
}

</mosaic_0001>

<llo_original>
// kernel: bigru_forward.1
$region0: #{bigru_forward.1}
  #allocation0 [shape = 'u32[]', space=smem, size = 0x4, offset = 0x4, fixed_abs, tag = 'smem constant byte address 0x4 - core index']
  #allocation1 [shape = 'u32[144,128]{1,0:T(1,128)}', space=vmem, size = 0x12000, scoped, tag = 'internal scratch']
  #allocation2 [shape = 'f32[2,8,128]{2,1,0:T(8,128)}', space=vmem, size = 0x2000, scoped, tag = 'scratch operand']
  %s0 = inlined_call_operand.vmem [shape: f32[8,2,8,384], index: 0, kind: input, shape index: {}]
  %s1 = inlined_call_operand.vmem [shape: f32[2,128,384], index: 1, kind: input, shape index: {}]
  %s2 = inlined_call_operand.vmem [shape: f32[2,1,128], index: 2, kind: input, shape index: {}]
  %s3 = inlined_call_operand.vmem [shape: f32[8,2,8,128], index: 3, kind: output, shape index: {}]
  %s4 = sld [smem:[#allocation0]]
  $region26: #{bigru_forward.1} parent=0
    _
  %s6 = ssub.s32 1, %s4
  %s7 = scalar_select 0, %s6, %s4
  // Predicated region
  $region2: #{bigru_forward.1} parent=0 // pred_check
    _
  $region3: #{bigru_forward.1} parent=0 // pred_check_branch
    %9 = sbr.rel (0) target = $region5
  $region4: #{bigru_forward.1} parent=0 // pred_region
    _
  $region5: #{bigru_forward.1} parent=0 // pred_fallthru
    _
  // Predicated region
  $region6: #{bigru_forward.1} parent=0 // pred_check
    _
  $region7: #{bigru_forward.1} parent=0 // pred_check_branch
    %11 = sbr.rel (0) target = $region9
  $region8: #{bigru_forward.1} parent=0 // pred_region
    _
  $region9: #{bigru_forward.1} parent=0 // pred_fallthru
    _
  // Predicated region
  $region10: #{bigru_forward.1} parent=0 // pred_check
    _
  $region11: #{bigru_forward.1} parent=0 // pred_check_branch
    %13 = sbr.rel (0) target = $region13
  $region12: #{bigru_forward.1} parent=0 // pred_region
    _
  $region13: #{bigru_forward.1} parent=0 // pred_fallthru
    _
  %p14 = scmp.eq.s32.totalorder 0, 0
  // Predicated region
  $region14: #{bigru_forward.1} parent=0 // pred_check
    %p15 = pneg %p14
  $region15: #{bigru_forward.1} parent=0 // pred_check_branch
    %17 = sbr.rel (%p15) target = $region17
  $region16: #{bigru_forward.1} parent=0 // pred_region
    %18 = vst [vmem:[#allocation2] sm:$0xff] 0.0
    %19 = vst [vmem:[#allocation2 + $0x8] sm:$0xff] 0.0
  $region17: #{bigru_forward.1} parent=0 // pred_fallthru
    _
  %v20 = vld [vmem:[%s1] sm:$0xff]
  %v21 = vld [vmem:[%s1 + $0x8] sm:$0xff]
  %v22 = vld [vmem:[%s1 + $0x10] sm:$0xff]
  %v23 = vld [vmem:[%s1 + $0x18] sm:$0xff]
  %v24 = vld [vmem:[%s1 + $0x20] sm:$0xff]
  %v25 = vld [vmem:[%s1 + $0x28] sm:$0xff]
  %v26 = vld [vmem:[%s1 + $0x30] sm:$0xff]
  %v27 = vld [vmem:[%s1 + $0x38] sm:$0xff]
  %v28 = vld [vmem:[%s1 + $0x40] sm:$0xff]
  %v29 = vld [vmem:[%s1 + $0x48] sm:$0xff]
  %v30 = vld [vmem:[%s1 + $0x50] sm:$0xff]
  %v31 = vld [vmem:[%s1 + $0x58] sm:$0xff]
  %v32 = vld [vmem:[%s1 + $0x60] sm:$0xff]
  %v33 = vld [vmem:[%s1 + $0x68] sm:$0xff]
  %v34 = vld [vmem:[%s1 + $0x70] sm:$0xff]
  %v35 = vld [vmem:[%s1 + $0x78] sm:$0xff]
  %v36 = vld [vmem:[%s1 + $0x80] sm:$0xff]
  %v37 = vld [vmem:[%s1 + $0x88] sm:$0xff]
  %v38 = vld [vmem:[%s1 + $0x90] sm:$0xff]
  %v39 = vld [vmem:[%s1 + $0x98] sm:$0xff]
  %v40 = vld [vmem:[%s1 + $0xa0] sm:$0xff]
  %v41 = vld [vmem:[%s1 + $0xa8] sm:$0xff]
  %v42 = vld [vmem:[%s1 + $0xb0] sm:$0xff]
  %v43 = vld [vmem:[%s1 + $0xb8] sm:$0xff]
  %v44 = vld [vmem:[%s1 + $0xc0] sm:$0xff]
  %v45 = vld [vmem:[%s1 + $0xc8] sm:$0xff]
  %v46 = vld [vmem:[%s1 + $0xd0] sm:$0xff]
  %v47 = vld [vmem:[%s1 + $0xd8] sm:$0xff]
  %v48 = vld [vmem:[%s1 + $0xe0] sm:$0xff]
  %v49 = vld [vmem:[%s1 + $0xe8] sm:$0xff]
  %v50 = vld [vmem:[%s1 + $0xf0] sm:$0xff]
  %v51 = vld [vmem:[%s1 + $0xf8] sm:$0xff]
  %v52 = vld [vmem:[%s1 + $0x100] sm:$0xff]
  %v53 = vld [vmem:[%s1 + $0x108] sm:$0xff]
  %v54 = vld [vmem:[%s1 + $0x110] sm:$0xff]
  %v55 = vld [vmem:[%s1 + $0x118] sm:$0xff]
  %v56 = vld [vmem:[%s1 + $0x120] sm:$0xff]
  %v57 = vld [vmem:[%s1 + $0x128] sm:$0xff]
  %v58 = vld [vmem:[%s1 + $0x130] sm:$0xff]
  %v59 = vld [vmem:[%s1 + $0x138] sm:$0xff]
  %v60 = vld [vmem:[%s1 + $0x140] sm:$0xff]
  %v61 = vld [vmem:[%s1 + $0x148] sm:$0xff]
  %v62 = vld [vmem:[%s1 + $0x150] sm:$0xff]
  %v63 = vld [vmem:[%s1 + $0x158] sm:$0xff]
  %v64 = vld [vmem:[%s1 + $0x160] sm:$0xff]
  %v65 = vld [vmem:[%s1 + $0x168] sm:$0xff]
  %v66 = vld [vmem:[%s1 + $0x170] sm:$0xff]
  %v67 = vld [vmem:[%s1 + $0x178] sm:$0xff]
  %v68 = vld [vmem:[%s1 + $0x180] sm:$0xff]
  %v69 = vld [vmem:[%s1 + $0x188] sm:$0xff]
  %v70 = vld [vmem:[%s1 + $0x190] sm:$0xff]
  %v71 = vld [vmem:[%s1 + $0x198] sm:$0xff]
  %v72 = vld [vmem:[%s1 + $0x1a0] sm:$0xff]
  %v73 = vld [vmem:[%s1 + $0x1a8] sm:$0xff]
  %v74 = vld [vmem:[%s1 + $0x1b0] sm:$0xff]
  %v75 = vld [vmem:[%s1 + $0x1b8] sm:$0xff]
  %v76 = vld [vmem:[%s1 + $0x1c0] sm:$0xff]
  %v77 = vld [vmem:[%s1 + $0x1c8] sm:$0xff]
  %v78 = vld [vmem:[%s1 + $0x1d0] sm:$0xff]
  %v79 = vld [vmem:[%s1 + $0x1d8] sm:$0xff]
  %v80 = vld [vmem:[%s1 + $0x1e0] sm:$0xff]
  %v81 = vld [vmem:[%s1 + $0x1e8] sm:$0xff]
  %v82 = vld [vmem:[%s1 + $0x1f0] sm:$0xff]
  %v83 = vld [vmem:[%s1 + $0x1f8] sm:$0xff]
  %v84 = vld [vmem:[%s1 + $0x200] sm:$0xff]
  %v85 = vld [vmem:[%s1 + $0x208] sm:$0xff]
  %v86 = vld [vmem:[%s1 + $0x210] sm:$0xff]
  %v87 = vld [vmem:[%s1 + $0x218] sm:$0xff]
  %v88 = vld [vmem:[%s1 + $0x220] sm:$0xff]
  %v89 = vld [vmem:[%s1 + $0x228] sm:$0xff]
  %v90 = vld [vmem:[%s1 + $0x230] sm:$0xff]
  %v91 = vld [vmem:[%s1 + $0x238] sm:$0xff]
  %v92 = vld [vmem:[%s1 + $0x240] sm:$0xff]
  %v93 = vld [vmem:[%s1 + $0x248] sm:$0xff]
  %v94 = vld [vmem:[%s1 + $0x250] sm:$0xff]
  %v95 = vld [vmem:[%s1 + $0x258] sm:$0xff]
  %v96 = vld [vmem:[%s1 + $0x260] sm:$0xff]
  %v97 = vld [vmem:[%s1 + $0x268] sm:$0xff]
  %v98 = vld [vmem:[%s1 + $0x270] sm:$0xff]
  %v99 = vld [vmem:[%s1 + $0x278] sm:$0xff]
  %v100 = vld [vmem:[%s1 + $0x280] sm:$0xff]
  %v101 = vld [vmem:[%s1 + $0x288] sm:$0xff]
  %v102 = vld [vmem:[%s1 + $0x290] sm:$0xff]
  %v103 = vld [vmem:[%s1 + $0x298] sm:$0xff]
  %v104 = vld [vmem:[%s1 + $0x2a0] sm:$0xff]
  %v105 = vld [vmem:[%s1 + $0x2a8] sm:$0xff]
  %v106 = vld [vmem:[%s1 + $0x2b0] sm:$0xff]
  %v107 = vld [vmem:[%s1 + $0x2b8] sm:$0xff]
  %v108 = vld [vmem:[%s1 + $0x2c0] sm:$0xff]
  %v109 = vld [vmem:[%s1 + $0x2c8] sm:$0xff]
  %v110 = vld [vmem:[%s1 + $0x2d0] sm:$0xff]
  %v111 = vld [vmem:[%s1 + $0x2d8] sm:$0xff]
  %v112 = vld [vmem:[%s1 + $0x2e0] sm:$0xff]
  %v113 = vld [vmem:[%s1 + $0x2e8] sm:$0xff]
  %v114 = vld [vmem:[%s1 + $0x2f0] sm:$0xff]
  %v115 = vld [vmem:[%s1 + $0x2f8] sm:$0xff]
  %v116 = vld [vmem:[%s2] sm:$0x1]
  %v117 = vld [vmem:[%s2 + $0x1] sm:$0x1]
  %v118 = vld [vmem:[%s0] sm:$0xff]
  %v119 = vld [vmem:[%s0 + $0x8] sm:$0xff]
  %v120 = vld [vmem:[%s0 + $0x10] sm:$0xff]
  %v121 = vld [vmem:[%s0 + $0x18] sm:$0xff]
  %v122 = vld [vmem:[%s0 + $0x20] sm:$0xff]
  %v123 = vld [vmem:[%s0 + $0x28] sm:$0xff]
  %v124 = vld [vmem:[#allocation2] sm:$0xff]
  %v125 = vld [vmem:[#allocation2 + $0x8] sm:$0xff]
  %126 = vmatprep.subr.mxu0 %v66
  %127 = vmatpush1.msra.mxu0 %v65
  %128 = vmatprep.subr.mxu0 %v63
  %129 = vmatpush1.msra.mxu0 %v62
  %130 = vmatprep.subr.mxu0 %v60
  %131 = vmatpush1.msra.mxu0 %v59
  %132 = vmatprep.subr.mxu0 %v57
  %133 = vmatpush1.msra.mxu0 %v56
  %134 = vmatprep.subr.mxu0 %v54
  %135 = vmatpush1.msra.mxu0 %v53
  %136 = vmatprep.subr.mxu0 %v51
  %137 = vmatpush1.msra.mxu0 %v50
  %138 = vmatprep.subr.mxu0 %v48
  %139 = vmatpush1.msra.mxu0 %v47
  %140 = vmatprep.subr.mxu0 %v45
  %141 = vmatpush1.msra.mxu0 %v44
  %142 = vmatprep.subr.mxu0 %v42
  %143 = vmatpush1.msra.mxu0 %v41
  %144 = vmatprep.subr.mxu0 %v39
  %145 = vmatpush1.msra.mxu0 %v38
  %146 = vmatprep.subr.mxu0 %v36
  %147 = vmatpush1.msra.mxu0 %v35
  %148 = vmatprep.subr.mxu0 %v33
  %149 = vmatpush1.msra.mxu0 %v32
  %150 = vmatprep.subr.mxu0 %v30
  %151 = vmatpush1.msra.mxu0 %v29
  %152 = vmatprep.subr.mxu0 %v27
  %153 = vmatpush1.msra.mxu0 %v26
  %154 = vmatprep.subr.mxu0 %v24
  %155 = vmatpush1.msra.mxu0 %v23
  %156 = vmatprep.subr.mxu0 %v21
  %157 = vmatpush1.msra.mxu0 %v20
  %158 = vmatprep.subr.mxu0 0.0
  %159 = vmatpush2.msra.mxu0 0.0
  %160 = vmatprep.subr.mxu0 0.0
  %161 = vmatpush2.msra.mxu0 0.0
  %162 = vmatprep.subr.mxu0 0.0
  %163 = vmatpush2.msra.mxu0 0.0
  %164 = vmatprep.subr.mxu0 0.0
  %165 = vmatpush2.msra.mxu0 0.0
  %166 = vmatprep.subr.mxu0 0.0
  %167 = vmatpush2.msra.mxu0 0.0
  %168 = vmatprep.subr.mxu0 0.0
  %169 = vmatpush2.msra.mxu0 0.0
  %170 = vmatprep.subr.mxu0 0.0
  %171 = vmatpush2.msra.mxu0 0.0
  %172 = vmatprep.subr.mxu0 0.0
  %173 = vmatpush2.msra.mxu0 0.0
  %174 = vmatprep.subr.mxu0 0.0
  %175 = vmatpush2.msra.mxu0 0.0
  %176 = vmatprep.subr.mxu0 0.0
  %177 = vmatpush2.msra.mxu0 0.0
  %178 = vmatprep.subr.mxu0 0.0
  %179 = vmatpush2.msra.mxu0 0.0
  %180 = vmatprep.subr.mxu0 0.0
  %181 = vmatpush2.msra.mxu0 0.0
  %182 = vmatprep.subr.mxu0 0.0
  %183 = vmatpush2.msra.mxu0 0.0
  %184 = vmatprep.subr.mxu0 0.0
  %185 = vmatpush2.msra.mxu0 0.0
  %186 = vmatprep.subr.mxu0 0.0
  %187 = vmatpush2.msra.mxu0 0.0
  %188 = vmatprep.subr.mxu0 0.0
  %189 = vmatpush2.msra.mxu0 0.0
  %190 = vmatprep.mubr.f32.mxu0 0.0
  %191 = vmatmul.mubr.f32.gmra.mxu0 %v124
  %v192 = vpop.f32.mrf.mxu0
  %v193 = vadd.f32 0.0, %v192
  %v194 = vpop.f32.mrf.mxu0
  %v195 = vadd.f32 0.0, %v194
  %196 = vdwg.mxu0
  %197 = vmatprep.subr.mxu0 0.0
  %198 = vmatpush1.msra.mxu0 %v67
  %199 = vmatprep.subr.mxu0 0.0
  %200 = vmatpush1.msra.mxu0 %v64
  %201 = vmatprep.subr.mxu0 0.0
  %202 = vmatpush1.msra.mxu0 %v61
  %203 = vmatprep.subr.mxu0 0.0
  %204 = vmatpush1.msra.mxu0 %v58
  %205 = vmatprep.subr.mxu0 0.0
  %206 = vmatpush1.msra.mxu0 %v55
  %207 = vmatprep.subr.mxu0 0.0
  %208 = vmatpush1.msra.mxu0 %v52
  %209 = vmatprep.subr.mxu0 0.0
  %210 = vmatpush1.msra.mxu0 %v49
  %211 = vmatprep.subr.mxu0 0.0
  %212 = vmatpush1.msra.mxu0 %v46
  %213 = vmatprep.subr.mxu0 0.0
  %214 = vmatpush1.msra.mxu0 %v43
  %215 = vmatprep.subr.mxu0 0.0
  %216 = vmatpush1.msra.mxu0 %v40
  %217 = vmatprep.subr.mxu0 0.0
  %218 = vmatpush1.msra.mxu0 %v37
  %219 = vmatprep.subr.mxu0 0.0
  %220 = vmatpush1.msra.mxu0 %v34
  %221 = vmatprep.subr.mxu0 0.0
  %222 = vmatpush1.msra.mxu0 %v31
  %223 = vmatprep.subr.mxu0 0.0
  %224 = vmatpush1.msra.mxu0 %v28
  %225 = vmatprep.subr.mxu0 0.0
  %226 = vmatpush1.msra.mxu0 %v25
  %227 = vmatprep.subr.mxu0 0.0
  %228 = vmatpush1.msra.mxu0 %v22
  %229 = vmatprep.subr.mxu0 0.0
  %230 = vmatpush2.msra.mxu0 0.0
  %231 = vmatprep.subr.mxu0 0.0
  %232 = vmatpush2.msra.mxu0 0.0
  %233 = vmatprep.subr.mxu0 0.0
  %234 = vmatpush2.msra.mxu0 0.0
  %235 = vmatprep.subr.mxu0 0.0
  %236 = vmatpush2.msra.mxu0 0.0
  %237 = vmatprep.subr.mxu0 0.0
  %238 = vmatpush2.msra.mxu0 0.0
  %239 = vmatprep.subr.mxu0 0.0
  %240 = vmatpush2.msra.mxu0 0.0
  %241 = vmatprep.subr.mxu0 0.0
  %242 = vmatpush2.msra.mxu0 0.0
  %243 = vmatprep.subr.mxu0 0.0
  %244 = vmatpush2.msra.mxu0 0.0
  %245 = vmatprep.subr.mxu0 0.0
  %246 = vmatpush2.msra.mxu0 0.0
  %247 = vmatprep.subr.mxu0 0.0
  %248 = vmatpush2.msra.mxu0 0.0
  %249 = vmatprep.subr.mxu0 0.0
  %250 = vmatpush2.msra.mxu0 0.0
  %251 = vmatprep.subr.mxu0 0.0
  %252 = vmatpush2.msra.mxu0 0.0
  %253 = vmatprep.subr.mxu0 0.0
  %254 = vmatpush2.msra.mxu0 0.0
  %255 = vmatprep.subr.mxu0 0.0
  %256 = vmatpush2.msra.mxu0 0.0
  %257 = vmatprep.subr.mxu0 0.0
  %258 = vmatpush2.msra.mxu0 0.0
  %259 = vmatprep.subr.mxu0 0.0
  %260 = vmatpush2.msra.mxu0 0.0
  %261 = vmatprep.mubr.f32.mxu0 0.0
  %262 = vmatmul.mubr.f32.gmra.mxu0 %v124
  %v263 = vpop.f32.mrf.mxu0
  %v264 = vadd.f32 0.0, %v263
  %v265 = vpop.f32.mrf.mxu0
  %266 = vdwg.mxu0
  %267 = vmatprep.subr.mxu0 %v114
  %268 = vmatpush1.msra.mxu0 %v113
  %269 = vmatprep.subr.mxu0 %v111
  %270 = vmatpush1.msra.mxu0 %v110
  %271 = vmatprep.subr.mxu0 %v108
  %272 = vmatpush1.msra.mxu0 %v107
  %273 = vmatprep.subr.mxu0 %v105
  %274 = vmatpush1.msra.mxu0 %v104
  %275 = vmatprep.subr.mxu0 %v102
  %276 = vmatpush1.msra.mxu0 %v101
  %277 = vmatprep.subr.mxu0 %v99
  %278 = vmatpush1.msra.mxu0 %v98
  %279 = vmatprep.subr.mxu0 %v96
  %280 = vmatpush1.msra.mxu0 %v95
  %281 = vmatprep.subr.mxu0 %v93
  %282 = vmatpush1.msra.mxu0 %v92
  %283 = vmatprep.subr.mxu0 %v90
  %284 = vmatpush1.msra.mxu0 %v89
  %285 = vmatprep.subr.mxu0 %v87
  %286 = vmatpush1.msra.mxu0 %v86
  %287 = vmatprep.subr.mxu0 %v84
  %288 = vmatpush1.msra.mxu0 %v83
  %289 = vmatprep.subr.mxu0 %v81
  %290 = vmatpush1.msra.mxu0 %v80
  %291 = vmatprep.subr.mxu0 %v78
  %292 = vmatpush1.msra.mxu0 %v77
  %293 = vmatprep.subr.mxu0 %v75
  %294 = vmatpush1.msra.mxu0 %v74
  %295 = vmatprep.subr.mxu0 %v72
  %296 = vmatpush1.msra.mxu0 %v71
  %297 = vmatprep.subr.mxu0 %v69
  %298 = vmatpush1.msra.mxu0 %v68
  %299 = vmatprep.subr.mxu0 0.0
  %300 = vmatpush2.msra.mxu0 0.0
  %301 = vmatprep.subr.mxu0 0.0
  %302 = vmatpush2.msra.mxu0 0.0
  %303 = vmatprep.subr.mxu0 0.0
  %304 = vmatpush2.msra.mxu0 0.0
  %305 = vmatprep.subr.mxu0 0.0
  %306 = vmatpush2.msra.mxu0 0.0
  %307 = vmatprep.subr.mxu0 0.0
  %308 = vmatpush2.msra.mxu0 0.0
  %309 = vmatprep.subr.mxu0 0.0
  %310 = vmatpush2.msra.mxu0 0.0
  %311 = vmatprep.subr.mxu0 0.0
  %312 = vmatpush2.msra.mxu0 0.0
  %313 = vmatprep.subr.mxu0 0.0
  %314 = vmatpush2.msra.mxu0 0.0
  %315 = vmatprep.subr.mxu0 0.0
  %316 = vmatpush2.msra.mxu0 0.0
  %317 = vmatprep.subr.mxu0 0.0
  %318 = vmatpush2.msra.mxu0 0.0
  %319 = vmatprep.subr.mxu0 0.0
  %320 = vmatpush2.msra.mxu0 0.0
  %321 = vmatprep.subr.mxu0 0.0
  %322 = vmatpush2.msra.mxu0 0.0
  %323 = vmatprep.subr.mxu0 0.0
  %324 = vmatpush2.msra.mxu0 0.0
  %325 = vmatprep.subr.mxu0 0.0
  %326 = vmatpush2.msra.mxu0 0.0
  %327 = vmatprep.subr.mxu0 0.0
  %328 = vmatpush2.msra.mxu0 0.0
  %329 = vmatprep.subr.mxu0 0.0
  %330 = vmatpush2.msra.mxu0 0.0
  %331 = vmatprep.mubr.f32.mxu0 0.0
  %332 = vmatmul.mubr.f32.gmra.mxu0 %v125
  %v333 = vpop.f32.mrf.mxu0
  %v334 = vadd.f32 0.0, %v333
  %v335 = vpop.f32.mrf.mxu0
  %v336 = vadd.f32 0.0, %v335
  %337 = vdwg.mxu0
  %338 = vmatprep.subr.mxu0 0.0
  %339 = vmatpush1.msra.mxu0 %v115
  %340 = vmatprep.subr.mxu0 0.0
  %341 = vmatpush1.msra.mxu0 %v112
  %342 = vmatprep.subr.mxu0 0.0
  %343 = vmatpush1.msra.mxu0 %v109
  %344 = vmatprep.subr.mxu0 0.0
  %345 = vmatpush1.msra.mxu0 %v106
  %346 = vmatprep.subr.mxu0 0.0
  %347 = vmatpush1.msra.mxu0 %v103
  %348 = vmatprep.subr.mxu0 0.0
  %349 = vmatpush1.msra.mxu0 %v100
  %350 = vmatprep.subr.mxu0 0.0
  %351 = vmatpush1.msra.mxu0 %v97
  %352 = vmatprep.subr.mxu0 0.0
  %353 = vmatpush1.msra.mxu0 %v94
  %354 = vmatprep.subr.mxu0 0.0
  %355 = vmatpush1.msra.mxu0 %v91
  %356 = vmatprep.subr.mxu0 0.0
  %357 = vmatpush1.msra.mxu0 %v88
  %358 = vmatprep.subr.mxu0 0.0
  %359 = vmatpush1.msra.mxu0 %v85
  %360 = vmatprep.subr.mxu0 0.0
  %361 = vmatpush1.msra.mxu0 %v82
  %362 = vmatprep.subr.mxu0 0.0
  %363 = vmatpush1.msra.mxu0 %v79
  %364 = vmatprep.subr.mxu0 0.0
  %365 = vmatpush1.msra.mxu0 %v76
  %366 = vmatprep.subr.mxu0 0.0
  %367 = vmatpush1.msra.mxu0 %v73
  %368 = vmatprep.subr.mxu0 0.0
  %369 = vmatpush1.msra.mxu0 %v70
  %370 = vmatprep.subr.mxu0 0.0
  %371 = vmatpush2.msra.mxu0 0.0
  %372 = vmatprep.subr.mxu0 0.0
  %373 = vmatpush2.msra.mxu0 0.0
  %374 = vmatprep.subr.mxu0 0.0
  %375 = vmatpush2.msra.mxu0 0.0
  %376 = vmatprep.subr.mxu0 0.0
  %377 = vmatpush2.msra.mxu0 0.0
  %378 = vmatprep.subr.mxu0 0.0
  %379 = vmatpush2.msra.mxu0 0.0
  %380 = vmatprep.subr.mxu0 0.0
  %381 = vmatpush2.msra.mxu0 0.0
  %382 = vmatprep.subr.mxu0 0.0
  %383 = vmatpush2.msra.mxu0 0.0
  %384 = vmatprep.subr.mxu0 0.0
  %385 = vmatpush2.msra.mxu0 0.0
  %386 = vmatprep.subr.mxu0 0.0
  %387 = vmatpush2.msra.mxu0 0.0
  %388 = vmatprep.subr.mxu0 0.0
  %389 = vmatpush2.msra.mxu0 0.0
  %390 = vmatprep.subr.mxu0 0.0
  %391 = vmatpush2.msra.mxu0 0.0
  %392 = vmatprep.subr.mxu0 0.0
  %393 = vmatpush2.msra.mxu0 0.0
  %394 = vmatprep.subr.mxu0 0.0
  %395 = vmatpush2.msra.mxu0 0.0
  %396 = vmatprep.subr.mxu0 0.0
  %397 = vmatpush2.msra.mxu0 0.0
  %398 = vmatprep.subr.mxu0 0.0
  %399 = vmatpush2.msra.mxu0 0.0
  %400 = vmatprep.subr.mxu0 0.0
  %401 = vmatpush2.msra.mxu0 0.0
  %402 = vmatprep.mubr.f32.mxu0 0.0
  %403 = vmatmul.mubr.f32.gmra.mxu0 %v125
  %v404 = vpop.f32.mrf.mxu0
  %v405 = vadd.f32 0.0, %v404
  %v406 = vpop.f32.mrf.mxu0
  %407 = vdwg.mxu0
  %v408 = vadd.f32 %v118, %v193
  %v409 = vadd.f32 %v121, %v334
  %v410 = vadd.f32 %v119, %v195
  %v411 = vadd.f32 %v122, %v336
  %v412 = vmul.f32 %v408, 0.5
  %v413 = vmul.f32 %v409, 0.5
  %v414 = vtanh.pop %v412
  %v415 = vtanh.pop %v413
  %v416 = vadd.f32 %v414, 1.0
  %v417 = vadd.f32 %v415, 1.0
  %v418 = vmul.f32 %v416, 0.5
  %v419 = vmul.f32 %v417, 0.5
  %v420 = vmul.f32 %v410, 0.5
  %v421 = vmul.f32 %v411, 0.5
  %v422 = vtanh.pop %v420
  %v423 = vtanh.pop %v421
  %v424 = vadd.f32 %v422, 1.0
  %v425 = vadd.f32 %v423, 1.0
  %v426 = vmul.f32 %v424, 0.5
  %v427 = vmul.f32 %v425, 0.5
  %v430 = vlaneseq
  %v431 = vshrl.u32 %v430, 7
  %v432 = vsub.s32 0, %v431
  %v433 = vrot.slane %v116, %v432
  %v434 = vlaneseq
  %v435 = vshrl.u32 %v434, 7
  %v436 = vsub.s32 0, %v435
  %v437 = vrot.slane %v117, %v436
  %v440 = vadd.f32 %v264, %v433
  %v441 = vadd.f32 %v405, %v437
  %v442 = vmul.f32 %v418, %v440
  %v443 = vmul.f32 %v419, %v441
  %v444 = vadd.f32 %v120, %v442
  %v445 = vadd.f32 %v123, %v443
  %v446 = vtanh.pop %v444
  %v447 = vtanh.pop %v445
  %v448 = vsub.f32 %v124, %v446
  %v449 = vsub.f32 %v125, %v447
  %v450 = vmul.f32 %v426, %v448
  %v451 = vmul.f32 %v427, %v449
  %v452 = vadd.f32 %v446, %v450
  %v453 = vadd.f32 %v447, %v451
  %454 = vst [vmem:[%s3] sm:$0xff] %v452
  %455 = vst [vmem:[%s3 + $0x8] sm:$0xff] %v453
  %456 = vst [vmem:[#allocation2] sm:$0xff] %v452
  %457 = vst [vmem:[#allocation2 + $0x8] sm:$0xff] %v453
  %s458 = scalar_lea.vmem %s0, 48
  %v459 = vld [vmem:[%s458] sm:$0xff]
  %v460 = vld [vmem:[%s458 + $0x8] sm:$0xff]
  %v461 = vld [vmem:[%s458 + $0x10] sm:$0xff]
  %v462 = vld [vmem:[%s458 + $0x18] sm:$0xff]
  %v463 = vld [vmem:[%s458 + $0x20] sm:$0xff]
  %v464 = vld [vmem:[%s458 + $0x28] sm:$0xff]
  %v465 = vld [vmem:[#allocation2] sm:$0xff]
  %v466 = vld [vmem:[#allocation2 + $0x8] sm:$0xff]
  %467 = vmatprep.subr.mxu0 %v66
  %468 = vmatpush1.msra.mxu0 %v65
  %469 = vmatprep.subr.mxu0 %v63
  %470 = vmatpush1.msra.mxu0 %v62
  %471 = vmatprep.subr.mxu0 %v60
  %472 = vmatpush1.msra.mxu0 %v59
  %473 = vmatprep.subr.mxu0 %v57
  %474 = vmatpush1.msra.mxu0 %v56
  %475 = vmatprep.subr.mxu0 %v54
  %476 = vmatpush1.msra.mxu0 %v53
  %477 = vmatprep.subr.mxu0 %v51
  %478 = vmatpush1.msra.mxu0 %v50
  %479 = vmatprep.subr.mxu0 %v48
  %480 = vmatpush1.msra.mxu0 %v47
  %481 = vmatprep.subr.mxu0 %v45
  %482 = vmatpush1.msra.mxu0 %v44
  %483 = vmatprep.subr.mxu0 %v42
  %484 = vmatpush1.msra.mxu0 %v41
  %485 = vmatprep.subr.mxu0 %v39
  %486 = vmatpush1.msra.mxu0 %v38
  %487 = vmatprep.subr.mxu0 %v36
  %488 = vmatpush1.msra.mxu0 %v35
  %489 = vmatprep.subr.mxu0 %v33
  %490 = vmatpush1.msra.mxu0 %v32
  %491 = vmatprep.subr.mxu0 %v30
  %492 = vmatpush1.msra.mxu0 %v29
  %493 = vmatprep.subr.mxu0 %v27
  %494 = vmatpush1.msra.mxu0 %v26
  %495 = vmatprep.subr.mxu0 %v24
  %496 = vmatpush1.msra.mxu0 %v23
  %497 = vmatprep.subr.mxu0 %v21
  %498 = vmatpush1.msra.mxu0 %v20
  %499 = vmatprep.subr.mxu0 0.0
  %500 = vmatpush2.msra.mxu0 0.0
  %501 = vmatprep.subr.mxu0 0.0
  %502 = vmatpush2.msra.mxu0 0.0
  %503 = vmatprep.subr.mxu0 0.0
  %504 = vmatpush2.msra.mxu0 0.0
  %505 = vmatprep.subr.mxu0 0.0
  %506 = vmatpush2.msra.mxu0 0.0
  %507 = vmatprep.subr.mxu0 0.0
  %508 = vmatpush2.msra.mxu0 0.0
  %509 = vmatprep.subr.mxu0 0.0
  %510 = vmatpush2.msra.mxu0 0.0
  %511 = vmatprep.subr.mxu0 0.0
  %512 = vmatpush2.msra.mxu0 0.0
  %513 = vmatprep.subr.mxu0 0.0
  %514 = vmatpush2.msra.mxu0 0.0
  %515 = vmatprep.subr.mxu0 0.0
  %516 = vmatpush2.msra.mxu0 0.0
  %517 = vmatprep.subr.mxu0 0.0
  %518 = vmatpush2.msra.mxu0 0.0
  %519 = vmatprep.subr.mxu0 0.0
  %520 = vmatpush2.msra.mxu0 0.0
  %521 = vmatprep.subr.mxu0 0.0
  %522 = vmatpush2.msra.mxu0 0.0
  %523 = vmatprep.subr.mxu0 0.0
  %524 = vmatpush2.msra.mxu0 0.0
  %525 = vmatprep.subr.mxu0 0.0
  %526 = vmatpush2.msra.mxu0 0.0
  %527 = vmatprep.subr.mxu0 0.0
  %528 = vmatpush2.msra.mxu0 0.0
  %529 = vmatprep.subr.mxu0 0.0
  %530 = vmatpush2.msra.mxu0 0.0
  %531 = vmatprep.mubr.f32.mxu0 0.0
  %532 = vmatmul.mubr.f32.gmra.mxu0 %v465
  %v533 = vpop.f32.mrf.mxu0
  %v534 = vadd.f32 0.0, %v533
  %v535 = vpop.f32.mrf.mxu0
  %v536 = vadd.f32 0.0, %v535
  %537 = vdwg.mxu0
  %538 = vmatprep.subr.mxu0 0.0
  %539 = vmatpush1.msra.mxu0 %v67
  %540 = vmatprep.subr.mxu0 0.0
  %541 = vmatpush1.msra.mxu0 %v64
  %542 = vmatprep.subr.mxu0 0.0
  %543 = vmatpush1.msra.mxu0 %v61
  %544 = vmatprep.subr.mxu0 0.0
  %545 = vmatpush1.msra.mxu0 %v58
  %546 = vmatprep.subr.mxu0 0.0
  %547 = vmatpush1.msra.mxu0 %v55
  %548 = vmatprep.subr.mxu0 0.0
  %549 = vmatpush1.msra.mxu0 %v52
  %550 = vmatprep.subr.mxu0 0.0
  %551 = vmatpush1.msra.mxu0 %v49
  %552 = vmatprep.subr.mxu0 0.0
  %553 = vmatpush1.msra.mxu0 %v46
  %554 = vmatprep.subr.mxu0 0.0
  %555 = vmatpush1.msra.mxu0 %v43
  %556 = vmatprep.subr.mxu0 0.0
  %557 = vmatpush1.msra.mxu0 %v40
  %558 = vmatprep.subr.mxu0 0.0
  %559 = vmatpush1.msra.mxu0 %v37
  %560 = vmatprep.subr.mxu0 0.0
  %561 = vmatpush1.msra.mxu0 %v34
  %562 = vmatprep.subr.mxu0 0.0
  %563 = vmatpush1.msra.mxu0 %v31
  %564 = vmatprep.subr.mxu0 0.0
  %565 = vmatpush1.msra.mxu0 %v28
  %566 = vmatprep.subr.mxu0 0.0
  %567 = vmatpush1.msra.mxu0 %v25
  %568 = vmatprep.subr.mxu0 0.0
  %569 = vmatpush1.msra.mxu0 %v22
  %570 = vmatprep.subr.mxu0 0.0
  %571 = vmatpush2.msra.mxu0 0.0
  %572 = vmatprep.subr.mxu0 0.0
  %573 = vmatpush2.msra.mxu0 0.0
  %574 = vmatprep.subr.mxu0 0.0
  %575 = vmatpush2.msra.mxu0 0.0
  %576 = vmatprep.subr.mxu0 0.0
  %577 = vmatpush2.msra.mxu0 0.0
  %578 = vmatprep.subr.mxu0 0.0
  %579 = vmatpush2.msra.mxu0 0.0
  %580 = vmatprep.subr.mxu0 0.0
  %581 = vmatpush2.msra.mxu0 0.0
  %582 = vmatprep.subr.mxu0 0.0
  %583 = vmatpush2.msra.mxu0 0.0
  %584 = vmatprep.subr.mxu0 0.0
  %585 = vmatpush2.msra.mxu0 0.0
  %586 = vmatprep.subr.mxu0 0.0
  %587 = vmatpush2.msra.mxu0 0.0
  %588 = vmatprep.subr.mxu0 0.0
  %589 = vmatpush2.msra.mxu0 0.0
  %590 = vmatprep.subr.mxu0 0.0
  %591 = vmatpush2.msra.mxu0 0.0
  %592 = vmatprep.subr.mxu0 0.0
  %593 = vmatpush2.msra.mxu0 0.0
  %594 = vmatprep.subr.mxu0 0.0
  %595 = vmatpush2.msra.mxu0 0.0
  %596 = vmatprep.subr.mxu0 0.0
  %597 = vmatpush2.msra.mxu0 0.0
  %598 = vmatprep.subr.mxu0 0.0
  %599 = vmatpush2.msra.mxu0 0.0
  %600 = vmatprep.subr.mxu0 0.0
  %601 = vmatpush2.msra.mxu0 0.0
  %602 = vmatprep.mubr.f32.mxu0 0.0
  %603 = vmatmul.mubr.f32.gmra.mxu0 %v465
  %v604 = vpop.f32.mrf.mxu0
  %v605 = vadd.f32 0.0, %v604
  %v606 = vpop.f32.mrf.mxu0
  %607 = vdwg.mxu0
  %608 = vmatprep.subr.mxu0 %v114
  %609 = vmatpush1.msra.mxu0 %v113
  %610 = vmatprep.subr.mxu0 %v111
  %611 = vmatpush1.msra.mxu0 %v110
  %612 = vmatprep.subr.mxu0 %v108
  %613 = vmatpush1.msra.mxu0 %v107
  %614 = vmatprep.subr.mxu0 %v105
  %615 = vmatpush1.msra.mxu0 %v104
  %616 = vmatprep.subr.mxu0 %v102
  %617 = vmatpush1.msra.mxu0 %v101
  %618 = vmatprep.subr.mxu0 %v99
  %619 = vmatpush1.msra.mxu0 %v98
  %620 = vmatprep.subr.mxu0 %v96
  %621 = vmatpush1.msra.mxu0 %v95
  %622 = vmatprep.subr.mxu0 %v93
  %623 = vmatpush1.msra.mxu0 %v92
  %624 = vmatprep.subr.mxu0 %v90
  %625 = vmatpush1.msra.mxu0 %v89
  %626 = vmatprep.subr.mxu0 %v87
  %627 = vmatpush1.msra.mxu0 %v86
  %628 = vmatprep.subr.mxu0 %v84
  %629 = vmatpush1.msra.mxu0 %v83
  %630 = vmatprep.subr.mxu0 %v81
  %631 = vmatpush1.msra.mxu0 %v80
  %632 = vmatprep.subr.mxu0 %v78
  %633 = vmatpush1.msra.mxu0 %v77
  %634 = vmatprep.subr.mxu0 %v75
  %635 = vmatpush1.msra.mxu0 %v74
  %636 = vmatprep.subr.mxu0 %v72
  %637 = vmatpush1.msra.mxu0 %v71
  %638 = vmatprep.subr.mxu0 %v69
  %639 = vmatpush1.msra.mxu0 %v68
  %640 = vmatprep.subr.mxu0 0.0
  %641 = vmatpush2.msra.mxu0 0.0
  %642 = vmatprep.subr.mxu0 0.0
  %643 = vmatpush2.msra.mxu0 0.0
  %644 = vmatprep.subr.mxu0 0.0
  %645 = vmatpush2.msra.mxu0 0.0
  %646 = vmatprep.subr.mxu0 0.0
  %647 = vmatpush2.msra.mxu0 0.0
  %648 = vmatprep.subr.mxu0 0.0
  %649 = vmatpush2.msra.mxu0 0.0
  %650 = vmatprep.subr.mxu0 0.0
  %651 = vmatpush2.msra.mxu0 0.0
  %652 = vmatprep.subr.mxu0 0.0
  %653 = vmatpush2.msra.mxu0 0.0
  %654 = vmatprep.subr.mxu0 0.0
  %655 = vmatpush2.msra.mxu0 0.0
  %656 = vmatprep.subr.mxu0 0.0
  %657 = vmatpush2.msra.mxu0 0.0
  %658 = vmatprep.subr.mxu0 0.0
  %659 = vmatpush2.msra.mxu0 0.0
  %660 = vmatprep.subr.mxu0 0.0
  %661 = vmatpush2.msra.mxu0 0.0
  %662 = vmatprep.subr.mxu0 0.0
  %663 = vmatpush2.msra.mxu0 0.0
  %664 = vmatprep.subr.mxu0 0.0
  %665 = vmatpush2.msra.mxu0 0.0
  %666 = vmatprep.subr.mxu0 0.0
  %667 = vmatpush2.msra.mxu0 0.0
  %668 = vmatprep.subr.mxu0 0.0
  %669 = vmatpush2.msra.mxu0 0.0
  %670 = vmatprep.subr.mxu0 0.0
  %671 = vmatpush2.msra.mxu0 0.0
  %672 = vmatprep.mubr.f32.mxu0 0.0
  %673 = vmatmul.mubr.f32.gmra.mxu0 %v466
  %v674 = vpop.f32.mrf.mxu0
  %v675 = vadd.f32 0.0, %v674
  %v676 = vpop.f32.mrf.mxu0
  %v677 = vadd.f32 0.0, %v676
  %678 = vdwg.mxu0
  %679 = vmatprep.subr.mxu0 0.0
  %680 = vmatpush1.msra.mxu0 %v115
  %681 = vmatprep.subr.mxu0 0.0
  %682 = vmatpush1.msra.mxu0 %v112
  %683 = vmatprep.subr.mxu0 0.0
  %684 = vmatpush1.msra.mxu0 %v109
  %685 = vmatprep.subr.mxu0 0.0
  %686 = vmatpush1.msra.mxu0 %v106
  %687 = vmatprep.subr.mxu0 0.0
  %688 = vmatpush1.msra.mxu0 %v103
  %689 = vmatprep.subr.mxu0 0.0
  %690 = vmatpush1.msra.mxu0 %v100
  %691 = vmatprep.subr.mxu0 0.0
  %692 = vmatpush1.msra.mxu0 %v97
  %693 = vmatprep.subr.mxu0 0.0
  %694 = vmatpush1.msra.mxu0 %v94
  %695 = vmatprep.subr.mxu0 0.0
  %696 = vmatpush1.msra.mxu0 %v91
  %697 = vmatprep.subr.mxu0 0.0
  %698 = vmatpush1.msra.mxu0 %v88
  %699 = vmatprep.subr.mxu0 0.0
  %700 = vmatpush1.msra.mxu0 %v85
  %701 = vmatprep.subr.mxu0 0.0
  %702 = vmatpush1.msra.mxu0 %v82
  %703 = vmatprep.subr.mxu0 0.0
  %704 = vmatpush1.msra.mxu0 %v79
  %705 = vmatprep.subr.mxu0 0.0
  %706 = vmatpush1.msra.mxu0 %v76
  %707 = vmatprep.subr.mxu0 0.0
  %708 = vmatpush1.msra.mxu0 %v73
  %709 = vmatprep.subr.mxu0 0.0
  %710 = vmatpush1.msra.mxu0 %v70
  %711 = vmatprep.subr.mxu0 0.0
  %712 = vmatpush2.msra.mxu0 0.0
  %713 = vmatprep.subr.mxu0 0.0
  %714 = vmatpush2.msra.mxu0 0.0
  %715 = vmatprep.subr.mxu0 0.0
  %716 = vmatpush2.msra.mxu0 0.0
  %717 = vmatprep.subr.mxu0 0.0
  %718 = vmatpush2.msra.mxu0 0.0
  %719 = vmatprep.subr.mxu0 0.0
  %720 = vmatpush2.msra.mxu0 0.0
  %721 = vmatprep.subr.mxu0 0.0
  %722 = vmatpush2.msra.mxu0 0.0
  %723 = vmatprep.subr.mxu0 0.0
  %724 = vmatpush2.msra.mxu0 0.0
  %725 = vmatprep.subr.mxu0 0.0
  %726 = vmatpush2.msra.mxu0 0.0
  %727 = vmatprep.subr.mxu0 0.0
  %728 = vmatpush2.msra.mxu0 0.0
  %729 = vmatprep.subr.mxu0 0.0
  %730 = vmatpush2.msra.mxu0 0.0
  %731 = vmatprep.subr.mxu0 0.0
  %732 = vmatpush2.msra.mxu0 0.0
  %733 = vmatprep.subr.mxu0 0.0
  %734 = vmatpush2.msra.mxu0 0.0
  %735 = vmatprep.subr.mxu0 0.0
  %736 = vmatpush2.msra.mxu0 0.0
  %737 = vmatprep.subr.mxu0 0.0
  %738 = vmatpush2.msra.mxu0 0.0
  %739 = vmatprep.subr.mxu0 0.0
  %740 = vmatpush2.msra.mxu0 0.0
  %741 = vmatprep.subr.mxu0 0.0
  %742 = vmatpush2.msra.mxu0 0.0
  %743 = vmatprep.mubr.f32.mxu0 0.0
  %744 = vmatmul.mubr.f32.gmra.mxu0 %v466
  %v745 = vpop.f32.mrf.mxu0
  %v746 = vadd.f32 0.0, %v745
  %v747 = vpop.f32.mrf.mxu0
  %748 = vdwg.mxu0
  %v749 = vadd.f32 %v459, %v534
  %v750 = vadd.f32 %v462, %v675
  %v751 = vadd.f32 %v460, %v536
  %v752 = vadd.f32 %v463, %v677
  %v753 = vmul.f32 %v749, 0.5
  %v754 = vmul.f32 %v750, 0.5
  %v755 = vtanh.pop %v753
  %v756 = vtanh.pop %v754
  %v757 = vadd.f32 %v755, 1.0
  %v758 = vadd.f32 %v756, 1.0
  %v759 = vmul.f32 %v757, 0.5
  %v760 = vmul.f32 %v758, 0.5
  %v761 = vmul.f32 %v751, 0.5
  %v762 = vmul.f32 %v752, 0.5
  %v763 = vtanh.pop %v761
  %v764 = vtanh.pop %v762
  %v765 = vadd.f32 %v763, 1.0
  %v766 = vadd.f32 %v764, 1.0
  %v767 = vmul.f32 %v765, 0.5
  %v768 = vmul.f32 %v766, 0.5
  %v769 = vadd.f32 %v605, %v433
  %v770 = vadd.f32 %v746, %v437
  %v771 = vmul.f32 %v759, %v769
  %v772 = vmul.f32 %v760, %v770
  %v773 = vadd.f32 %v461, %v771
  %v774 = vadd.f32 %v464, %v772
  %v775 = vtanh.pop %v773
  %v776 = vtanh.pop %v774
  %v777 = vsub.f32 %v465, %v775
  %v778 = vsub.f32 %v466, %v776
  %v779 = vmul.f32 %v767, %v777
  %v780 = vmul.f32 %v768, %v778
  %v781 = vadd.f32 %v775, %v779
  %v782 = vadd.f32 %v776, %v780
  %s783 = scalar_lea.vmem %s3, 16
  %784 = vst [vmem:[%s783] sm:$0xff] %v781
  %785 = vst [vmem:[%s783 + $0x8] sm:$0xff] %v782
  %786 = vst [vmem:[#allocation2] sm:$0xff] %v781
  %787 = vst [vmem:[#allocation2 + $0x8] sm:$0xff] %v782
  %s788 = scalar_lea.vmem %s0, 96
  %v789 = vld [vmem:[%s788] sm:$0xff]
  %v790 = vld [vmem:[%s788 + $0x8] sm:$0xff]
  %v791 = vld [vmem:[%s788 + $0x10] sm:$0xff]
  %v792 = vld [vmem:[%s788 + $0x18] sm:$0xff]
  %v793 = vld [vmem:[%s788 + $0x20] sm:$0xff]
  %v794 = vld [vmem:[%s788 + $0x28] sm:$0xff]
  %v795 = vld [vmem:[#allocation2] sm:$0xff]
  %v796 = vld [vmem:[#allocation2 + $0x8] sm:$0xff]
  %797 = vmatprep.subr.mxu0 %v66
  %798 = vmatpush1.msra.mxu0 %v65
  %799 = vmatprep.subr.mxu0 %v63
  %800 = vmatpush1.msra.mxu0 %v62
  %801 = vmatprep.subr.mxu0 %v60
  %802 = vmatpush1.msra.mxu0 %v59
  %803 = vmatprep.subr.mxu0 %v57
  %804 = vmatpush1.msra.mxu0 %v56
  %805 = vmatprep.subr.mxu0 %v54
  %806 = vmatpush1.msra.mxu0 %v53
  %807 = vmatprep.subr.mxu0 %v51
  %808 = vmatpush1.msra.mxu0 %v50
  %809 = vmatprep.subr.mxu0 %v48
  %810 = vmatpush1.msra.mxu0 %v47
  %811 = vmatprep.subr.mxu0 %v45
  %812 = vmatpush1.msra.mxu0 %v44
  %813 = vmatprep.subr.mxu0 %v42
  %814 = vmatpush1.msra.mxu0 %v41
  %815 = vmatprep.subr.mxu0 %v39
  %816 = vmatpush1.msra.mxu0 %v38
  %817 = vmatprep.subr.mxu0 %v36
  %818 = vmatpush1.msra.mxu0 %v35
  %819 = vmatprep.subr.mxu0 %v33
  %820 = vmatpush1.msra.mxu0 %v32
  %821 = vmatprep.subr.mxu0 %v30
  %822 = vmatpush1.msra.mxu0 %v29
  %823 = vmatprep.subr.mxu0 %v27
  %824 = vmatpush1.msra.mxu0 %v26
  %825 = vmatprep.subr.mxu0 %v24
  %826 = vmatpush1.msra.mxu0 %v23
  %827 = vmatprep.subr.mxu0 %v21
  %828 = vmatpush1.msra.mxu0 %v20
  %829 = vmatprep.subr.mxu0 0.0
  %830 = vmatpush2.msra.mxu0 0.0
  %831 = vmatprep.subr.mxu0 0.0
  %832 = vmatpush2.msra.mxu0 0.0
  %833 = vmatprep.subr.mxu0 0.0
  %834 = vmatpush2.msra.mxu0 0.0
  %835 = vmatprep.subr.mxu0 0.0
  %836 = vmatpush2.msra.mxu0 0.0
  %837 = vmatprep.subr.mxu0 0.0
  %838 = vmatpush2.msra.mxu0 0.0
  %839 = vmatprep.subr.mxu0 0.0
  %840 = vmatpush2.msra.mxu0 0.0
  %841 = vmatprep.subr.mxu0 0.0
  %842 = vmatpush2.msra.mxu0 0.0
  %843 = vmatprep.subr.mxu0 0.0
  %844 = vmatpush2.msra.mxu0 0.0
  %845 = vmatprep.subr.mxu0 0.0
  %846 = vmatpush2.msra.mxu0 0.0
  %847 = vmatprep.subr.mxu0 0.0
  %848 = vmatpush2.msra.mxu0 0.0
  %849 = vmatprep.subr.mxu0 0.0
  %850 = vmatpush2.msra.mxu0 0.0
  %851 = vmatprep.subr.mxu0 0.0
  %852 = vmatpush2.msra.mxu0 0.0
  %853 = vmatprep.subr.mxu0 0.0
  %854 = vmatpush2.msra.mxu0 0.0
  %855 = vmatprep.subr.mxu0 0.0
  %856 = vmatpush2.msra.mxu0 0.0
  %857 = vmatprep.subr.mxu0 0.0
  %858 = vmatpush2.msra.mxu0 0.0
  %859 = vmatprep.subr.mxu0 0.0
  %860 = vmatpush2.msra.mxu0 0.0
  %861 = vmatprep.mubr.f32.mxu0 0.0
  %862 = vmatmul.mubr.f32.gmra.mxu0 %v795
  %v863 = vpop.f32.mrf.mxu0
  %v864 = vadd.f32 0.0, %v863
  %v865 = vpop.f32.mrf.mxu0
  %v866 = vadd.f32 0.0, %v865
  %867 = vdwg.mxu0
  %868 = vmatprep.subr.mxu0 0.0
  %869 = vmatpush1.msra.mxu0 %v67
  %870 = vmatprep.subr.mxu0 0.0
  %871 = vmatpush1.msra.mxu0 %v64
  %872 = vmatprep.subr.mxu0 0.0
  %873 = vmatpush1.msra.mxu0 %v61
  %874 = vmatprep.subr.mxu0 0.0
  %875 = vmatpush1.msra.mxu0 %v58
  %876 = vmatprep.subr.mxu0 0.0
  %877 = vmatpush1.msra.mxu0 %v55
  %878 = vmatprep.subr.mxu0 0.0
  %879 = vmatpush1.msra.mxu0 %v52
  %880 = vmatprep.subr.mxu0 0.0
  %881 = vmatpush1.msra.mxu0 %v49
  %882 = vmatprep.subr.mxu0 0.0
  %883 = vmatpush1.msra.mxu0 %v46
  %884 = vmatprep.subr.mxu0 0.0
  %885 = vmatpush1.msra.mxu0 %v43
  %886 = vmatprep.subr.mxu0 0.0
  %887 = vmatpush1.msra.mxu0 %v40
  %888 = vmatprep.subr.mxu0 0.0
  %889 = vmatpush1.msra.mxu0 %v37
  %890 = vmatprep.subr.mxu0 0.0
  %891 = vmatpush1.msra.mxu0 %v34
  %892 = vmatprep.subr.mxu0 0.0
  %893 = vmatpush1.msra.mxu0 %v31
  %894 = vmatprep.subr.mxu0 0.0
  %895 = vmatpush1.msra.mxu0 %v28
  %896 = vmatprep.subr.mxu0 0.0
  %897 = vmatpush1.msra.mxu0 %v25
  %898 = vmatprep.subr.mxu0 0.0
  %899 = vmatpush1.msra.mxu0 %v22
  %900 = vmatprep.subr.mxu0 0.0
  %901 = vmatpush2.msra.mxu0 0.0
  %902 = vmatprep.subr.mxu0 0.0
  %903 = vmatpush2.msra.mxu0 0.0
  %904 = vmatprep.subr.mxu0 0.0
  %905 = vmatpush2.msra.mxu0 0.0
  %906 = vmatprep.subr.mxu0 0.0
  %907 = vmatpush2.msra.mxu0 0.0
  %908 = vmatprep.subr.mxu0 0.0
  %909 = vmatpush2.msra.mxu0 0.0
  %910 = vmatprep.subr.mxu0 0.0
  %911 = vmatpush2.msra.mxu0 0.0
  %912 = vmatprep.subr.mxu0 0.0
  %913 = vmatpush2.msra.mxu0 0.0
  %914 = vmatprep.subr.mxu0 0.0
  %915 = vmatpush2.msra.mxu0 0.0
  %916 = vmatprep.subr.mxu0 0.0
  %917 = vmatpush2.msra.mxu0 0.0
  %918 = vmatprep.subr.mxu0 0.0
  %919 = vmatpush2.msra.mxu0 0.0
  %920 = vmatprep.subr.mxu0 0.0
  %921 = vmatpush2.msra.mxu0 0.0
  %922 = vmatprep.subr.mxu0 0.0
  %923 = vmatpush2.msra.mxu0 0.0
  %924 = vmatprep.subr.mxu0 0.0
  %925 = vmatpush2.msra.mxu0 0.0
  %926 = vmatprep.subr.mxu0 0.0
  %927 = vmatpush2.msra.mxu0 0.0
  %928 = vmatprep.subr.mxu0 0.0
  %929 = vmatpush2.msra.mxu0 0.0
  %930 = vmatprep.subr.mxu0 0.0
  %931 = vmatpush2.msra.mxu0 0.0
  %932 = vmatprep.mubr.f32.mxu0 0.0
  %933 = vmatmul.mubr.f32.gmra.mxu0 %v795
  %v934 = vpop.f32.mrf.mxu0
  %v935 = vadd.f32 0.0, %v934
  %v936 = vpop.f32.mrf.mxu0
  %937 = vdwg.mxu0
  %938 = vmatprep.subr.mxu0 %v114
  %939 = vmatpush1.msra.mxu0 %v113
  %940 = vmatprep.subr.mxu0 %v111
  %941 = vmatpush1.msra.mxu0 %v110
  %942 = vmatprep.subr.mxu0 %v108
  %943 = vmatpush1.msra.mxu0 %v107
  %944 = vmatprep.subr.mxu0 %v105
  %945 = vmatpush1.msra.mxu0 %v104
  %946 = vmatprep.subr.mxu0 %v102
  %947 = vmatpush1.msra.mxu0 %v101
  %948 = vmatprep.subr.mxu0 %v99
  %949 = vmatpush1.msra.mxu0 %v98
  %950 = vmatprep.subr.mxu0 %v96
  %951 = vmatpush1.msra.mxu0 %v95
  %952 = vmatprep.subr.mxu0 %v93
  %953 = vmatpush1.msra.mxu0 %v92
  %954 = vmatprep.subr.mxu0 %v90
  %955 = vmatpush1.msra.mxu0 %v89
  %956 = vmatprep.subr.mxu0 %v87
  %957 = vmatpush1.msra.mxu0 %v86
  %958 = vmatprep.subr.mxu0 %v84
  %959 = vmatpush1.msra.mxu0 %v83
  %960 = vmatprep.subr.mxu0 %v81
  %961 = vmatpush1.msra.mxu0 %v80
  %962 = vmatprep.subr.mxu0 %v78
  %963 = vmatpush1.msra.mxu0 %v77
  %964 = vmatprep.subr.mxu0 %v75
  %965 = vmatpush1.msra.mxu0 %v74
  %966 = vmatprep.subr.mxu0 %v72
  %967 = vmatpush1.msra.mxu0 %v71
  %968 = vmatprep.subr.mxu0 %v69
  %969 = vmatpush1.msra.mxu0 %v68
  %970 = vmatprep.subr.mxu0 0.0
  %971 = vmatpush2.msra.mxu0 0.0
  %972 = vmatprep.subr.mxu0 0.0
  %973 = vmatpush2.msra.mxu0 0.0
  %974 = vmatprep.subr.mxu0 0.0
  %975 = vmatpush2.msra.mxu0 0.0
  %976 = vmatprep.subr.mxu0 0.0
  %977 = vmatpush2.msra.mxu0 0.0
  %978 = vmatprep.subr.mxu0 0.0
  %979 = vmatpush2.msra.mxu0 0.0
  %980 = vmatprep.subr.mxu0 0.0
  %981 = vmatpush2.msra.mxu0 0.0
  %982 = vmatprep.subr.mxu0 0.0
  %983 = vmatpush2.msra.mxu0 0.0
  %984 = vmatprep.subr.mxu0 0.0
  %985 = vmatpush2.msra.mxu0 0.0
  %986 = vmatprep.subr.mxu0 0.0
  %987 = vmatpush2.msra.mxu0 0.0
  %988 = vmatprep.subr.mxu0 0.0
  %989 = vmatpush2.msra.mxu0 0.0
  %990 = vmatprep.subr.mxu0 0.0
  %991 = vmatpush2.msra.mxu0 0.0
  %992 = vmatprep.subr.mxu0 0.0
  %993 = vmatpush2.msra.mxu0 0.0
  %994 = vmatprep.subr.mxu0 0.0
  %995 = vmatpush2.msra.mxu0 0.0
  %996 = vmatprep.subr.mxu0 0.0
  %997 = vmatpush2.msra.mxu0 0.0
  %998 = vmatprep.subr.mxu0 0.0
  %999 = vmatpush2.msra.mxu0 0.0
  %1000 = vmatprep.subr.mxu0 0.0
  %1001 = vmatpush2.msra.mxu0 0.0
  %1002 = vmatprep.mubr.f32.mxu0 0.0
  %1003 = vmatmul.mubr.f32.gmra.mxu0 %v796
  %v1004 = vpop.f32.mrf.mxu0
  %v1005 = vadd.f32 0.0, %v1004
  %v1006 = vpop.f32.mrf.mxu0
  %v1007 = vadd.f32 0.0, %v1006
  %1008 = vdwg.mxu0
  %1009 = vmatprep.subr.mxu0 0.0
  %1010 = vmatpush1.msra.mxu0 %v115
  %1011 = vmatprep.subr.mxu0 0.0
  %1012 = vmatpush1.msra.mxu0 %v112
  %1013 = vmatprep.subr.mxu0 0.0
  %1014 = vmatpush1.msra.mxu0 %v109
  %1015 = vmatprep.subr.mxu0 0.0
  %1016 = vmatpush1.msra.mxu0 %v106
  %1017 = vmatprep.subr.mxu0 0.0
  %1018 = vmatpush1.msra.mxu0 %v103
  %1019 = vmatprep.subr.mxu0 0.0
  %1020 = vmatpush1.msra.mxu0 %v100
  %1021 = vmatprep.subr.mxu0 0.0
  %1022 = vmatpush1.msra.mxu0 %v97
  %1023 = vmatprep.subr.mxu0 0.0
  %1024 = vmatpush1.msra.mxu0 %v94
  %1025 = vmatprep.subr.mxu0 0.0
  %1026 = vmatpush1.msra.mxu0 %v91
  %1027 = vmatprep.subr.mxu0 0.0
  %1028 = vmatpush1.msra.mxu0 %v88
  %1029 = vmatprep.subr.mxu0 0.0
  %1030 = vmatpush1.msra.mxu0 %v85
  %1031 = vmatprep.subr.mxu0 0.0
  %1032 = vmatpush1.msra.mxu0 %v82
  %1033 = vmatprep.subr.mxu0 0.0
  %1034 = vmatpush1.msra.mxu0 %v79
  %1035 = vmatprep.subr.mxu0 0.0
  %1036 = vmatpush1.msra.mxu0 %v76
  %1037 = vmatprep.subr.mxu0 0.0
  %1038 = vmatpush1.msra.mxu0 %v73
  %1039 = vmatprep.subr.mxu0 0.0
  %1040 = vmatpush1.msra.mxu0 %v70
  %1041 = vmatprep.subr.mxu0 0.0
  %1042 = vmatpush2.msra.mxu0 0.0
  %1043 = vmatprep.subr.mxu0 0.0
  %1044 = vmatpush2.msra.mxu0 0.0
  %1045 = vmatprep.subr.mxu0 0.0
  %1046 = vmatpush2.msra.mxu0 0.0
  %1047 = vmatprep.subr.mxu0 0.0
  %1048 = vmatpush2.msra.mxu0 0.0
  %1049 = vmatprep.subr.mxu0 0.0
  %1050 = vmatpush2.msra.mxu0 0.0
  %1051 = vmatprep.subr.mxu0 0.0
  %1052 = vmatpush2.msra.mxu0 0.0
  %1053 = vmatprep.subr.mxu0 0.0
  %1054 = vmatpush2.msra.mxu0 0.0
  %1055 = vmatprep.subr.mxu0 0.0
  %1056 = vmatpush2.msra.mxu0 0.0
  %1057 = vmatprep.subr.mxu0 0.0
  %1058 = vmatpush2.msra.mxu0 0.0
  %1059 = vmatprep.subr.mxu0 0.0
  %1060 = vmatpush2.msra.mxu0 0.0
  %1061 = vmatprep.subr.mxu0 0.0
  %1062 = vmatpush2.msra.mxu0 0.0
  %1063 = vmatprep.subr.mxu0 0.0
  %1064 = vmatpush2.msra.mxu0 0.0
  %1065 = vmatprep.subr.mxu0 0.0
  %1066 = vmatpush2.msra.mxu0 0.0
  %1067 = vmatprep.subr.mxu0 0.0
  %1068 = vmatpush2.msra.mxu0 0.0
  %1069 = vmatprep.subr.mxu0 0.0
  %1070 = vmatpush2.msra.mxu0 0.0
  %1071 = vmatprep.subr.mxu0 0.0
  %1072 = vmatpush2.msra.mxu0 0.0
  %1073 = vmatprep.mubr.f32.mxu0 0.0
  %1074 = vmatmul.mubr.f32.gmra.mxu0 %v796
  %v1075 = vpop.f32.mrf.mxu0
  %v1076 = vadd.f32 0.0, %v1075
  %v1077 = vpop.f32.mrf.mxu0
  %1078 = vdwg.mxu0
  %v1079 = vadd.f32 %v789, %v864
  %v1080 = vadd.f32 %v792, %v1005
  %v1081 = vadd.f32 %v790, %v866
  %v1082 = vadd.f32 %v793, %v1007
  %v1083 = vmul.f32 %v1079, 0.5
  %v1084 = vmul.f32 %v1080, 0.5
  %v1085 = vtanh.pop %v1083
  %v1086 = vtanh.pop %v1084
  %v1087 = vadd.f32 %v1085, 1.0
  %v1088 = vadd.f32 %v1086, 1.0
  %v1089 = vmul.f32 %v1087, 0.5
  %v1090 = vmul.f32 %v1088, 0.5
  %v1091 = vmul.f32 %v1081, 0.5
  %v1092 = vmul.f32 %v1082, 0.5
  %v1093 = vtanh.pop %v1091
  %v1094 = vtanh.pop %v1092
  %v1095 = vadd.f32 %v1093, 1.0
  %v1096 = vadd.f32 %v1094, 1.0
  %v1097 = vmul.f32 %v1095, 0.5
  %v1098 = vmul.f32 %v1096, 0.5
  %v1099 = vadd.f32 %v935, %v433
  %v1100 = vadd.f32 %v1076, %v437
  %v1101 = vmul.f32 %v1089, %v1099
  %v1102 = vmul.f32 %v1090, %v1100
  %v1103 = vadd.f32 %v791, %v1101
  %v1104 = vadd.f32 %v794, %v1102
  %v1105 = vtanh.pop %v1103
  %v1106 = vtanh.pop %v1104
  %v1107 = vsub.f32 %v795, %v1105
  %v1108 = vsub.f32 %v796, %v1106
  %v1109 = vmul.f32 %v1097, %v1107
  %v1110 = vmul.f32 %v1098, %v1108
  %v1111 = vadd.f32 %v1105, %v1109
  %v1112 = vadd.f32 %v1106, %v1110
  %s1113 = scalar_lea.vmem %s3, 32
  %1114 = vst [vmem:[%s1113] sm:$0xff] %v1111
  %1115 = vst [vmem:[%s1113 + $0x8] sm:$0xff] %v1112
  %1116 = vst [vmem:[#allocation2] sm:$0xff] %v1111
  %1117 = vst [vmem:[#allocation2 + $0x8] sm:$0xff] %v1112
  %s1118 = scalar_lea.vmem %s0, 144
  %v1119 = vld [vmem:[%s1118] sm:$0xff]
  %v1120 = vld [vmem:[%s1118 + $0x8] sm:$0xff]
  %v1121 = vld [vmem:[%s1118 + $0x10] sm:$0xff]
  %v1122 = vld [vmem:[%s1118 + $0x18] sm:$0xff]
  %v1123 = vld [vmem:[%s1118 + $0x20] sm:$0xff]
  %v1124 = vld [vmem:[%s1118 + $0x28] sm:$0xff]
  %v1125 = vld [vmem:[#allocation2] sm:$0xff]
  %v1126 = vld [vmem:[#allocation2 + $0x8] sm:$0xff]
  %1127 = vmatprep.subr.mxu0 %v66
  %1128 = vmatpush1.msra.mxu0 %v65
  %1129 = vmatprep.subr.mxu0 %v63
  %1130 = vmatpush1.msra.mxu0 %v62
  %1131 = vmatprep.subr.mxu0 %v60
  %1132 = vmatpush1.msra.mxu0 %v59
  %1133 = vmatprep.subr.mxu0 %v57
  %1134 = vmatpush1.msra.mxu0 %v56
  %1135 = vmatprep.subr.mxu0 %v54
  %1136 = vmatpush1.msra.mxu0 %v53
  %1137 = vmatprep.subr.mxu0 %v51
  %1138 = vmatpush1.msra.mxu0 %v50
  %1139 = vmatprep.subr.mxu0 %v48
  %1140 = vmatpush1.msra.mxu0 %v47
  %1141 = vmatprep.subr.mxu0 %v45
  %1142 = vmatpush1.msra.mxu0 %v44
  %1143 = vmatprep.subr.mxu0 %v42
  %1144 = vmatpush1.msra.mxu0 %v41
  %1145 = vmatprep.subr.mxu0 %v39
  %1146 = vmatpush1.msra.mxu0 %v38
  %1147 = vmatprep.subr.mxu0 %v36
  %1148 = vmatpush1.msra.mxu0 %v35
  %1149 = vmatprep.subr.mxu0 %v33
  %1150 = vmatpush1.msra.mxu0 %v32
  %1151 = vmatprep.subr.mxu0 %v30
  %1152 = vmatpush1.msra.mxu0 %v29
  %1153 = vmatprep.subr.mxu0 %v27
  %1154 = vmatpush1.msra.mxu0 %v26
  %1155 = vmatprep.subr.mxu0 %v24
  %1156 = vmatpush1.msra.mxu0 %v23
  %1157 = vmatprep.subr.mxu0 %v21
  %1158 = vmatpush1.msra.mxu0 %v20
  %1159 = vmatprep.subr.mxu0 0.0
  %1160 = vmatpush2.msra.mxu0 0.0
  %1161 = vmatprep.subr.mxu0 0.0
  %1162 = vmatpush2.msra.mxu0 0.0
  %1163 = vmatprep.subr.mxu0 0.0
  %1164 = vmatpush2.msra.mxu0 0.0
  %1165 = vmatprep.subr.mxu0 0.0
  %1166 = vmatpush2.msra.mxu0 0.0
  %1167 = vmatprep.subr.mxu0 0.0
  %1168 = vmatpush2.msra.mxu0 0.0
  %1169 = vmatprep.subr.mxu0 0.0
  %1170 = vmatpush2.msra.mxu0 0.0
  %1171 = vmatprep.subr.mxu0 0.0
  %1172 = vmatpush2.msra.mxu0 0.0
  %1173 = vmatprep.subr.mxu0 0.0
  %1174 = vmatpush2.msra.mxu0 0.0
  %1175 = vmatprep.subr.mxu0 0.0
  %1176 = vmatpush2.msra.mxu0 0.0
  %1177 = vmatprep.subr.mxu0 0.0
  %1178 = vmatpush2.msra.mxu0 0.0
  %1179 = vmatprep.subr.mxu0 0.0
  %1180 = vmatpush2.msra.mxu0 0.0
  %1181 = vmatprep.subr.mxu0 0.0
  %1182 = vmatpush2.msra.mxu0 0.0
  %1183 = vmatprep.subr.mxu0 0.0
  %1184 = vmatpush2.msra.mxu0 0.0
  %1185 = vmatprep.subr.mxu0 0.0
  %1186 = vmatpush2.msra.mxu0 0.0
  %1187 = vmatprep.subr.mxu0 0.0
  %1188 = vmatpush2.msra.mxu0 0.0
  %1189 = vmatprep.subr.mxu0 0.0
  %1190 = vmatpush2.msra.mxu0 0.0
  %1191 = vmatprep.mubr.f32.mxu0 0.0
  %1192 = vmatmul.mubr.f32.gmra.mxu0 %v1125
  %v1193 = vpop.f32.mrf.mxu0
  %v1194 = vadd.f32 0.0, %v1193
  %v1195 = vpop.f32.mrf.mxu0
  %v1196 = vadd.f32 0.0, %v1195
  %1197 = vdwg.mxu0
  %1198 = vmatprep.subr.mxu0 0.0
  %1199 = vmatpush1.msra.mxu0 %v67
  %1200 = vmatprep.subr.mxu0 0.0
  %1201 = vmatpush1.msra.mxu0 %v64
  %1202 = vmatprep.subr.mxu0 0.0
  %1203 = vmatpush1.msra.mxu0 %v61
  %1204 = vmatprep.subr.mxu0 0.0
  %1205 = vmatpush1.msra.mxu0 %v58
  %1206 = vmatprep.subr.mxu0 0.0
  %1207 = vmatpush1.msra.mxu0 %v55
  %1208 = vmatprep.subr.mxu0 0.0
  %1209 = vmatpush1.msra.mxu0 %v52
  %1210 = vmatprep.subr.mxu0 0.0
  %1211 = vmatpush1.msra.mxu0 %v49
  %1212 = vmatprep.subr.mxu0 0.0
  %1213 = vmatpush1.msra.mxu0 %v46
  %1214 = vmatprep.subr.mxu0 0.0
  %1215 = vmatpush1.msra.mxu0 %v43
  %1216 = vmatprep.subr.mxu0 0.0
  %1217 = vmatpush1.msra.mxu0 %v40
  %1218 = vmatprep.subr.mxu0 0.0
  %1219 = vmatpush1.msra.mxu0 %v37
  %1220 = vmatprep.subr.mxu0 0.0
  %1221 = vmatpush1.msra.mxu0 %v34
  %1222 = vmatprep.subr.mxu0 0.0
  %1223 = vmatpush1.msra.mxu0 %v31
  %1224 = vmatprep.subr.mxu0 0.0
  %1225 = vmatpush1.msra.mxu0 %v28
  %1226 = vmatprep.subr.mxu0 0.0
  %1227 = vmatpush1.msra.mxu0 %v25
  %1228 = vmatprep.subr.mxu0 0.0
  %1229 = vmatpush1.msra.mxu0 %v22
  %1230 = vmatprep.subr.mxu0 0.0
  %1231 = vmatpush2.msra.mxu0 0.0
  %1232 = vmatprep.subr.mxu0 0.0
  %1233 = vmatpush2.msra.mxu0 0.0
  %1234 = vmatprep.subr.mxu0 0.0
  %1235 = vmatpush2.msra.mxu0 0.0
  %1236 = vmatprep.subr.mxu0 0.0
  %1237 = vmatpush2.msra.mxu0 0.0
  %1238 = vmatprep.subr.mxu0 0.0
  %1239 = vmatpush2.msra.mxu0 0.0
  %1240 = vmatprep.subr.mxu0 0.0
  %1241 = vmatpush2.msra.mxu0 0.0
  %1242 = vmatprep.subr.mxu0 0.0
  %1243 = vmatpush2.msra.mxu0 0.0
  %1244 = vmatprep.subr.mxu0 0.0
  %1245 = vmatpush2.msra.mxu0 0.0
  %1246 = vmatprep.subr.mxu0 0.0
  %1247 = vmatpush2.msra.mxu0 0.0
  %1248 = vmatprep.subr.mxu0 0.0
  %1249 = vmatpush2.msra.mxu0 0.0
  %1250 = vmatprep.subr.mxu0 0.0
  %1251 = vmatpush2.msra.mxu0 0.0
  %1252 = vmatprep.subr.mxu0 0.0
  %1253 = vmatpush2.msra.mxu0 0.0
  %1254 = vmatprep.subr.mxu0 0.0
  %1255 = vmatpush2.msra.mxu0 0.0
  %1256 = vmatprep.subr.mxu0 0.0
  %1257 = vmatpush2.msra.mxu0 0.0
  %1258 = vmatprep.subr.mxu0 0.0
  %1259 = vmatpush2.msra.mxu0 0.0
  %1260 = vmatprep.subr.mxu0 0.0
  %1261 = vmatpush2.msra.mxu0 0.0
  %1262 = vmatprep.mubr.f32.mxu0 0.0
  %1263 = vmatmul.mubr.f32.gmra.mxu0 %v1125
  %v1264 = vpop.f32.mrf.mxu0
  %v1265 = vadd.f32 0.0, %v1264
  %v1266 = vpop.f32.mrf.mxu0
  %1267 = vdwg.mxu0
  %1268 = vmatprep.subr.mxu0 %v114
  %1269 = vmatpush1.msra.mxu0 %v113
  %1270 = vmatprep.subr.mxu0 %v111
  %1271 = vmatpush1.msra.mxu0 %v110
  %1272 = vmatprep.subr.mxu0 %v108
  %1273 = vmatpush1.msra.mxu0 %v107
  %1274 = vmatprep.subr.mxu0 %v105
  %1275 = vmatpush1.msra.mxu0 %v104
  %1276 = vmatprep.subr.mxu0 %v102
  %1277 = vmatpush1.msra.mxu0 %v101
  %1278 = vmatprep.subr.mxu0 %v99
  %1279 = vmatpush1.msra.mxu0 %v98
  %1280 = vmatprep.subr.mxu0 %v96
  %1281 = vmatpush1.msra.mxu0 %v95
  %1282 = vmatprep.subr.mxu0 %v93
  %1283 = vmatpush1.msra.mxu0 %v92
  %1284 = vmatprep.subr.mxu0 %v90
  %1285 = vmatpush1.msra.mxu0 %v89
  %1286 = vmatprep.subr.mxu0 %v87
  %1287 = vmatpush1.msra.mxu0 %v86
  %1288 = vmatprep.subr.mxu0 %v84
  %1289 = vmatpush1.msra.mxu0 %v83
  %1290 = vmatprep.subr.mxu0 %v81
  %1291 = vmatpush1.msra.mxu0 %v80
  %1292 = vmatprep.subr.mxu0 %v78
  %1293 = vmatpush1.msra.mxu0 %v77
  %1294 = vmatprep.subr.mxu0 %v75
  %1295 = vmatpush1.msra.mxu0 %v74
  %1296 = vmatprep.subr.mxu0 %v72
  %1297 = vmatpush1.msra.mxu0 %v71
  %1298 = vmatprep.subr.mxu0 %v69
  %1299 = vmatpush1.msra.mxu0 %v68
  %1300 = vmatprep.subr.mxu0 0.0
  %1301 = vmatpush2.msra.mxu0 0.0
  %1302 = vmatprep.subr.mxu0 0.0
  %1303 = vmatpush2.msra.mxu0 0.0
  %1304 = vmatprep.subr.mxu0 0.0
  %1305 = vmatpush2.msra.mxu0 0.0
  %1306 = vmatprep.subr.mxu0 0.0
  %1307 = vmatpush2.msra.mxu0 0.0
  %1308 = vmatprep.subr.mxu0 0.0
  %1309 = vmatpush2.msra.mxu0 0.0
  %1310 = vmatprep.subr.mxu0 0.0
  %1311 = vmatpush2.msra.mxu0 0.0
  %1312 = vmatprep.subr.mxu0 0.0
  %1313 = vmatpush2.msra.mxu0 0.0
  %1314 = vmatprep.subr.mxu0 0.0
  %1315 = vmatpush2.msra.mxu0 0.0
  %1316 = vmatprep.subr.mxu0 0.0
  %1317 = vmatpush2.msra.mxu0 0.0
  %1318 = vmatprep.subr.mxu0 0.0
  %1319 = vmatpush2.msra.mxu0 0.0
  %1320 = vmatprep.subr.mxu0 0.0
  %1321 = vmatpush2.msra.mxu0 0.0
  %1322 = vmatprep.subr.mxu0 0.0
  %1323 = vmatpush2.msra.mxu0 0.0
  %1324 = vmatprep.subr.mxu0 0.0
  %1325 = vmatpush2.msra.mxu0 0.0
  %1326 = vmatprep.subr.mxu0 0.0
  %1327 = vmatpush2.msra.mxu0 0.0
  %1328 = vmatprep.subr.mxu0 0.0
  %1329 = vmatpush2.msra.mxu0 0.0
  %1330 = vmatprep.subr.mxu0 0.0
  %1331 = vmatpush2.msra.mxu0 0.0
  %1332 = vmatprep.mubr.f32.mxu0 0.0
  %1333 = vmatmul.mubr.f32.gmra.mxu0 %v1126
  %v1334 = vpop.f32.mrf.mxu0
  %v1335 = vadd.f32 0.0, %v1334
  %v1336 = vpop.f32.mrf.mxu0
  %v1337 = vadd.f32 0.0, %v1336
  %1338 = vdwg.mxu0
  %1339 = vmatprep.subr.mxu0 0.0
  %1340 = vmatpush1.msra.mxu0 %v115
  %1341 = vmatprep.subr.mxu0 0.0
  %1342 = vmatpush1.msra.mxu0 %v112
  %1343 = vmatprep.subr.mxu0 0.0
  %1344 = vmatpush1.msra.mxu0 %v109
  %1345 = vmatprep.subr.mxu0 0.0
  %1346 = vmatpush1.msra.mxu0 %v106
  %1347 = vmatprep.subr.mxu0 0.0
  %1348 = vmatpush1.msra.mxu0 %v103
  %1349 = vmatprep.subr.mxu0 0.0
  %1350 = vmatpush1.msra.mxu0 %v100
  %1351 = vmatprep.subr.mxu0 0.0
  %1352 = vmatpush1.msra.mxu0 %v97
  %1353 = vmatprep.subr.mxu0 0.0
  %1354 = vmatpush1.msra.mxu0 %v94
  %1355 = vmatprep.subr.mxu0 0.0
  %1356 = vmatpush1.msra.mxu0 %v91
  %1357 = vmatprep.subr.mxu0 0.0
  %1358 = vmatpush1.msra.mxu0 %v88
  %1359 = vmatprep.subr.mxu0 0.0
  %1360 = vmatpush1.msra.mxu0 %v85
  %1361 = vmatprep.subr.mxu0 0.0
  %1362 = vmatpush1.msra.mxu0 %v82
  %1363 = vmatprep.subr.mxu0 0.0
  %1364 = vmatpush1.msra.mxu0 %v79
  %1365 = vmatprep.subr.mxu0 0.0
  %1366 = vmatpush1.msra.mxu0 %v76
  %1367 = vmatprep.subr.mxu0 0.0
  %1368 = vmatpush1.msra.mxu0 %v73
  %1369 = vmatprep.subr.mxu0 0.0
  %1370 = vmatpush1.msra.mxu0 %v70
  %1371 = vmatprep.subr.mxu0 0.0
  %1372 = vmatpush2.msra.mxu0 0.0
  %1373 = vmatprep.subr.mxu0 0.0
  %1374 = vmatpush2.msra.mxu0 0.0
  %1375 = vmatprep.subr.mxu0 0.0
  %1376 = vmatpush2.msra.mxu0 0.0
  %1377 = vmatprep.subr.mxu0 0.0
  %1378 = vmatpush2.msra.mxu0 0.0
  %1379 = vmatprep.subr.mxu0 0.0
  %1380 = vmatpush2.msra.mxu0 0.0
  %1381 = vmatprep.subr.mxu0 0.0
  %1382 = vmatpush2.msra.mxu0 0.0
  %1383 = vmatprep.subr.mxu0 0.0
  %1384 = vmatpush2.msra.mxu0 0.0
  %1385 = vmatprep.subr.mxu0 0.0
  %1386 = vmatpush2.msra.mxu0 0.0
  %1387 = vmatprep.subr.mxu0 0.0
  %1388 = vmatpush2.msra.mxu0 0.0
  %1389 = vmatprep.subr.mxu0 0.0
  %1390 = vmatpush2.msra.mxu0 0.0
  %1391 = vmatprep.subr.mxu0 0.0
  %1392 = vmatpush2.msra.mxu0 0.0
  %1393 = vmatprep.subr.mxu0 0.0
  %1394 = vmatpush2.msra.mxu0 0.0
  %1395 = vmatprep.subr.mxu0 0.0
  %1396 = vmatpush2.msra.mxu0 0.0
  %1397 = vmatprep.subr.mxu0 0.0
  %1398 = vmatpush2.msra.mxu0 0.0
  %1399 = vmatprep.subr.mxu0 0.0
  %1400 = vmatpush2.msra.mxu0 0.0
  %1401 = vmatprep.subr.mxu0 0.0
  %1402 = vmatpush2.msra.mxu0 0.0
  %1403 = vmatprep.mubr.f32.mxu0 0.0
  %1404 = vmatmul.mubr.f32.gmra.mxu0 %v1126
  %v1405 = vpop.f32.mrf.mxu0
  %v1406 = vadd.f32 0.0, %v1405
  %v1407 = vpop.f32.mrf.mxu0
  %1408 = vdwg.mxu0
  %v1409 = vadd.f32 %v1119, %v1194
  %v1410 = vadd.f32 %v1122, %v1335
  %v1411 = vadd.f32 %v1120, %v1196
  %v1412 = vadd.f32 %v1123, %v1337
  %v1413 = vmul.f32 %v1409, 0.5
  %v1414 = vmul.f32 %v1410, 0.5
  %v1415 = vtanh.pop %v1413
  %v1416 = vtanh.pop %v1414
  %v1417 = vadd.f32 %v1415, 1.0
  %v1418 = vadd.f32 %v1416, 1.0
  %v1419 = vmul.f32 %v1417, 0.5
  %v1420 = vmul.f32 %v1418, 0.5
  %v1421 = vmul.f32 %v1411, 0.5
  %v1422 = vmul.f32 %v1412, 0.5
  %v1423 = vtanh.pop %v1421
  %v1424 = vtanh.pop %v1422
  %v1425 = vadd.f32 %v1423, 1.0
  %v1426 = vadd.f32 %v1424, 1.0
  %v1427 = vmul.f32 %v1425, 0.5
  %v1428 = vmul.f32 %v1426, 0.5
  %v1429 = vadd.f32 %v1265, %v433
  %v1430 = vadd.f32 %v1406, %v437
  %v1431 = vmul.f32 %v1419, %v1429
  %v1432 = vmul.f32 %v1420, %v1430
  %v1433 = vadd.f32 %v1121, %v1431
  %v1434 = vadd.f32 %v1124, %v1432
  %v1435 = vtanh.pop %v1433
  %v1436 = vtanh.pop %v1434
  %v1437 = vsub.f32 %v1125, %v1435
  %v1438 = vsub.f32 %v1126, %v1436
  %v1439 = vmul.f32 %v1427, %v1437
  %v1440 = vmul.f32 %v1428, %v1438
  %v1441 = vadd.f32 %v1435, %v1439
  %v1442 = vadd.f32 %v1436, %v1440
  %s1443 = scalar_lea.vmem %s3, 48
  %1444 = vst [vmem:[%s1443] sm:$0xff] %v1441
  %1445 = vst [vmem:[%s1443 + $0x8] sm:$0xff] %v1442
  %1446 = vst [vmem:[#allocation2] sm:$0xff] %v1441
  %1447 = vst [vmem:[#allocation2 + $0x8] sm:$0xff] %v1442
  %s1448 = scalar_lea.vmem %s0, 192
  %v1449 = vld [vmem:[%s1448] sm:$0xff]
  %v1450 = vld [vmem:[%s1448 + $0x8] sm:$0xff]
  %v1451 = vld [vmem:[%s1448 + $0x10] sm:$0xff]
  %v1452 = vld [vmem:[%s1448 + $0x18] sm:$0xff]
  %v1453 = vld [vmem:[%s1448 + $0x20] sm:$0xff]
  %v1454 = vld [vmem:[%s1448 + $0x28] sm:$0xff]
  %v1455 = vld [vmem:[#allocation2] sm:$0xff]
  %v1456 = vld [vmem:[#allocation2 + $0x8] sm:$0xff]
  %1457 = vmatprep.subr.mxu0 %v66
  %1458 = vmatpush1.msra.mxu0 %v65
  %1459 = vmatprep.subr.mxu0 %v63
  %1460 = vmatpush1.msra.mxu0 %v62
  %1461 = vmatprep.subr.mxu0 %v60
  %1462 = vmatpush1.msra.mxu0 %v59
  %1463 = vmatprep.subr.mxu0 %v57
  %1464 = vmatpush1.msra.mxu0 %v56
  %1465 = vmatprep.subr.mxu0 %v54
  %1466 = vmatpush1.msra.mxu0 %v53
  %1467 = vmatprep.subr.mxu0 %v51
  %1468 = vmatpush1.msra.mxu0 %v50
  %1469 = vmatprep.subr.mxu0 %v48
  %1470 = vmatpush1.msra.mxu0 %v47
  %1471 = vmatprep.subr.mxu0 %v45
  %1472 = vmatpush1.msra.mxu0 %v44
  %1473 = vmatprep.subr.mxu0 %v42
  %1474 = vmatpush1.msra.mxu0 %v41
  %1475 = vmatprep.subr.mxu0 %v39
  %1476 = vmatpush1.msra.mxu0 %v38
  %1477 = vmatprep.subr.mxu0 %v36
  %1478 = vmatpush1.msra.mxu0 %v35
  %1479 = vmatprep.subr.mxu0 %v33
  %1480 = vmatpush1.msra.mxu0 %v32
  %1481 = vmatprep.subr.mxu0 %v30
  %1482 = vmatpush1.msra.mxu0 %v29
  %1483 = vmatprep.subr.mxu0 %v27
  %1484 = vmatpush1.msra.mxu0 %v26
  %1485 = vmatprep.subr.mxu0 %v24
  %1486 = vmatpush1.msra.mxu0 %v23
  %1487 = vmatprep.subr.mxu0 %v21
  %1488 = vmatpush1.msra.mxu0 %v20
  %1489 = vmatprep.subr.mxu0 0.0
  %1490 = vmatpush2.msra.mxu0 0.0
  %1491 = vmatprep.subr.mxu0 0.0
  %1492 = vmatpush2.msra.mxu0 0.0
  %1493 = vmatprep.subr.mxu0 0.0
  %1494 = vmatpush2.msra.mxu0 0.0
  %1495 = vmatprep.subr.mxu0 0.0
  %1496 = vmatpush2.msra.mxu0 0.0
  %1497 = vmatprep.subr.mxu0 0.0
  %1498 = vmatpush2.msra.mxu0 0.0
  %1499 = vmatprep.subr.mxu0 0.0
  %1500 = vmatpush2.msra.mxu0 0.0
  %1501 = vmatprep.subr.mxu0 0.0
  %1502 = vmatpush2.msra.mxu0 0.0
  %1503 = vmatprep.subr.mxu0 0.0
  %1504 = vmatpush2.msra.mxu0 0.0
  %1505 = vmatprep.subr.mxu0 0.0
  %1506 = vmatpush2.msra.mxu0 0.0
  %1507 = vmatprep.subr.mxu0 0.0
  %1508 = vmatpush2.msra.mxu0 0.0
  %1509 = vmatprep.subr.mxu0 0.0
  %1510 = vmatpush2.msra.mxu0 0.0
  %1511 = vmatprep.subr.mxu0 0.0
  %1512 = vmatpush2.msra.mxu0 0.0
  %1513 = vmatprep.subr.mxu0 0.0
  %1514 = vmatpush2.msra.mxu0 0.0
  %1515 = vmatprep.subr.mxu0 0.0
  %1516 = vmatpush2.msra.mxu0 0.0
  %1517 = vmatprep.subr.mxu0 0.0
  %1518 = vmatpush2.msra.mxu0 0.0
  %1519 = vmatprep.subr.mxu0 0.0
  %1520 = vmatpush2.msra.mxu0 0.0
  %1521 = vmatprep.mubr.f32.mxu0 0.0
  %1522 = vmatmul.mubr.f32.gmra.mxu0 %v1455
  %v1523 = vpop.f32.mrf.mxu0
  %v1524 = vadd.f32 0.0, %v1523
  %v1525 = vpop.f32.mrf.mxu0
  %v1526 = vadd.f32 0.0, %v1525
  %1527 = vdwg.mxu0
  %1528 = vmatprep.subr.mxu0 0.0
  %1529 = vmatpush1.msra.mxu0 %v67
  %1530 = vmatprep.subr.mxu0 0.0
  %1531 = vmatpush1.msra.mxu0 %v64
  %1532 = vmatprep.subr.mxu0 0.0
  %1533 = vmatpush1.msra.mxu0 %v61
  %1534 = vmatprep.subr.mxu0 0.0
  %1535 = vmatpush1.msra.mxu0 %v58
  %1536 = vmatprep.subr.mxu0 0.0
  %1537 = vmatpush1.msra.mxu0 %v55
  %1538 = vmatprep.subr.mxu0 0.0
  %1539 = vmatpush1.msra.mxu0 %v52
  %1540 = vmatprep.subr.mxu0 0.0
  %1541 = vmatpush1.msra.mxu0 %v49
  %1542 = vmatprep.subr.mxu0 0.0
  %1543 = vmatpush1.msra.mxu0 %v46
  %1544 = vmatprep.subr.mxu0 0.0
  %1545 = vmatpush1.msra.mxu0 %v43
  %1546 = vmatprep.subr.mxu0 0.0
  %1547 = vmatpush1.msra.mxu0 %v40
  %1548 = vmatprep.subr.mxu0 0.0
  %1549 = vmatpush1.msra.mxu0 %v37
  %1550 = vmatprep.subr.mxu0 0.0
  %1551 = vmatpush1.msra.mxu0 %v34
  %1552 = vmatprep.subr.mxu0 0.0
  %1553 = vmatpush1.msra.mxu0 %v31
  %1554 = vmatprep.subr.mxu0 0.0
  %1555 = vmatpush1.msra.mxu0 %v28
  %1556 = vmatprep.subr.mxu0 0.0
  %1557 = vmatpush1.msra.mxu0 %v25
  %1558 = vmatprep.subr.mxu0 0.0
  %1559 = vmatpush1.msra.mxu0 %v22
  %1560 = vmatprep.subr.mxu0 0.0
  %1561 = vmatpush2.msra.mxu0 0.0
  %1562 = vmatprep.subr.mxu0 0.0
  %1563 = vmatpush2.msra.mxu0 0.0
  %1564 = vmatprep.subr.mxu0 0.0
  %1565 = vmatpush2.msra.mxu0 0.0
  %1566 = vmatprep.subr.mxu0 0.0
  %1567 = vmatpush2.msra.mxu0 0.0
  %1568 = vmatprep.subr.mxu0 0.0
  %1569 = vmatpush2.msra.mxu0 0.0
  %1570 = vmatprep.subr.mxu0 0.0
  %1571 = vmatpush2.msra.mxu0 0.0
  %1572 = vmatprep.subr.mxu0 0.0
  %1573 = vmatpush2.msra.mxu0 0.0
  %1574 = vmatprep.subr.mxu0 0.0
  %1575 = vmatpush2.msra.mxu0 0.0
  %1576 = vmatprep.subr.mxu0 0.0
  %1577 = vmatpush2.msra.mxu0 0.0
  %1578 = vmatprep.subr.mxu0 0.0
  %1579 = vmatpush2.msra.mxu0 0.0
  %1580 = vmatprep.subr.mxu0 0.0
  %1581 = vmatpush2.msra.mxu0 0.0
  %1582 = vmatprep.subr.mxu0 0.0
  %1583 = vmatpush2.msra.mxu0 0.0
  %1584 = vmatprep.subr.mxu0 0.0
  %1585 = vmatpush2.msra.mxu0 0.0
  %1586 = vmatprep.subr.mxu0 0.0
  %1587 = vmatpush2.msra.mxu0 0.0
  %1588 = vmatprep.subr.mxu0 0.0
  %1589 = vmatpush2.msra.mxu0 0.0
  %1590 = vmatprep.subr.mxu0 0.0
  %1591 = vmatpush2.msra.mxu0 0.0
  %1592 = vmatprep.mubr.f32.mxu0 0.0
  %1593 = vmatmul.mubr.f32.gmra.mxu0 %v1455
  %v1594 = vpop.f32.mrf.mxu0
  %v1595 = vadd.f32 0.0, %v1594
  %v1596 = vpop.f32.mrf.mxu0
  %1597 = vdwg.mxu0
  %1598 = vmatprep.subr.mxu0 %v114
  %1599 = vmatpush1.msra.mxu0 %v113
  %1600 = vmatprep.subr.mxu0 %v111
  %1601 = vmatpush1.msra.mxu0 %v110
  %1602 = vmatprep.subr.mxu0 %v108
  %1603 = vmatpush1.msra.mxu0 %v107
  %1604 = vmatprep.subr.mxu0 %v105
  %1605 = vmatpush1.msra.mxu0 %v104
  %1606 = vmatprep.subr.mxu0 %v102
  %1607 = vmatpush1.msra.mxu0 %v101
  %1608 = vmatprep.subr.mxu0 %v99
  %1609 = vmatpush1.msra.mxu0 %v98
  %1610 = vmatprep.subr.mxu0 %v96
  %1611 = vmatpush1.msra.mxu0 %v95
  %1612 = vmatprep.subr.mxu0 %v93
  %1613 = vmatpush1.msra.mxu0 %v92
  %1614 = vmatprep.subr.mxu0 %v90
  %1615 = vmatpush1.msra.mxu0 %v89
  %1616 = vmatprep.subr.mxu0 %v87
  %1617 = vmatpush1.msra.mxu0 %v86
  %1618 = vmatprep.subr.mxu0 %v84
  %1619 = vmatpush1.msra.mxu0 %v83
  %1620 = vmatprep.subr.mxu0 %v81
  %1621 = vmatpush1.msra.mxu0 %v80
  %1622 = vmatprep.subr.mxu0 %v78
  %1623 = vmatpush1.msra.mxu0 %v77
  %1624 = vmatprep.subr.mxu0 %v75
  %1625 = vmatpush1.msra.mxu0 %v74
  %1626 = vmatprep.subr.mxu0 %v72
  %1627 = vmatpush1.msra.mxu0 %v71
  %1628 = vmatprep.subr.mxu0 %v69
  %1629 = vmatpush1.msra.mxu0 %v68
  %1630 = vmatprep.subr.mxu0 0.0
  %1631 = vmatpush2.msra.mxu0 0.0
  %1632 = vmatprep.subr.mxu0 0.0
  %1633 = vmatpush2.msra.mxu0 0.0
  %1634 = vmatprep.subr.mxu0 0.0
  %1635 = vmatpush2.msra.mxu0 0.0
  %1636 = vmatprep.subr.mxu0 0.0
  %1637 = vmatpush2.msra.mxu0 0.0
  %1638 = vmatprep.subr.mxu0 0.0
  %1639 = vmatpush2.msra.mxu0 0.0
  %1640 = vmatprep.subr.mxu0 0.0
  %1641 = vmatpush2.msra.mxu0 0.0
  %1642 = vmatprep.subr.mxu0 0.0
  %1643 = vmatpush2.msra.mxu0 0.0
  %1644 = vmatprep.subr.mxu0 0.0
  %1645 = vmatpush2.msra.mxu0 0.0
  %1646 = vmatprep.subr.mxu0 0.0
  %1647 = vmatpush2.msra.mxu0 0.0
  %1648 = vmatprep.subr.mxu0 0.0
  %1649 = vmatpush2.msra.mxu0 0.0
  %1650 = vmatprep.subr.mxu0 0.0
  %1651 = vmatpush2.msra.mxu0 0.0
  %1652 = vmatprep.subr.mxu0 0.0
  %1653 = vmatpush2.msra.mxu0 0.0
  %1654 = vmatprep.subr.mxu0 0.0
  %1655 = vmatpush2.msra.mxu0 0.0
  %1656 = vmatprep.subr.mxu0 0.0
  %1657 = vmatpush2.msra.mxu0 0.0
  %1658 = vmatprep.subr.mxu0 0.0
  %1659 = vmatpush2.msra.mxu0 0.0
  %1660 = vmatprep.subr.mxu0 0.0
  %1661 = vmatpush2.msra.mxu0 0.0
  %1662 = vmatprep.mubr.f32.mxu0 0.0
  %1663 = vmatmul.mubr.f32.gmra.mxu0 %v1456
  %v1664 = vpop.f32.mrf.mxu0
  %v1665 = vadd.f32 0.0, %v1664
  %v1666 = vpop.f32.mrf.mxu0
  %v1667 = vadd.f32 0.0, %v1666
  %1668 = vdwg.mxu0
  %1669 = vmatprep.subr.mxu0 0.0
  %1670 = vmatpush1.msra.mxu0 %v115
  %1671 = vmatprep.subr.mxu0 0.0
  %1672 = vmatpush1.msra.mxu0 %v112
  %1673 = vmatprep.subr.mxu0 0.0
  %1674 = vmatpush1.msra.mxu0 %v109
  %1675 = vmatprep.subr.mxu0 0.0
  %1676 = vmatpush1.msra.mxu0 %v106
  %1677 = vmatprep.subr.mxu0 0.0
  %1678 = vmatpush1.msra.mxu0 %v103
  %1679 = vmatprep.subr.mxu0 0.0
  %1680 = vmatpush1.msra.mxu0 %v100
  %1681 = vmatprep.subr.mxu0 0.0
  %1682 = vmatpush1.msra.mxu0 %v97
  %1683 = vmatprep.subr.mxu0 0.0
  %1684 = vmatpush1.msra.mxu0 %v94
  %1685 = vmatprep.subr.mxu0 0.0
  %1686 = vmatpush1.msra.mxu0 %v91
  %1687 = vmatprep.subr.mxu0 0.0
  %1688 = vmatpush1.msra.mxu0 %v88
  %1689 = vmatprep.subr.mxu0 0.0
  %1690 = vmatpush1.msra.mxu0 %v85
  %1691 = vmatprep.subr.mxu0 0.0
  %1692 = vmatpush1.msra.mxu0 %v82
  %1693 = vmatprep.subr.mxu0 0.0
  %1694 = vmatpush1.msra.mxu0 %v79
  %1695 = vmatprep.subr.mxu0 0.0
  %1696 = vmatpush1.msra.mxu0 %v76
  %1697 = vmatprep.subr.mxu0 0.0
  %1698 = vmatpush1.msra.mxu0 %v73
  %1699 = vmatprep.subr.mxu0 0.0
  %1700 = vmatpush1.msra.mxu0 %v70
  %1701 = vmatprep.subr.mxu0 0.0
  %1702 = vmatpush2.msra.mxu0 0.0
  %1703 = vmatprep.subr.mxu0 0.0
  %1704 = vmatpush2.msra.mxu0 0.0
  %1705 = vmatprep.subr.mxu0 0.0
  %1706 = vmatpush2.msra.mxu0 0.0
  %1707 = vmatprep.subr.mxu0 0.0
  %1708 = vmatpush2.msra.mxu0 0.0
  %1709 = vmatprep.subr.mxu0 0.0
  %1710 = vmatpush2.msra.mxu0 0.0
  %1711 = vmatprep.subr.mxu0 0.0
  %1712 = vmatpush2.msra.mxu0 0.0
  %1713 = vmatprep.subr.mxu0 0.0
  %1714 = vmatpush2.msra.mxu0 0.0
  %1715 = vmatprep.subr.mxu0 0.0
  %1716 = vmatpush2.msra.mxu0 0.0
  %1717 = vmatprep.subr.mxu0 0.0
  %1718 = vmatpush2.msra.mxu0 0.0
  %1719 = vmatprep.subr.mxu0 0.0
  %1720 = vmatpush2.msra.mxu0 0.0
  %1721 = vmatprep.subr.mxu0 0.0
  %1722 = vmatpush2.msra.mxu0 0.0
  %1723 = vmatprep.subr.mxu0 0.0
  %1724 = vmatpush2.msra.mxu0 0.0
  %1725 = vmatprep.subr.mxu0 0.0
  %1726 = vmatpush2.msra.mxu0 0.0
  %1727 = vmatprep.subr.mxu0 0.0
  %1728 = vmatpush2.msra.mxu0 0.0
  %1729 = vmatprep.subr.mxu0 0.0
  %1730 = vmatpush2.msra.mxu0 0.0
  %1731 = vmatprep.subr.mxu0 0.0
  %1732 = vmatpush2.msra.mxu0 0.0
  %1733 = vmatprep.mubr.f32.mxu0 0.0
  %1734 = vmatmul.mubr.f32.gmra.mxu0 %v1456
  %v1735 = vpop.f32.mrf.mxu0
  %v1736 = vadd.f32 0.0, %v1735
  %v1737 = vpop.f32.mrf.mxu0
  %1738 = vdwg.mxu0
  %v1739 = vadd.f32 %v1449, %v1524
  %v1740 = vadd.f32 %v1452, %v1665
  %v1741 = vadd.f32 %v1450, %v1526
  %v1742 = vadd.f32 %v1453, %v1667
  %v1743 = vmul.f32 %v1739, 0.5
  %v1744 = vmul.f32 %v1740, 0.5
  %v1745 = vtanh.pop %v1743
  %v1746 = vtanh.pop %v1744
  %v1747 = vadd.f32 %v1745, 1.0
  %v1748 = vadd.f32 %v1746, 1.0
  %v1749 = vmul.f32 %v1747, 0.5
  %v1750 = vmul.f32 %v1748, 0.5
  %v1751 = vmul.f32 %v1741, 0.5
  %v1752 = vmul.f32 %v1742, 0.5
  %v1753 = vtanh.pop %v1751
  %v1754 = vtanh.pop %v1752
  %v1755 = vadd.f32 %v1753, 1.0
  %v1756 = vadd.f32 %v1754, 1.0
  %v1757 = vmul.f32 %v1755, 0.5
  %v1758 = vmul.f32 %v1756, 0.5
  %v1759 = vadd.f32 %v1595, %v433
  %v1760 = vadd.f32 %v1736, %v437
  %v1761 = vmul.f32 %v1749, %v1759
  %v1762 = vmul.f32 %v1750, %v1760
  %v1763 = vadd.f32 %v1451, %v1761
  %v1764 = vadd.f32 %v1454, %v1762
  %v1765 = vtanh.pop %v1763
  %v1766 = vtanh.pop %v1764
  %v1767 = vsub.f32 %v1455, %v1765
  %v1768 = vsub.f32 %v1456, %v1766
  %v1769 = vmul.f32 %v1757, %v1767
  %v1770 = vmul.f32 %v1758, %v1768
  %v1771 = vadd.f32 %v1765, %v1769
  %v1772 = vadd.f32 %v1766, %v1770
  %s1773 = scalar_lea.vmem %s3, 64
  %1774 = vst [vmem:[%s1773] sm:$0xff] %v1771
  %1775 = vst [vmem:[%s1773 + $0x8] sm:$0xff] %v1772
  %1776 = vst [vmem:[#allocation2] sm:$0xff] %v1771
  %1777 = vst [vmem:[#allocation2 + $0x8] sm:$0xff] %v1772
  %s1778 = scalar_lea.vmem %s0, 240
  %v1779 = vld [vmem:[%s1778] sm:$0xff]
  %v1780 = vld [vmem:[%s1778 + $0x8] sm:$0xff]
  %v1781 = vld [vmem:[%s1778 + $0x10] sm:$0xff]
  %v1782 = vld [vmem:[%s1778 + $0x18] sm:$0xff]
  %v1783 = vld [vmem:[%s1778 + $0x20] sm:$0xff]
  %v1784 = vld [vmem:[%s1778 + $0x28] sm:$0xff]
  %v1785 = vld [vmem:[#allocation2] sm:$0xff]
  %v1786 = vld [vmem:[#allocation2 + $0x8] sm:$0xff]
  %1787 = vmatprep.subr.mxu0 %v66
  %1788 = vmatpush1.msra.mxu0 %v65
  %1789 = vmatprep.subr.mxu0 %v63
  %1790 = vmatpush1.msra.mxu0 %v62
  %1791 = vmatprep.subr.mxu0 %v60
  %1792 = vmatpush1.msra.mxu0 %v59
  %1793 = vmatprep.subr.mxu0 %v57
  %1794 = vmatpush1.msra.mxu0 %v56
  %1795 = vmatprep.subr.mxu0 %v54
  %1796 = vmatpush1.msra.mxu0 %v53
  %1797 = vmatprep.subr.mxu0 %v51
  %1798 = vmatpush1.msra.mxu0 %v50
  %1799 = vmatprep.subr.mxu0 %v48
  %1800 = vmatpush1.msra.mxu0 %v47
  %1801 = vmatprep.subr.mxu0 %v45
  %1802 = vmatpush1.msra.mxu0 %v44
  %1803 = vmatprep.subr.mxu0 %v42
  %1804 = vmatpush1.msra.mxu0 %v41
  %1805 = vmatprep.subr.mxu0 %v39
  %1806 = vmatpush1.msra.mxu0 %v38
  %1807 = vmatprep.subr.mxu0 %v36
  %1808 = vmatpush1.msra.mxu0 %v35
  %1809 = vmatprep.subr.mxu0 %v33
  %1810 = vmatpush1.msra.mxu0 %v32
  %1811 = vmatprep.subr.mxu0 %v30
  %1812 = vmatpush1.msra.mxu0 %v29
  %1813 = vmatprep.subr.mxu0 %v27
  %1814 = vmatpush1.msra.mxu0 %v26
  %1815 = vmatprep.subr.mxu0 %v24
  %1816 = vmatpush1.msra.mxu0 %v23
  %1817 = vmatprep.subr.mxu0 %v21
  %1818 = vmatpush1.msra.mxu0 %v20
  %1819 = vmatprep.subr.mxu0 0.0
  %1820 = vmatpush2.msra.mxu0 0.0
  %1821 = vmatprep.subr.mxu0 0.0
  %1822 = vmatpush2.msra.mxu0 0.0
  %1823 = vmatprep.subr.mxu0 0.0
  %1824 = vmatpush2.msra.mxu0 0.0
  %1825 = vmatprep.subr.mxu0 0.0
  %1826 = vmatpush2.msra.mxu0 0.0
  %1827 = vmatprep.subr.mxu0 0.0
  %1828 = vmatpush2.msra.mxu0 0.0
  %1829 = vmatprep.subr.mxu0 0.0
  %1830 = vmatpush2.msra.mxu0 0.0
  %1831 = vmatprep.subr.mxu0 0.0
  %1832 = vmatpush2.msra.mxu0 0.0
  %1833 = vmatprep.subr.mxu0 0.0
  %1834 = vmatpush2.msra.mxu0 0.0
  %1835 = vmatprep.subr.mxu0 0.0
  %1836 = vmatpush2.msra.mxu0 0.0
  %1837 = vmatprep.subr.mxu0 0.0
  %1838 = vmatpush2.msra.mxu0 0.0
  %1839 = vmatprep.subr.mxu0 0.0
  %1840 = vmatpush2.msra.mxu0 0.0
  %1841 = vmatprep.subr.mxu0 0.0
  %1842 = vmatpush2.msra.mxu0 0.0
  %1843 = vmatprep.subr.mxu0 0.0
  %1844 = vmatpush2.msra.mxu0 0.0
  %1845 = vmatprep.subr.mxu0 0.0
  %1846 = vmatpush2.msra.mxu0 0.0
  %1847 = vmatprep.subr.mxu0 0.0
  %1848 = vmatpush2.msra.mxu0 0.0
  %1849 = vmatprep.subr.mxu0 0.0
  %1850 = vmatpush2.msra.mxu0 0.0
  %1851 = vmatprep.mubr.f32.mxu0 0.0
  %1852 = vmatmul.mubr.f32.gmra.mxu0 %v1785
  %v1853 = vpop.f32.mrf.mxu0
  %v1854 = vadd.f32 0.0, %v1853
  %v1855 = vpop.f32.mrf.mxu0
  %v1856 = vadd.f32 0.0, %v1855
  %1857 = vdwg.mxu0
  %1858 = vmatprep.subr.mxu0 0.0
  %1859 = vmatpush1.msra.mxu0 %v67
  %1860 = vmatprep.subr.mxu0 0.0
  %1861 = vmatpush1.msra.mxu0 %v64
  %1862 = vmatprep.subr.mxu0 0.0
  %1863 = vmatpush1.msra.mxu0 %v61
  %1864 = vmatprep.subr.mxu0 0.0
  %1865 = vmatpush1.msra.mxu0 %v58
  %1866 = vmatprep.subr.mxu0 0.0
  %1867 = vmatpush1.msra.mxu0 %v55
  %1868 = vmatprep.subr.mxu0 0.0
  %1869 = vmatpush1.msra.mxu0 %v52
  %1870 = vmatprep.subr.mxu0 0.0
  %1871 = vmatpush1.msra.mxu0 %v49
  %1872 = vmatprep.subr.mxu0 0.0
  %1873 = vmatpush1.msra.mxu0 %v46
  %1874 = vmatprep.subr.mxu0 0.0
  %1875 = vmatpush1.msra.mxu0 %v43
  %1876 = vmatprep.subr.mxu0 0.0
  %1877 = vmatpush1.msra.mxu0 %v40
  %1878 = vmatprep.subr.mxu0 0.0
  %1879 = vmatpush1.msra.mxu0 %v37
  %1880 = vmatprep.subr.mxu0 0.0
  %1881 = vmatpush1.msra.mxu0 %v34
  %1882 = vmatprep.subr.mxu0 0.0
  %1883 = vmatpush1.msra.mxu0 %v31
  %1884 = vmatprep.subr.mxu0 0.0
  %1885 = vmatpush1.msra.mxu0 %v28
  %1886 = vmatprep.subr.mxu0 0.0
  %1887 = vmatpush1.msra.mxu0 %v25
  %1888 = vmatprep.subr.mxu0 0.0
  %1889 = vmatpush1.msra.mxu0 %v22
  %1890 = vmatprep.subr.mxu0 0.0
  %1891 = vmatpush2.msra.mxu0 0.0
  %1892 = vmatprep.subr.mxu0 0.0
  %1893 = vmatpush2.msra.mxu0 0.0
  %1894 = vmatprep.subr.mxu0 0.0
  %1895 = vmatpush2.msra.mxu0 0.0
  %1896 = vmatprep.subr.mxu0 0.0
  %1897 = vmatpush2.msra.mxu0 0.0
  %1898 = vmatprep.subr.mxu0 0.0
  %1899 = vmatpush2.msra.mxu0 0.0
  %1900 = vmatprep.subr.mxu0 0.0
  %1901 = vmatpush2.msra.mxu0 0.0
  %1902 = vmatprep.subr.mxu0 0.0
  %1903 = vmatpush2.msra.mxu0 0.0
  %1904 = vmatprep.subr.mxu0 0.0
  %1905 = vmatpush2.msra.mxu0 0.0
  %1906 = vmatprep.subr.mxu0 0.0
  %1907 = vmatpush2.msra.mxu0 0.0
  %1908 = vmatprep.subr.mxu0 0.0
  %1909 = vmatpush2.msra.mxu0 0.0
  %1910 = vmatprep.subr.mxu0 0.0
  %1911 = vmatpush2.msra.mxu0 0.0
  %1912 = vmatprep.subr.mxu0 0.0
  %1913 = vmatpush2.msra.mxu0 0.0
  %1914 = vmatprep.subr.mxu0 0.0
  %1915 = vmatpush2.msra.mxu0 0.0
  %1916 = vmatprep.subr.mxu0 0.0
  %1917 = vmatpush2.msra.mxu0 0.0
  %1918 = vmatprep.subr.mxu0 0.0
  %1919 = vmatpush2.msra.mxu0 0.0
  %1920 = vmatprep.subr.mxu0 0.0
  %1921 = vmatpush2.msra.mxu0 0.0
  %1922 = vmatprep.mubr.f32.mxu0 0.0
  %1923 = vmatmul.mubr.f32.gmra.mxu0 %v1785
  %v1924 = vpop.f32.mrf.mxu0
  %v1925 = vadd.f32 0.0, %v1924
  %v1926 = vpop.f32.mrf.mxu0
  %1927 = vdwg.mxu0
  %1928 = vmatprep.subr.mxu0 %v114
  %1929 = vmatpush1.msra.mxu0 %v113
  %1930 = vmatprep.subr.mxu0 %v111
  %1931 = vmatpush1.msra.mxu0 %v110
  %1932 = vmatprep.subr.mxu0 %v108
  %1933 = vmatpush1.msra.mxu0 %v107
  %1934 = vmatprep.subr.mxu0 %v105
  %1935 = vmatpush1.msra.mxu0 %v104
  %1936 = vmatprep.subr.mxu0 %v102
  %1937 = vmatpush1.msra.mxu0 %v101
  %1938 = vmatprep.subr.mxu0 %v99
  %1939 = vmatpush1.msra.mxu0 %v98
  %1940 = vmatprep.subr.mxu0 %v96
  %1941 = vmatpush1.msra.mxu0 %v95
  %1942 = vmatprep.subr.mxu0 %v93
  %1943 = vmatpush1.msra.mxu0 %v92
  %1944 = vmatprep.subr.mxu0 %v90
  %1945 = vmatpush1.msra.mxu0 %v89
  %1946 = vmatprep.subr.mxu0 %v87
  %1947 = vmatpush1.msra.mxu0 %v86
  %1948 = vmatprep.subr.mxu0 %v84
  %1949 = vmatpush1.msra.mxu0 %v83
  %1950 = vmatprep.subr.mxu0 %v81
  %1951 = vmatpush1.msra.mxu0 %v80
  %1952 = vmatprep.subr.mxu0 %v78
  %1953 = vmatpush1.msra.mxu0 %v77
  %1954 = vmatprep.subr.mxu0 %v75
  %1955 = vmatpush1.msra.mxu0 %v74
  %1956 = vmatprep.subr.mxu0 %v72
  %1957 = vmatpush1.msra.mxu0 %v71
  %1958 = vmatprep.subr.mxu0 %v69
  %1959 = vmatpush1.msra.mxu0 %v68
  %1960 = vmatprep.subr.mxu0 0.0
  %1961 = vmatpush2.msra.mxu0 0.0
  %1962 = vmatprep.subr.mxu0 0.0
  %1963 = vmatpush2.msra.mxu0 0.0
  %1964 = vmatprep.subr.mxu0 0.0
  %1965 = vmatpush2.msra.mxu0 0.0
  %1966 = vmatprep.subr.mxu0 0.0
  %1967 = vmatpush2.msra.mxu0 0.0
  %1968 = vmatprep.subr.mxu0 0.0
  %1969 = vmatpush2.msra.mxu0 0.0
  %1970 = vmatprep.subr.mxu0 0.0
  %1971 = vmatpush2.msra.mxu0 0.0
  %1972 = vmatprep.subr.mxu0 0.0
  %1973 = vmatpush2.msra.mxu0 0.0
  %1974 = vmatprep.subr.mxu0 0.0
  %1975 = vmatpush2.msra.mxu0 0.0
  %1976 = vmatprep.subr.mxu0 0.0
  %1977 = vmatpush2.msra.mxu0 0.0
  %1978 = vmatprep.subr.mxu0 0.0
  %1979 = vmatpush2.msra.mxu0 0.0
  %1980 = vmatprep.subr.mxu0 0.0
  %1981 = vmatpush2.msra.mxu0 0.0
  %1982 = vmatprep.subr.mxu0 0.0
  %1983 = vmatpush2.msra.mxu0 0.0
  %1984 = vmatprep.subr.mxu0 0.0
  %1985 = vmatpush2.msra.mxu0 0.0
  %1986 = vmatprep.subr.mxu0 0.0
  %1987 = vmatpush2.msra.mxu0 0.0
  %1988 = vmatprep.subr.mxu0 0.0
  %1989 = vmatpush2.msra.mxu0 0.0
  %1990 = vmatprep.subr.mxu0 0.0
  %1991 = vmatpush2.msra.mxu0 0.0
  %1992 = vmatprep.mubr.f32.mxu0 0.0
  %1993 = vmatmul.mubr.f32.gmra.mxu0 %v1786
  %v1994 = vpop.f32.mrf.mxu0
  %v1995 = vadd.f32 0.0, %v1994
  %v1996 = vpop.f32.mrf.mxu0
  %v1997 = vadd.f32 0.0, %v1996
  %1998 = vdwg.mxu0
  %1999 = vmatprep.subr.mxu0 0.0
  %2000 = vmatpush1.msra.mxu0 %v115
  %2001 = vmatprep.subr.mxu0 0.0
  %2002 = vmatpush1.msra.mxu0 %v112
  %2003 = vmatprep.subr.mxu0 0.0
  %2004 = vmatpush1.msra.mxu0 %v109
  %2005 = vmatprep.subr.mxu0 0.0
  %2006 = vmatpush1.msra.mxu0 %v106
  %2007 = vmatprep.subr.mxu0 0.0
  %2008 = vmatpush1.msra.mxu0 %v103
  %2009 = vmatprep.subr.mxu0 0.0
  %2010 = vmatpush1.msra.mxu0 %v100
  %2011 = vmatprep.subr.mxu0 0.0
  %2012 = vmatpush1.msra.mxu0 %v97
  %2013 = vmatprep.subr.mxu0 0.0
  %2014 = vmatpush1.msra.mxu0 %v94
  %2015 = vmatprep.subr.mxu0 0.0
  %2016 = vmatpush1.msra.mxu0 %v91
  %2017 = vmatprep.subr.mxu0 0.0
  %2018 = vmatpush1.msra.mxu0 %v88
  %2019 = vmatprep.subr.mxu0 0.0
  %2020 = vmatpush1.msra.mxu0 %v85
  %2021 = vmatprep.subr.mxu0 0.0
  %2022 = vmatpush1.msra.mxu0 %v82
  %2023 = vmatprep.subr.mxu0 0.0
  %2024 = vmatpush1.msra.mxu0 %v79
  %2025 = vmatprep.subr.mxu0 0.0
  %2026 = vmatpush1.msra.mxu0 %v76
  %2027 = vmatprep.subr.mxu0 0.0
  %2028 = vmatpush1.msra.mxu0 %v73
  %2029 = vmatprep.subr.mxu0 0.0
  %2030 = vmatpush1.msra.mxu0 %v70
  %2031 = vmatprep.subr.mxu0 0.0
  %2032 = vmatpush2.msra.mxu0 0.0
  %2033 = vmatprep.subr.mxu0 0.0
  %2034 = vmatpush2.msra.mxu0 0.0
  %2035 = vmatprep.subr.mxu0 0.0
  %2036 = vmatpush2.msra.mxu0 0.0
  %2037 = vmatprep.subr.mxu0 0.0
  %2038 = vmatpush2.msra.mxu0 0.0
  %2039 = vmatprep.subr.mxu0 0.0
  %2040 = vmatpush2.msra.mxu0 0.0
  %2041 = vmatprep.subr.mxu0 0.0
  %2042 = vmatpush2.msra.mxu0 0.0
  %2043 = vmatprep.subr.mxu0 0.0
  %2044 = vmatpush2.msra.mxu0 0.0
  %2045 = vmatprep.subr.mxu0 0.0
  %2046 = vmatpush2.msra.mxu0 0.0
  %2047 = vmatprep.subr.mxu0 0.0
  %2048 = vmatpush2.msra.mxu0 0.0
  %2049 = vmatprep.subr.mxu0 0.0
  %2050 = vmatpush2.msra.mxu0 0.0
  %2051 = vmatprep.subr.mxu0 0.0
  %2052 = vmatpush2.msra.mxu0 0.0
  %2053 = vmatprep.subr.mxu0 0.0
  %2054 = vmatpush2.msra.mxu0 0.0
  %2055 = vmatprep.subr.mxu0 0.0
  %2056 = vmatpush2.msra.mxu0 0.0
  %2057 = vmatprep.subr.mxu0 0.0
  %2058 = vmatpush2.msra.mxu0 0.0
  %2059 = vmatprep.subr.mxu0 0.0
  %2060 = vmatpush2.msra.mxu0 0.0
  %2061 = vmatprep.subr.mxu0 0.0
  %2062 = vmatpush2.msra.mxu0 0.0
  %2063 = vmatprep.mubr.f32.mxu0 0.0
  %2064 = vmatmul.mubr.f32.gmra.mxu0 %v1786
  %v2065 = vpop.f32.mrf.mxu0
  %v2066 = vadd.f32 0.0, %v2065
  %v2067 = vpop.f32.mrf.mxu0
  %2068 = vdwg.mxu0
  %v2069 = vadd.f32 %v1779, %v1854
  %v2070 = vadd.f32 %v1782, %v1995
  %v2071 = vadd.f32 %v1780, %v1856
  %v2072 = vadd.f32 %v1783, %v1997
  %v2073 = vmul.f32 %v2069, 0.5
  %v2074 = vmul.f32 %v2070, 0.5
  %v2075 = vtanh.pop %v2073
  %v2076 = vtanh.pop %v2074
  %v2077 = vadd.f32 %v2075, 1.0
  %v2078 = vadd.f32 %v2076, 1.0
  %v2079 = vmul.f32 %v2077, 0.5
  %v2080 = vmul.f32 %v2078, 0.5
  %v2081 = vmul.f32 %v2071, 0.5
  %v2082 = vmul.f32 %v2072, 0.5
  %v2083 = vtanh.pop %v2081
  %v2084 = vtanh.pop %v2082
  %v2085 = vadd.f32 %v2083, 1.0
  %v2086 = vadd.f32 %v2084, 1.0
  %v2087 = vmul.f32 %v2085, 0.5
  %v2088 = vmul.f32 %v2086, 0.5
  %v2089 = vadd.f32 %v1925, %v433
  %v2090 = vadd.f32 %v2066, %v437
  %v2091 = vmul.f32 %v2079, %v2089
  %v2092 = vmul.f32 %v2080, %v2090
  %v2093 = vadd.f32 %v1781, %v2091
  %v2094 = vadd.f32 %v1784, %v2092
  %v2095 = vtanh.pop %v2093
  %v2096 = vtanh.pop %v2094
  %v2097 = vsub.f32 %v1785, %v2095
  %v2098 = vsub.f32 %v1786, %v2096
  %v2099 = vmul.f32 %v2087, %v2097
  %v2100 = vmul.f32 %v2088, %v2098
  %v2101 = vadd.f32 %v2095, %v2099
  %v2102 = vadd.f32 %v2096, %v2100
  %s2103 = scalar_lea.vmem %s3, 80
  %2104 = vst [vmem:[%s2103] sm:$0xff] %v2101
  %2105 = vst [vmem:[%s2103 + $0x8] sm:$0xff] %v2102
  %2106 = vst [vmem:[#allocation2] sm:$0xff] %v2101
  %2107 = vst [vmem:[#allocation2 + $0x8] sm:$0xff] %v2102
  %s2108 = scalar_lea.vmem %s0, 288
  %v2109 = vld [vmem:[%s2108] sm:$0xff]
  %v2110 = vld [vmem:[%s2108 + $0x8] sm:$0xff]
  %v2111 = vld [vmem:[%s2108 + $0x10] sm:$0xff]
  %v2112 = vld [vmem:[%s2108 + $0x18] sm:$0xff]
  %v2113 = vld [vmem:[%s2108 + $0x20] sm:$0xff]
  %v2114 = vld [vmem:[%s2108 + $0x28] sm:$0xff]
  %v2115 = vld [vmem:[#allocation2] sm:$0xff]
  %v2116 = vld [vmem:[#allocation2 + $0x8] sm:$0xff]
  %2117 = vmatprep.subr.mxu0 %v66
  %2118 = vmatpush1.msra.mxu0 %v65
  %2119 = vmatprep.subr.mxu0 %v63
  %2120 = vmatpush1.msra.mxu0 %v62
  %2121 = vmatprep.subr.mxu0 %v60
  %2122 = vmatpush1.msra.mxu0 %v59
  %2123 = vmatprep.subr.mxu0 %v57
  %2124 = vmatpush1.msra.mxu0 %v56
  %2125 = vmatprep.subr.mxu0 %v54
  %2126 = vmatpush1.msra.mxu0 %v53
  %2127 = vmatprep.subr.mxu0 %v51
  %2128 = vmatpush1.msra.mxu0 %v50
  %2129 = vmatprep.subr.mxu0 %v48
  %2130 = vmatpush1.msra.mxu0 %v47
  %2131 = vmatprep.subr.mxu0 %v45
  %2132 = vmatpush1.msra.mxu0 %v44
  %2133 = vmatprep.subr.mxu0 %v42
  %2134 = vmatpush1.msra.mxu0 %v41
  %2135 = vmatprep.subr.mxu0 %v39
  %2136 = vmatpush1.msra.mxu0 %v38
  %2137 = vmatprep.subr.mxu0 %v36
  %2138 = vmatpush1.msra.mxu0 %v35
  %2139 = vmatprep.subr.mxu0 %v33
  %2140 = vmatpush1.msra.mxu0 %v32
  %2141 = vmatprep.subr.mxu0 %v30
  %2142 = vmatpush1.msra.mxu0 %v29
  %2143 = vmatprep.subr.mxu0 %v27
  %2144 = vmatpush1.msra.mxu0 %v26
  %2145 = vmatprep.subr.mxu0 %v24
  %2146 = vmatpush1.msra.mxu0 %v23
  %2147 = vmatprep.subr.mxu0 %v21
  %2148 = vmatpush1.msra.mxu0 %v20
  %2149 = vmatprep.subr.mxu0 0.0
  %2150 = vmatpush2.msra.mxu0 0.0
  %2151 = vmatprep.subr.mxu0 0.0
  %2152 = vmatpush2.msra.mxu0 0.0
  %2153 = vmatprep.subr.mxu0 0.0
  %2154 = vmatpush2.msra.mxu0 0.0
  %2155 = vmatprep.subr.mxu0 0.0
  %2156 = vmatpush2.msra.mxu0 0.0
  %2157 = vmatprep.subr.mxu0 0.0
  %2158 = vmatpush2.msra.mxu0 0.0
  %2159 = vmatprep.subr.mxu0 0.0
  %2160 = vmatpush2.msra.mxu0 0.0
  %2161 = vmatprep.subr.mxu0 0.0
  %2162 = vmatpush2.msra.mxu0 0.0
  %2163 = vmatprep.subr.mxu0 0.0
  %2164 = vmatpush2.msra.mxu0 0.0
  %2165 = vmatprep.subr.mxu0 0.0
  %2166 = vmatpush2.msra.mxu0 0.0
  %2167 = vmatprep.subr.mxu0 0.0
  %2168 = vmatpush2.msra.mxu0 0.0
  %2169 = vmatprep.subr.mxu0 0.0
  %2170 = vmatpush2.msra.mxu0 0.0
  %2171 = vmatprep.subr.mxu0 0.0
  %2172 = vmatpush2.msra.mxu0 0.0
  %2173 = vmatprep.subr.mxu0 0.0
  %2174 = vmatpush2.msra.mxu0 0.0
  %2175 = vmatprep.subr.mxu0 0.0
  %2176 = vmatpush2.msra.mxu0 0.0
  %2177 = vmatprep.subr.mxu0 0.0
  %2178 = vmatpush2.msra.mxu0 0.0
  %2179 = vmatprep.subr.mxu0 0.0
  %2180 = vmatpush2.msra.mxu0 0.0
  %2181 = vmatprep.mubr.f32.mxu0 0.0
  %2182 = vmatmul.mubr.f32.gmra.mxu0 %v2115
  %v2183 = vpop.f32.mrf.mxu0
  %v2184 = vadd.f32 0.0, %v2183
  %v2185 = vpop.f32.mrf.mxu0
  %v2186 = vadd.f32 0.0, %v2185
  %2187 = vdwg.mxu0
  %2188 = vmatprep.subr.mxu0 0.0
  %2189 = vmatpush1.msra.mxu0 %v67
  %2190 = vmatprep.subr.mxu0 0.0
  %2191 = vmatpush1.msra.mxu0 %v64
  %2192 = vmatprep.subr.mxu0 0.0
  %2193 = vmatpush1.msra.mxu0 %v61
  %2194 = vmatprep.subr.mxu0 0.0
  %2195 = vmatpush1.msra.mxu0 %v58
  %2196 = vmatprep.subr.mxu0 0.0
  %2197 = vmatpush1.msra.mxu0 %v55
  %2198 = vmatprep.subr.mxu0 0.0
  %2199 = vmatpush1.msra.mxu0 %v52
  %2200 = vmatprep.subr.mxu0 0.0
  %2201 = vmatpush1.msra.mxu0 %v49
  %2202 = vmatprep.subr.mxu0 0.0
  %2203 = vmatpush1.msra.mxu0 %v46
  %2204 = vmatprep.subr.mxu0 0.0
  %2205 = vmatpush1.msra.mxu0 %v43
  %2206 = vmatprep.subr.mxu0 0.0
  %2207 = vmatpush1.msra.mxu0 %v40
  %2208 = vmatprep.subr.mxu0 0.0
  %2209 = vmatpush1.msra.mxu0 %v37
  %2210 = vmatprep.subr.mxu0 0.0
  %2211 = vmatpush1.msra.mxu0 %v34
  %2212 = vmatprep.subr.mxu0 0.0
  %2213 = vmatpush1.msra.mxu0 %v31
  %2214 = vmatprep.subr.mxu0 0.0
  %2215 = vmatpush1.msra.mxu0 %v28
  %2216 = vmatprep.subr.mxu0 0.0
  %2217 = vmatpush1.msra.mxu0 %v25
  %2218 = vmatprep.subr.mxu0 0.0
  %2219 = vmatpush1.msra.mxu0 %v22
  %2220 = vmatprep.subr.mxu0 0.0
  %2221 = vmatpush2.msra.mxu0 0.0
  %2222 = vmatprep.subr.mxu0 0.0
  %2223 = vmatpush2.msra.mxu0 0.0
  %2224 = vmatprep.subr.mxu0 0.0
  %2225 = vmatpush2.msra.mxu0 0.0
  %2226 = vmatprep.subr.mxu0 0.0
  %2227 = vmatpush2.msra.mxu0 0.0
  %2228 = vmatprep.subr.mxu0 0.0
  %2229 = vmatpush2.msra.mxu0 0.0
  %2230 = vmatprep.subr.mxu0 0.0
  %2231 = vmatpush2.msra.mxu0 0.0
  %2232 = vmatprep.subr.mxu0 0.0
  %2233 = vmatpush2.msra.mxu0 0.0
  %2234 = vmatprep.subr.mxu0 0.0
  %2235 = vmatpush2.msra.mxu0 0.0
  %2236 = vmatprep.subr.mxu0 0.0
  %2237 = vmatpush2.msra.mxu0 0.0
  %2238 = vmatprep.subr.mxu0 0.0
  %2239 = vmatpush2.msra.mxu0 0.0
  %2240 = vmatprep.subr.mxu0 0.0
  %2241 = vmatpush2.msra.mxu0 0.0
  %2242 = vmatprep.subr.mxu0 0.0
  %2243 = vmatpush2.msra.mxu0 0.0
  %2244 = vmatprep.subr.mxu0 0.0
  %2245 = vmatpush2.msra.mxu0 0.0
  %2246 = vmatprep.subr.mxu0 0.0
  %2247 = vmatpush2.msra.mxu0 0.0
  %2248 = vmatprep.subr.mxu0 0.0
  %2249 = vmatpush2.msra.mxu0 0.0
  %2250 = vmatprep.subr.mxu0 0.0
  %2251 = vmatpush2.msra.mxu0 0.0
  %2252 = vmatprep.mubr.f32.mxu0 0.0
  %2253 = vmatmul.mubr.f32.gmra.mxu0 %v2115
  %v2254 = vpop.f32.mrf.mxu0
  %v2255 = vadd.f32 0.0, %v2254
  %v2256 = vpop.f32.mrf.mxu0
  %2257 = vdwg.mxu0
  %2258 = vmatprep.subr.mxu0 %v114
  %2259 = vmatpush1.msra.mxu0 %v113
  %2260 = vmatprep.subr.mxu0 %v111
  %2261 = vmatpush1.msra.mxu0 %v110
  %2262 = vmatprep.subr.mxu0 %v108
  %2263 = vmatpush1.msra.mxu0 %v107
  %2264 = vmatprep.subr.mxu0 %v105
  %2265 = vmatpush1.msra.mxu0 %v104
  %2266 = vmatprep.subr.mxu0 %v102
  %2267 = vmatpush1.msra.mxu0 %v101
  %2268 = vmatprep.subr.mxu0 %v99
  %2269 = vmatpush1.msra.mxu0 %v98
  %2270 = vmatprep.subr.mxu0 %v96
  %2271 = vmatpush1.msra.mxu0 %v95
  %2272 = vmatprep.subr.mxu0 %v93
  %2273 = vmatpush1.msra.mxu0 %v92
  %2274 = vmatprep.subr.mxu0 %v90
  %2275 = vmatpush1.msra.mxu0 %v89
  %2276 = vmatprep.subr.mxu0 %v87
  %2277 = vmatpush1.msra.mxu0 %v86
  %2278 = vmatprep.subr.mxu0 %v84
  %2279 = vmatpush1.msra.mxu0 %v83
  %2280 = vmatprep.subr.mxu0 %v81
  %2281 = vmatpush1.msra.mxu0 %v80
  %2282 = vmatprep.subr.mxu0 %v78
  %2283 = vmatpush1.msra.mxu0 %v77
  %2284 = vmatprep.subr.mxu0 %v75
  %2285 = vmatpush1.msra.mxu0 %v74
  %2286 = vmatprep.subr.mxu0 %v72
  %2287 = vmatpush1.msra.mxu0 %v71
  %2288 = vmatprep.subr.mxu0 %v69
  %2289 = vmatpush1.msra.mxu0 %v68
  %2290 = vmatprep.subr.mxu0 0.0
  %2291 = vmatpush2.msra.mxu0 0.0
  %2292 = vmatprep.subr.mxu0 0.0
  %2293 = vmatpush2.msra.mxu0 0.0
  %2294 = vmatprep.subr.mxu0 0.0
  %2295 = vmatpush2.msra.mxu0 0.0
  %2296 = vmatprep.subr.mxu0 0.0
  %2297 = vmatpush2.msra.mxu0 0.0
  %2298 = vmatprep.subr.mxu0 0.0
  %2299 = vmatpush2.msra.mxu0 0.0
  %2300 = vmatprep.subr.mxu0 0.0
  %2301 = vmatpush2.msra.mxu0 0.0
  %2302 = vmatprep.subr.mxu0 0.0
  %2303 = vmatpush2.msra.mxu0 0.0
  %2304 = vmatprep.subr.mxu0 0.0
  %2305 = vmatpush2.msra.mxu0 0.0
  %2306 = vmatprep.subr.mxu0 0.0
  %2307 = vmatpush2.msra.mxu0 0.0
  %2308 = vmatprep.subr.mxu0 0.0
  %2309 = vmatpush2.msra.mxu0 0.0
  %2310 = vmatprep.subr.mxu0 0.0
  %2311 = vmatpush2.msra.mxu0 0.0
  %2312 = vmatprep.subr.mxu0 0.0
  %2313 = vmatpush2.msra.mxu0 0.0
  %2314 = vmatprep.subr.mxu0 0.0
  %2315 = vmatpush2.msra.mxu0 0.0
  %2316 = vmatprep.subr.mxu0 0.0
  %2317 = vmatpush2.msra.mxu0 0.0
  %2318 = vmatprep.subr.mxu0 0.0
  %2319 = vmatpush2.msra.mxu0 0.0
  %2320 = vmatprep.subr.mxu0 0.0
  %2321 = vmatpush2.msra.mxu0 0.0
  %2322 = vmatprep.mubr.f32.mxu0 0.0
  %2323 = vmatmul.mubr.f32.gmra.mxu0 %v2116
  %v2324 = vpop.f32.mrf.mxu0
  %v2325 = vadd.f32 0.0, %v2324
  %v2326 = vpop.f32.mrf.mxu0
  %v2327 = vadd.f32 0.0, %v2326
  %2328 = vdwg.mxu0
  %2329 = vmatprep.subr.mxu0 0.0
  %2330 = vmatpush1.msra.mxu0 %v115
  %2331 = vmatprep.subr.mxu0 0.0
  %2332 = vmatpush1.msra.mxu0 %v112
  %2333 = vmatprep.subr.mxu0 0.0
  %2334 = vmatpush1.msra.mxu0 %v109
  %2335 = vmatprep.subr.mxu0 0.0
  %2336 = vmatpush1.msra.mxu0 %v106
  %2337 = vmatprep.subr.mxu0 0.0
  %2338 = vmatpush1.msra.mxu0 %v103
  %2339 = vmatprep.subr.mxu0 0.0
  %2340 = vmatpush1.msra.mxu0 %v100
  %2341 = vmatprep.subr.mxu0 0.0
  %2342 = vmatpush1.msra.mxu0 %v97
  %2343 = vmatprep.subr.mxu0 0.0
  %2344 = vmatpush1.msra.mxu0 %v94
  %2345 = vmatprep.subr.mxu0 0.0
  %2346 = vmatpush1.msra.mxu0 %v91
  %2347 = vmatprep.subr.mxu0 0.0
  %2348 = vmatpush1.msra.mxu0 %v88
  %2349 = vmatprep.subr.mxu0 0.0
  %2350 = vmatpush1.msra.mxu0 %v85
  %2351 = vmatprep.subr.mxu0 0.0
  %2352 = vmatpush1.msra.mxu0 %v82
  %2353 = vmatprep.subr.mxu0 0.0
  %2354 = vmatpush1.msra.mxu0 %v79
  %2355 = vmatprep.subr.mxu0 0.0
  %2356 = vmatpush1.msra.mxu0 %v76
  %2357 = vmatprep.subr.mxu0 0.0
  %2358 = vmatpush1.msra.mxu0 %v73
  %2359 = vmatprep.subr.mxu0 0.0
  %2360 = vmatpush1.msra.mxu0 %v70
  %2361 = vmatprep.subr.mxu0 0.0
  %2362 = vmatpush2.msra.mxu0 0.0
  %2363 = vmatprep.subr.mxu0 0.0
  %2364 = vmatpush2.msra.mxu0 0.0
  %2365 = vmatprep.subr.mxu0 0.0
  %2366 = vmatpush2.msra.mxu0 0.0
  %2367 = vmatprep.subr.mxu0 0.0
  %2368 = vmatpush2.msra.mxu0 0.0
  %2369 = vmatprep.subr.mxu0 0.0
  %2370 = vmatpush2.msra.mxu0 0.0
  %2371 = vmatprep.subr.mxu0 0.0
  %2372 = vmatpush2.msra.mxu0 0.0
  %2373 = vmatprep.subr.mxu0 0.0
  %2374 = vmatpush2.msra.mxu0 0.0
  %2375 = vmatprep.subr.mxu0 0.0
  %2376 = vmatpush2.msra.mxu0 0.0
  %2377 = vmatprep.subr.mxu0 0.0
  %2378 = vmatpush2.msra.mxu0 0.0
  %2379 = vmatprep.subr.mxu0 0.0
  %2380 = vmatpush2.msra.mxu0 0.0
  %2381 = vmatprep.subr.mxu0 0.0
  %2382 = vmatpush2.msra.mxu0 0.0
  %2383 = vmatprep.subr.mxu0 0.0
  %2384 = vmatpush2.msra.mxu0 0.0
  %2385 = vmatprep.subr.mxu0 0.0
  %2386 = vmatpush2.msra.mxu0 0.0
  %2387 = vmatprep.subr.mxu0 0.0
  %2388 = vmatpush2.msra.mxu0 0.0
  %2389 = vmatprep.subr.mxu0 0.0
  %2390 = vmatpush2.msra.mxu0 0.0
  %2391 = vmatprep.subr.mxu0 0.0
  %2392 = vmatpush2.msra.mxu0 0.0
  %2393 = vmatprep.mubr.f32.mxu0 0.0
  %2394 = vmatmul.mubr.f32.gmra.mxu0 %v2116
  %v2395 = vpop.f32.mrf.mxu0
  %v2396 = vadd.f32 0.0, %v2395
  %v2397 = vpop.f32.mrf.mxu0
  %2398 = vdwg.mxu0
  %v2399 = vadd.f32 %v2109, %v2184
  %v2400 = vadd.f32 %v2112, %v2325
  %v2401 = vadd.f32 %v2110, %v2186
  %v2402 = vadd.f32 %v2113, %v2327
  %v2403 = vmul.f32 %v2399, 0.5
  %v2404 = vmul.f32 %v2400, 0.5
  %v2405 = vtanh.pop %v2403
  %v2406 = vtanh.pop %v2404
  %v2407 = vadd.f32 %v2405, 1.0
  %v2408 = vadd.f32 %v2406, 1.0
  %v2409 = vmul.f32 %v2407, 0.5
  %v2410 = vmul.f32 %v2408, 0.5
  %v2411 = vmul.f32 %v2401, 0.5
  %v2412 = vmul.f32 %v2402, 0.5
  %v2413 = vtanh.pop %v2411
  %v2414 = vtanh.pop %v2412
  %v2415 = vadd.f32 %v2413, 1.0
  %v2416 = vadd.f32 %v2414, 1.0
  %v2417 = vmul.f32 %v2415, 0.5
  %v2418 = vmul.f32 %v2416, 0.5
  %v2419 = vadd.f32 %v2255, %v433
  %v2420 = vadd.f32 %v2396, %v437
  %v2421 = vmul.f32 %v2409, %v2419
  %v2422 = vmul.f32 %v2410, %v2420
  %v2423 = vadd.f32 %v2111, %v2421
  %v2424 = vadd.f32 %v2114, %v2422
  %v2425 = vtanh.pop %v2423
  %v2426 = vtanh.pop %v2424
  %v2427 = vsub.f32 %v2115, %v2425
  %v2428 = vsub.f32 %v2116, %v2426
  %v2429 = vmul.f32 %v2417, %v2427
  %v2430 = vmul.f32 %v2418, %v2428
  %v2431 = vadd.f32 %v2425, %v2429
  %v2432 = vadd.f32 %v2426, %v2430
  %s2433 = scalar_lea.vmem %s3, 96
  %2434 = vst [vmem:[%s2433] sm:$0xff] %v2431
  %2435 = vst [vmem:[%s2433 + $0x8] sm:$0xff] %v2432
  %2436 = vst [vmem:[#allocation2] sm:$0xff] %v2431
  %2437 = vst [vmem:[#allocation2 + $0x8] sm:$0xff] %v2432
  %s2438 = scalar_lea.vmem %s0, 336
  %v2439 = vld [vmem:[%s2438] sm:$0xff]
  %v2440 = vld [vmem:[%s2438 + $0x8] sm:$0xff]
  %v2441 = vld [vmem:[%s2438 + $0x10] sm:$0xff]
  %v2442 = vld [vmem:[%s2438 + $0x18] sm:$0xff]
  %v2443 = vld [vmem:[%s2438 + $0x20] sm:$0xff]
  %v2444 = vld [vmem:[%s2438 + $0x28] sm:$0xff]
  %v2445 = vld [vmem:[#allocation2] sm:$0xff]
  %v2446 = vld [vmem:[#allocation2 + $0x8] sm:$0xff]
  %2447 = vmatprep.subr.mxu0 %v66
  %2448 = vmatpush1.msra.mxu0 %v65
  %2449 = vmatprep.subr.mxu0 %v63
  %2450 = vmatpush1.msra.mxu0 %v62
  %2451 = vmatprep.subr.mxu0 %v60
  %2452 = vmatpush1.msra.mxu0 %v59
  %2453 = vmatprep.subr.mxu0 %v57
  %2454 = vmatpush1.msra.mxu0 %v56
  %2455 = vmatprep.subr.mxu0 %v54
  %2456 = vmatpush1.msra.mxu0 %v53
  %2457 = vmatprep.subr.mxu0 %v51
  %2458 = vmatpush1.msra.mxu0 %v50
  %2459 = vmatprep.subr.mxu0 %v48
  %2460 = vmatpush1.msra.mxu0 %v47
  %2461 = vmatprep.subr.mxu0 %v45
  %2462 = vmatpush1.msra.mxu0 %v44
  %2463 = vmatprep.subr.mxu0 %v42
  %2464 = vmatpush1.msra.mxu0 %v41
  %2465 = vmatprep.subr.mxu0 %v39
  %2466 = vmatpush1.msra.mxu0 %v38
  %2467 = vmatprep.subr.mxu0 %v36
  %2468 = vmatpush1.msra.mxu0 %v35
  %2469 = vmatprep.subr.mxu0 %v33
  %2470 = vmatpush1.msra.mxu0 %v32
  %2471 = vmatprep.subr.mxu0 %v30
  %2472 = vmatpush1.msra.mxu0 %v29
  %2473 = vmatprep.subr.mxu0 %v27
  %2474 = vmatpush1.msra.mxu0 %v26
  %2475 = vmatprep.subr.mxu0 %v24
  %2476 = vmatpush1.msra.mxu0 %v23
  %2477 = vmatprep.subr.mxu0 %v21
  %2478 = vmatpush1.msra.mxu0 %v20
  %2479 = vmatprep.subr.mxu0 0.0
  %2480 = vmatpush2.msra.mxu0 0.0
  %2481 = vmatprep.subr.mxu0 0.0
  %2482 = vmatpush2.msra.mxu0 0.0
  %2483 = vmatprep.subr.mxu0 0.0
  %2484 = vmatpush2.msra.mxu0 0.0
  %2485 = vmatprep.subr.mxu0 0.0
  %2486 = vmatpush2.msra.mxu0 0.0
  %2487 = vmatprep.subr.mxu0 0.0
  %2488 = vmatpush2.msra.mxu0 0.0
  %2489 = vmatprep.subr.mxu0 0.0
  %2490 = vmatpush2.msra.mxu0 0.0
  %2491 = vmatprep.subr.mxu0 0.0
  %2492 = vmatpush2.msra.mxu0 0.0
  %2493 = vmatprep.subr.mxu0 0.0
  %2494 = vmatpush2.msra.mxu0 0.0
  %2495 = vmatprep.subr.mxu0 0.0
  %2496 = vmatpush2.msra.mxu0 0.0
  %2497 = vmatprep.subr.mxu0 0.0
  %2498 = vmatpush2.msra.mxu0 0.0
  %2499 = vmatprep.subr.mxu0 0.0
  %2500 = vmatpush2.msra.mxu0 0.0
  %2501 = vmatprep.subr.mxu0 0.0
  %2502 = vmatpush2.msra.mxu0 0.0
  %2503 = vmatprep.subr.mxu0 0.0
  %2504 = vmatpush2.msra.mxu0 0.0
  %2505 = vmatprep.subr.mxu0 0.0
  %2506 = vmatpush2.msra.mxu0 0.0
  %2507 = vmatprep.subr.mxu0 0.0
  %2508 = vmatpush2.msra.mxu0 0.0
  %2509 = vmatprep.subr.mxu0 0.0
  %2510 = vmatpush2.msra.mxu0 0.0
  %2511 = vmatprep.mubr.f32.mxu0 0.0
  %2512 = vmatmul.mubr.f32.gmra.mxu0 %v2445
  %v2513 = vpop.f32.mrf.mxu0
  %v2514 = vadd.f32 0.0, %v2513
  %v2515 = vpop.f32.mrf.mxu0
  %v2516 = vadd.f32 0.0, %v2515
  %2517 = vdwg.mxu0
  %2518 = vmatprep.subr.mxu0 0.0
  %2519 = vmatpush1.msra.mxu0 %v67
  %2520 = vmatprep.subr.mxu0 0.0
  %2521 = vmatpush1.msra.mxu0 %v64
  %2522 = vmatprep.subr.mxu0 0.0
  %2523 = vmatpush1.msra.mxu0 %v61
  %2524 = vmatprep.subr.mxu0 0.0
  %2525 = vmatpush1.msra.mxu0 %v58
  %2526 = vmatprep.subr.mxu0 0.0
  %2527 = vmatpush1.msra.mxu0 %v55
  %2528 = vmatprep.subr.mxu0 0.0
  %2529 = vmatpush1.msra.mxu0 %v52
  %2530 = vmatprep.subr.mxu0 0.0
  %2531 = vmatpush1.msra.mxu0 %v49
  %2532 = vmatprep.subr.mxu0 0.0
  %2533 = vmatpush1.msra.mxu0 %v46
  %2534 = vmatprep.subr.mxu0 0.0
  %2535 = vmatpush1.msra.mxu0 %v43
  %2536 = vmatprep.subr.mxu0 0.0
  %2537 = vmatpush1.msra.mxu0 %v40
  %2538 = vmatprep.subr.mxu0 0.0
  %2539 = vmatpush1.msra.mxu0 %v37
  %2540 = vmatprep.subr.mxu0 0.0
  %2541 = vmatpush1.msra.mxu0 %v34
  %2542 = vmatprep.subr.mxu0 0.0
  %2543 = vmatpush1.msra.mxu0 %v31
  %2544 = vmatprep.subr.mxu0 0.0
  %2545 = vmatpush1.msra.mxu0 %v28
  %2546 = vmatprep.subr.mxu0 0.0
  %2547 = vmatpush1.msra.mxu0 %v25
  %2548 = vmatprep.subr.mxu0 0.0
  %2549 = vmatpush1.msra.mxu0 %v22
  %2550 = vmatprep.subr.mxu0 0.0
  %2551 = vmatpush2.msra.mxu0 0.0
  %2552 = vmatprep.subr.mxu0 0.0
  %2553 = vmatpush2.msra.mxu0 0.0
  %2554 = vmatprep.subr.mxu0 0.0
  %2555 = vmatpush2.msra.mxu0 0.0
  %2556 = vmatprep.subr.mxu0 0.0
  %2557 = vmatpush2.msra.mxu0 0.0
  %2558 = vmatprep.subr.mxu0 0.0
  %2559 = vmatpush2.msra.mxu0 0.0
  %2560 = vmatprep.subr.mxu0 0.0
  %2561 = vmatpush2.msra.mxu0 0.0
  %2562 = vmatprep.subr.mxu0 0.0
  %2563 = vmatpush2.msra.mxu0 0.0
  %2564 = vmatprep.subr.mxu0 0.0
  %2565 = vmatpush2.msra.mxu0 0.0
  %2566 = vmatprep.subr.mxu0 0.0
  %2567 = vmatpush2.msra.mxu0 0.0
  %2568 = vmatprep.subr.mxu0 0.0
  %2569 = vmatpush2.msra.mxu0 0.0
  %2570 = vmatprep.subr.mxu0 0.0
  %2571 = vmatpush2.msra.mxu0 0.0
  %2572 = vmatprep.subr.mxu0 0.0
  %2573 = vmatpush2.msra.mxu0 0.0
  %2574 = vmatprep.subr.mxu0 0.0
  %2575 = vmatpush2.msra.mxu0 0.0
  %2576 = vmatprep.subr.mxu0 0.0
  %2577 = vmatpush2.msra.mxu0 0.0
  %2578 = vmatprep.subr.mxu0 0.0
  %2579 = vmatpush2.msra.mxu0 0.0
  %2580 = vmatprep.subr.mxu0 0.0
  %2581 = vmatpush2.msra.mxu0 0.0
  %2582 = vmatprep.mubr.f32.mxu0 0.0
  %2583 = vmatmul.mubr.f32.gmra.mxu0 %v2445
  %v2584 = vpop.f32.mrf.mxu0
  %v2585 = vadd.f32 0.0, %v2584
  %v2586 = vpop.f32.mrf.mxu0
  %2587 = vdwg.mxu0
  %2588 = vmatprep.subr.mxu0 %v114
  %2589 = vmatpush1.msra.mxu0 %v113
  %2590 = vmatprep.subr.mxu0 %v111
  %2591 = vmatpush1.msra.mxu0 %v110
  %2592 = vmatprep.subr.mxu0 %v108
  %2593 = vmatpush1.msra.mxu0 %v107
  %2594 = vmatprep.subr.mxu0 %v105
  %2595 = vmatpush1.msra.mxu0 %v104
  %2596 = vmatprep.subr.mxu0 %v102
  %2597 = vmatpush1.msra.mxu0 %v101
  %2598 = vmatprep.subr.mxu0 %v99
  %2599 = vmatpush1.msra.mxu0 %v98
  %2600 = vmatprep.subr.mxu0 %v96
  %2601 = vmatpush1.msra.mxu0 %v95
  %2602 = vmatprep.subr.mxu0 %v93
  %2603 = vmatpush1.msra.mxu0 %v92
  %2604 = vmatprep.subr.mxu0 %v90
  %2605 = vmatpush1.msra.mxu0 %v89
  %2606 = vmatprep.subr.mxu0 %v87
  %2607 = vmatpush1.msra.mxu0 %v86
  %2608 = vmatprep.subr.mxu0 %v84
  %2609 = vmatpush1.msra.mxu0 %v83
  %2610 = vmatprep.subr.mxu0 %v81
  %2611 = vmatpush1.msra.mxu0 %v80
  %2612 = vmatprep.subr.mxu0 %v78
  %2613 = vmatpush1.msra.mxu0 %v77
  %2614 = vmatprep.subr.mxu0 %v75
  %2615 = vmatpush1.msra.mxu0 %v74
  %2616 = vmatprep.subr.mxu0 %v72
  %2617 = vmatpush1.msra.mxu0 %v71
  %2618 = vmatprep.subr.mxu0 %v69
  %2619 = vmatpush1.msra.mxu0 %v68
  %2620 = vmatprep.subr.mxu0 0.0
  %2621 = vmatpush2.msra.mxu0 0.0
  %2622 = vmatprep.subr.mxu0 0.0
  %2623 = vmatpush2.msra.mxu0 0.0
  %2624 = vmatprep.subr.mxu0 0.0
  %2625 = vmatpush2.msra.mxu0 0.0
  %2626 = vmatprep.subr.mxu0 0.0
  %2627 = vmatpush2.msra.mxu0 0.0
  %2628 = vmatprep.subr.mxu0 0.0
  %2629 = vmatpush2.msra.mxu0 0.0
  %2630 = vmatprep.subr.mxu0 0.0
  %2631 = vmatpush2.msra.mxu0 0.0
  %2632 = vmatprep.subr.mxu0 0.0
  %2633 = vmatpush2.msra.mxu0 0.0
  %2634 = vmatprep.subr.mxu0 0.0
  %2635 = vmatpush2.msra.mxu0 0.0
  %2636 = vmatprep.subr.mxu0 0.0
  %2637 = vmatpush2.msra.mxu0 0.0
  %2638 = vmatprep.subr.mxu0 0.0
  %2639 = vmatpush2.msra.mxu0 0.0
  %2640 = vmatprep.subr.mxu0 0.0
  %2641 = vmatpush2.msra.mxu0 0.0
  %2642 = vmatprep.subr.mxu0 0.0
  %2643 = vmatpush2.msra.mxu0 0.0
  %2644 = vmatprep.subr.mxu0 0.0
  %2645 = vmatpush2.msra.mxu0 0.0
  %2646 = vmatprep.subr.mxu0 0.0
  %2647 = vmatpush2.msra.mxu0 0.0
  %2648 = vmatprep.subr.mxu0 0.0
  %2649 = vmatpush2.msra.mxu0 0.0
  %2650 = vmatprep.subr.mxu0 0.0
  %2651 = vmatpush2.msra.mxu0 0.0
  %2652 = vmatprep.mubr.f32.mxu0 0.0
  %2653 = vmatmul.mubr.f32.gmra.mxu0 %v2446
  %v2654 = vpop.f32.mrf.mxu0
  %v2655 = vadd.f32 0.0, %v2654
  %v2656 = vpop.f32.mrf.mxu0
  %v2657 = vadd.f32 0.0, %v2656
  %2658 = vdwg.mxu0
  %2659 = vmatprep.subr.mxu0 0.0
  %2660 = vmatpush1.msra.mxu0 %v115
  %2661 = vmatprep.subr.mxu0 0.0
  %2662 = vmatpush1.msra.mxu0 %v112
  %2663 = vmatprep.subr.mxu0 0.0
  %2664 = vmatpush1.msra.mxu0 %v109
  %2665 = vmatprep.subr.mxu0 0.0
  %2666 = vmatpush1.msra.mxu0 %v106
  %2667 = vmatprep.subr.mxu0 0.0
  %2668 = vmatpush1.msra.mxu0 %v103
  %2669 = vmatprep.subr.mxu0 0.0
  %2670 = vmatpush1.msra.mxu0 %v100
  %2671 = vmatprep.subr.mxu0 0.0
  %2672 = vmatpush1.msra.mxu0 %v97
  %2673 = vmatprep.subr.mxu0 0.0
  %2674 = vmatpush1.msra.mxu0 %v94
  %2675 = vmatprep.subr.mxu0 0.0
  %2676 = vmatpush1.msra.mxu0 %v91
  %2677 = vmatprep.subr.mxu0 0.0
  %2678 = vmatpush1.msra.mxu0 %v88
  %2679 = vmatprep.subr.mxu0 0.0
  %2680 = vmatpush1.msra.mxu0 %v85
  %2681 = vmatprep.subr.mxu0 0.0
  %2682 = vmatpush1.msra.mxu0 %v82
  %2683 = vmatprep.subr.mxu0 0.0
  %2684 = vmatpush1.msra.mxu0 %v79
  %2685 = vmatprep.subr.mxu0 0.0
  %2686 = vmatpush1.msra.mxu0 %v76
  %2687 = vmatprep.subr.mxu0 0.0
  %2688 = vmatpush1.msra.mxu0 %v73
  %2689 = vmatprep.subr.mxu0 0.0
  %2690 = vmatpush1.msra.mxu0 %v70
  %2691 = vmatprep.subr.mxu0 0.0
  %2692 = vmatpush2.msra.mxu0 0.0
  %2693 = vmatprep.subr.mxu0 0.0
  %2694 = vmatpush2.msra.mxu0 0.0
  %2695 = vmatprep.subr.mxu0 0.0
  %2696 = vmatpush2.msra.mxu0 0.0
  %2697 = vmatprep.subr.mxu0 0.0
  %2698 = vmatpush2.msra.mxu0 0.0
  %2699 = vmatprep.subr.mxu0 0.0
  %2700 = vmatpush2.msra.mxu0 0.0
  %2701 = vmatprep.subr.mxu0 0.0
  %2702 = vmatpush2.msra.mxu0 0.0
  %2703 = vmatprep.subr.mxu0 0.0
  %2704 = vmatpush2.msra.mxu0 0.0
  %2705 = vmatprep.subr.mxu0 0.0
  %2706 = vmatpush2.msra.mxu0 0.0
  %2707 = vmatprep.subr.mxu0 0.0
  %2708 = vmatpush2.msra.mxu0 0.0
  %2709 = vmatprep.subr.mxu0 0.0
  %2710 = vmatpush2.msra.mxu0 0.0
  %2711 = vmatprep.subr.mxu0 0.0
  %2712 = vmatpush2.msra.mxu0 0.0
  %2713 = vmatprep.subr.mxu0 0.0
  %2714 = vmatpush2.msra.mxu0 0.0
  %2715 = vmatprep.subr.mxu0 0.0
  %2716 = vmatpush2.msra.mxu0 0.0
  %2717 = vmatprep.subr.mxu0 0.0
  %2718 = vmatpush2.msra.mxu0 0.0
  %2719 = vmatprep.subr.mxu0 0.0
  %2720 = vmatpush2.msra.mxu0 0.0
  %2721 = vmatprep.subr.mxu0 0.0
  %2722 = vmatpush2.msra.mxu0 0.0
  %2723 = vmatprep.mubr.f32.mxu0 0.0
  %2724 = vmatmul.mubr.f32.gmra.mxu0 %v2446
  %v2725 = vpop.f32.mrf.mxu0
  %v2726 = vadd.f32 0.0, %v2725
  %v2727 = vpop.f32.mrf.mxu0
  %2728 = vdwg.mxu0
  %v2729 = vadd.f32 %v2439, %v2514
  %v2730 = vadd.f32 %v2442, %v2655
  %v2731 = vadd.f32 %v2440, %v2516
  %v2732 = vadd.f32 %v2443, %v2657
  %v2733 = vmul.f32 %v2729, 0.5
  %v2734 = vmul.f32 %v2730, 0.5
  %v2735 = vtanh.pop %v2733
  %v2736 = vtanh.pop %v2734
  %v2737 = vadd.f32 %v2735, 1.0
  %v2738 = vadd.f32 %v2736, 1.0
  %v2739 = vmul.f32 %v2737, 0.5
  %v2740 = vmul.f32 %v2738, 0.5
  %v2741 = vmul.f32 %v2731, 0.5
  %v2742 = vmul.f32 %v2732, 0.5
  %v2743 = vtanh.pop %v2741
  %v2744 = vtanh.pop %v2742
  %v2745 = vadd.f32 %v2743, 1.0
  %v2746 = vadd.f32 %v2744, 1.0
  %v2747 = vmul.f32 %v2745, 0.5
  %v2748 = vmul.f32 %v2746, 0.5
  %v2749 = vadd.f32 %v2585, %v433
  %v2750 = vadd.f32 %v2726, %v437
  %v2751 = vmul.f32 %v2739, %v2749
  %v2752 = vmul.f32 %v2740, %v2750
  %v2753 = vadd.f32 %v2441, %v2751
  %v2754 = vadd.f32 %v2444, %v2752
  %v2755 = vtanh.pop %v2753
  %v2756 = vtanh.pop %v2754
  %v2757 = vsub.f32 %v2445, %v2755
  %v2758 = vsub.f32 %v2446, %v2756
  %v2759 = vmul.f32 %v2747, %v2757
  %v2760 = vmul.f32 %v2748, %v2758
  %v2761 = vadd.f32 %v2755, %v2759
  %v2762 = vadd.f32 %v2756, %v2760
  %s2763 = scalar_lea.vmem %s3, 112
  %2764 = vst [vmem:[%s2763] sm:$0xff] %v2761
  %2765 = vst [vmem:[%s2763 + $0x8] sm:$0xff] %v2762
  %2766 = vst [vmem:[#allocation2] sm:$0xff] %v2761
  %2767 = vst [vmem:[#allocation2 + $0x8] sm:$0xff] %v2762
  // Predicated region
  $region18: #{bigru_forward.1} parent=0 // pred_check
    _
  $region19: #{bigru_forward.1} parent=0 // pred_check_branch
    %2769 = sbr.rel (0) target = $region21
  $region20: #{bigru_forward.1} parent=0 // pred_region
    _
  $region21: #{bigru_forward.1} parent=0 // pred_fallthru
    _
  // Predicated region
  $region22: #{bigru_forward.1} parent=0 // pred_check
    _
  $region23: #{bigru_forward.1} parent=0 // pred_check_branch
    %2771 = sbr.rel (0) target = $region25
  $region24: #{bigru_forward.1} parent=0 // pred_region
    _
  $region25: #{bigru_forward.1} parent=0 // pred_fallthru
    _

</llo_original>
